<compile_context>
chip_gen: v7x
topology: tpu7x:2x2x1
jax: 0.10.0
libtpu: 0.0.40
codegen_flags: <defaults>
</compile_context>

<pallas_src>
import functools

import jax
import jax.numpy as jnp
from jax.experimental import pallas as pl
from jax.experimental.pallas import tpu as pltpu


_PADW = 16      # interior offset along W in the halo scratch (bf16 sublane tile)
_BN_EPS = 1e-5


# ---------------------------------------------------------------------------
# Fused residual-block kernel (one batch element per grid step).
# ---------------------------------------------------------------------------
def _res_block_kernel(x_ref, w1_ref, b1_ref, w2_ref, b2_ref, w3_ref, b3_ref,
                      alphas_ref, o_ref, xpad_ref, patch_ref, *, H, W, C):
    # x_ref      : (1, H, W, C)          f32   input block (one batch item)
    # w1/w2_ref  : (9*C, C)              bf16  3x3 weights as one deep-K matrix
    #                                          (BN folded, tap-major rows)
    # w3_ref     : (C, C)                bf16  1x1 conv
    # b*_ref     : (1, C)                f32   folded biases
    # alphas_ref : (2,)                  f32   (PReLU a1, PReLU a2) in SMEM
    # o_ref      : (1, H, W, C)          f32   output block
    # xpad_ref   : (H+2, W+2*_PADW, C)   bf16  zero-halo scratch (VMEM)
    # patch_ref  : (H*W, 9*C)            bf16  im2col scratch (VMEM)

    # ---- border-only zeroing of the halo (interior is fully overwritten).
    # Only rows 0 / H+1 and columns _PADW-1 / _PADW+W are ever read as halo.
    xpad_ref[0:1, :, :] = jnp.zeros((1, W + 2 * _PADW, C), jnp.bfloat16)
    xpad_ref[H + 1:H + 2, :, :] = jnp.zeros((1, W + 2 * _PADW, C), jnp.bfloat16)
    xpad_ref[1:H + 1, _PADW - 1:_PADW, :] = jnp.zeros((H, 1, C), jnp.bfloat16)
    xpad_ref[1:H + 1, _PADW + W:_PADW + W + 1, :] = (
        jnp.zeros((H, 1, C), jnp.bfloat16))

    def conv3x3(w_ref, b_ref):
        # im2col: gather the 9 shifted taps once into the (H*W, 9*C) bf16
        # patch matrix, then ONE deep-K MXU matmul (K = 9*C) with f32 acc.
        for dy in range(3):
            for dx in range(3):
                t = dy * 3 + dx
                c0 = _PADW - 1 + dx
                tap = xpad_ref[dy:dy + H, c0:c0 + W, :].reshape(H * W, C)
                patch_ref[:, t * C:(t + 1) * C] = tap
        return jnp.dot(patch_ref[...], w_ref[...],
                       preferred_element_type=jnp.float32) + b_ref[...]

    # conv1 (+ folded BN1) + PReLU(a1)
    xpad_ref[1:H + 1, _PADW:_PADW + W, :] = x_ref[0].astype(jnp.bfloat16)
    h = conv3x3(w1_ref, b1_ref)
    a1 = alphas_ref[0]
    h = jnp.where(h >= 0.0, h, a1 * h)

    # re-pad the intermediate in VMEM (never leaves the chip), conv2 (+ BN2)
    xpad_ref[1:H + 1, _PADW:_PADW + W, :] = (
        h.astype(jnp.bfloat16).reshape(H, W, C))
    h = conv3x3(w2_ref, b2_ref)

    # conv3 (1x1) + PReLU(a2) + fused residual add (x re-read here to keep
    # vreg pressure low across the two convs).
    h = jnp.dot(h.astype(jnp.bfloat16), w3_ref[...],
                preferred_element_type=jnp.float32) + b3_ref[...]
    a2 = alphas_ref[1]
    h = jnp.where(h >= 0.0, h, a2 * h)

    o_ref[...] = (h + x_ref[0].reshape(H * W, C)).reshape(1, H, W, C)


# ---------------------------------------------------------------------------
# Host-side wrapper (NCHW in / NCHW out, like PyTorch).
# ---------------------------------------------------------------------------
def _fold_bn(w_hwio, b, bn):
    gamma, beta, rmean, rvar = bn
    s = gamma / jnp.sqrt(rvar + _BN_EPS)
    return w_hwio * s, b * s + (beta - rmean * s)


def ex_sr_residual_block_forward(x_nchw, params):
    """Forward pass matching the PyTorch Ex_SR_Residual_Block (eval mode)."""
    N, C, H, W = x_nchw.shape
    # bf16 halo scratch: interior store / tap reshapes need W % 16 == 0.
    if W % 16 != 0:
        raise ValueError(f"W must be a multiple of 16 for the bf16 halo "
                         f"scratch, got W={W}")
    x = jnp.transpose(x_nchw, (0, 2, 3, 1)).astype(jnp.float32)   # NCHW -> NHWC

    w1, b1 = _fold_bn(params["w1"], params["b1"], params["bn1"])
    w2, b2 = _fold_bn(params["w2"], params["b2"], params["bn2"])
    w3, b3 = params["w3"], params["b3"]

    # HWIO (3,3,C,C) -> (9*C, C): row index = (dy*3+dx)*C + cin, matching the
    # tap-major column ordering of the im2col patch matrix.
    w1k = w1.reshape(9 * C, C).astype(jnp.bfloat16)
    w2k = w2.reshape(9 * C, C).astype(jnp.bfloat16)
    w3k = w3.reshape(C, C).astype(jnp.bfloat16)
    alphas = jnp.stack([params["a1"], params["a2"]]).astype(jnp.float32)

    flops = int(N) * 2 * H * W * C * C * (9 + 9 + 1)
    bytes_accessed = (2 * N * H * W * C * 4            # x in + out (f32)
                      + (2 * 9 * C * C + C * C) * 2    # bf16 weights
                      + 3 * C * 4 + 2 * 4)             # biases + alphas
    cost = pl.CostEstimate(flops=flops, transcendentals=0,
                           bytes_accessed=bytes_accessed)

    kernel = functools.partial(_res_block_kernel, H=H, W=W, C=C)
    out = pl.pallas_call(
        kernel,
        out_shape=jax.ShapeDtypeStruct((N, H, W, C), jnp.float32),
        grid_spec=pltpu.PrefetchScalarGridSpec(
            num_scalar_prefetch=0,
            grid=(N,),
            in_specs=[
                pl.BlockSpec((1, H, W, C), lambda n: (n, 0, 0, 0)),
                pl.BlockSpec((9 * C, C), lambda n: (0, 0)),
                pl.BlockSpec((1, C), lambda n: (0, 0)),
                pl.BlockSpec((9 * C, C), lambda n: (0, 0)),
                pl.BlockSpec((1, C), lambda n: (0, 0)),
                pl.BlockSpec((C, C), lambda n: (0, 0)),
                pl.BlockSpec((1, C), lambda n: (0, 0)),
                pl.BlockSpec(memory_space=pltpu.MemorySpace.SMEM),
            ],
            out_specs=pl.BlockSpec((1, H, W, C), lambda n: (n, 0, 0, 0)),
            scratch_shapes=[
                pltpu.VMEM((H + 2, W + 2 * _PADW, C), jnp.bfloat16),   # halo
                pltpu.VMEM((H * W, 9 * C), jnp.bfloat16),              # im2col
            ],
        ),
        compiler_params=pltpu.CompilerParams(
            dimension_semantics=("parallel",),
            vmem_limit_bytes=32 << 20,
        ),
        cost_estimate=cost,
    )(x, w1k, b1.reshape(1, C), w2k, b2.reshape(1, C), w3k, b3.reshape(1, C),
      alphas)

    return jnp.transpose(out, (0, 3, 1, 2))                       # NHWC -> NCHW


# ---------------------------------------------------------------------------
# Pure-JAX (XLA) f32 reference with the exact PyTorch semantics.
# ---------------------------------------------------------------------------
def _conv_same_ref(x, w_hwio, b):
    y = jax.lax.conv_general_dilated(
        x, w_hwio, window_strides=(1, 1), padding="SAME",
        dimension_numbers=("NHWC", "HWIO", "NHWC"))
    return y + b


def ex_sr_residual_block_reference(x_nchw, params):
    x = jnp.transpose(x_nchw, (0, 2, 3, 1))

    def bn(z, p):
        gamma, beta, rmean, rvar = p
        return gamma * (z - rmean) / jnp.sqrt(rvar + _BN_EPS) + beta

    def prelu(z, a):
        return jnp.where(z >= 0.0, z, a * z)

    h = prelu(bn(_conv_same_ref(x, params["w1"], params["b1"]), params["bn1"]),
              params["a1"])
    h = bn(_conv_same_ref(h, params["w2"], params["b2"]), params["bn2"])
    h = prelu(_conv_same_ref(h, params["w3"], params["b3"]), params["a2"])
    return jnp.transpose(h + x, (0, 3, 1, 2))


# ---------------------------------------------------------------------------
# Deterministic parameter initialization (PyTorch-like distributions/shapes).
# ---------------------------------------------------------------------------
def _conv_params(key, K, Cin, Cout):
    k1, k2 = jax.random.split(key)
    bound = float((Cin * K * K) ** -0.5)
    w = jax.random.uniform(k1, (K, K, Cin, Cout), jnp.float32, -bound, bound)
    b = jax.random.uniform(k2, (Cout,), jnp.float32, -bound, bound)
    return w, b


def _bn_params(key, Cf):
    k1, k2, k3, k4 = jax.random.split(key, 4)
    gamma = 1.0 + 0.1 * jax.random.normal(k1, (Cf,), jnp.float32)
    beta = 0.1 * jax.random.normal(k2, (Cf,), jnp.float32)
    rmean = 0.1 * jax.random.normal(k3, (Cf,), jnp.float32)
    rvar = 1.0 + 0.1 * jax.random.uniform(k4, (Cf,), jnp.float32)
    return gamma, beta, rmean, rvar


def init_ex_sr_residual_block_params(key, C):
    k1, k2, k3, k4, k5 = jax.random.split(key, 5)
    w1, b1 = _conv_params(k1, 3, C, C)
    w2, b2 = _conv_params(k2, 3, C, C)
    w3, b3 = _conv_params(k3, 1, C, C)
    return {
        "w1": w1, "b1": b1, "bn1": _bn_params(k4, C),
        "a1": jnp.float32(0.25),              # nn.PReLU() default init
        "w2": w2, "b2": b2, "bn2": _bn_params(k5, C),
        "w3": w3, "b3": b3,
        "a2": jnp.float32(0.25),              # second nn.PReLU()
    }


# ---------------------------------------------------------------------------
if __name__ == "__main__":
    root = jax.random.PRNGKey(0)
    k_param, k_x = jax.random.split(root)

    C = 64                     # input_Ls == output_Ls (required by the skip add)
    params = init_ex_sr_residual_block_params(k_param, C)
    x = jax.random.normal(k_x, (2, C, 16, 16), jnp.float32)    # NCHW like PyTorch

    fwd = jax.jit(ex_sr_residual_block_forward)
    out = jax.block_until_ready(fwd(x, params))

    assert out.shape == x.shape, out.shape
    assert out.dtype == jnp.float32
    assert bool(jnp.all(jnp.isfinite(out)))

    ref = ex_sr_residual_block_reference(x, params)
    max_err = float(jnp.max(jnp.abs(out - ref)))
    # bf16 MXU operands with f32 accumulation: expect O(1e-3) error vs f32 ref.
    assert max_err < 5e-2, f"max |pallas - reference| = {max_err}"

    print("KERNEL_OK")
</pallas_src>

<mosaic_0001>
module attributes {stable_mosaic.version = 11 : i64} {
  func.func @_res_block_kernel(%arg0: i32, %arg1: memref<1x16x16x64xf32, #tpu.memory_space<vmem>>, %arg2: memref<576x64xbf16, #tpu.memory_space<vmem>>, %arg3: memref<1x64xf32, #tpu.memory_space<vmem>>, %arg4: memref<576x64xbf16, #tpu.memory_space<vmem>>, %arg5: memref<1x64xf32, #tpu.memory_space<vmem>>, %arg6: memref<64x64xbf16, #tpu.memory_space<vmem>>, %arg7: memref<1x64xf32, #tpu.memory_space<vmem>>, %arg8: memref<2xf32, #tpu.memory_space<smem>>, %arg9: memref<1x16x16x64xf32, #tpu.memory_space<vmem>>, %arg10: memref<18x48x64xbf16, #tpu.memory_space<vmem>>, %arg11: memref<256x576xbf16, #tpu.memory_space<vmem>>) attributes {dimension_semantics = [#tpu.dimension_semantics<parallel>], iteration_bounds = array<i64: 2>, scalar_prefetch = 0 : i64, scratch_operands = 2 : i64, tpu.core_type = #tpu.core_type<tc>, window_params = [{transform_indices = @transform_0, window_bounds = array<i64: 1, 16, 16, 64>}, {pipeline_mode = #tpu.pipeline_mode<synchronous>, transform_indices = @transform_1, window_bounds = array<i64: 576, 64>}, {pipeline_mode = #tpu.pipeline_mode<synchronous>, transform_indices = @transform_2, window_bounds = array<i64: 1, 64>}, {pipeline_mode = #tpu.pipeline_mode<synchronous>, transform_indices = @transform_3, window_bounds = array<i64: 576, 64>}, {pipeline_mode = #tpu.pipeline_mode<synchronous>, transform_indices = @transform_4, window_bounds = array<i64: 1, 64>}, {pipeline_mode = #tpu.pipeline_mode<synchronous>, transform_indices = @transform_5, window_bounds = array<i64: 64, 64>}, {pipeline_mode = #tpu.pipeline_mode<synchronous>, transform_indices = @transform_6, window_bounds = array<i64: 1, 64>}, {transform_indices = @transform_7, window_bounds = array<i64: 2>}, {transform_indices = @transform_8, window_bounds = array<i64: 1, 16, 16, 64>}]} {
    %cst = arith.constant 0.000000e+00 : bf16
    %0 = vector.broadcast %cst : bf16 to vector<1x48x64xbf16>
    %c0 = arith.constant 0 : index
    %c0_0 = arith.constant 0 : index
    %c0_1 = arith.constant 0 : index
    %1 = vector.load %arg10[%c0, %c0_0, %c0_1] : memref<18x48x64xbf16, #tpu.memory_space<vmem>>, vector<1x48x64xbf16>
    tpu.vector_store %arg10[%c0, %c0_0, %c0_1], %0 {strides = array<i32>} : memref<18x48x64xbf16, #tpu.memory_space<vmem>>, vector<1x48x64xbf16>,
    %cst_2 = arith.constant 0.000000e+00 : bf16
    %2 = vector.broadcast %cst_2 : bf16 to vector<1x48x64xbf16>
    %c17 = arith.constant 17 : index
    %c0_3 = arith.constant 0 : index
    %c0_4 = arith.constant 0 : index
    %3 = vector.load %arg10[%c17, %c0_3, %c0_4] : memref<18x48x64xbf16, #tpu.memory_space<vmem>>, vector<1x48x64xbf16>
    tpu.vector_store %arg10[%c17, %c0_3, %c0_4], %2 {strides = array<i32>} : memref<18x48x64xbf16, #tpu.memory_space<vmem>>, vector<1x48x64xbf16>,
    %cst_5 = arith.constant 0.000000e+00 : bf16
    %4 = vector.broadcast %cst_5 : bf16 to vector<16x1x64xbf16>
    %c1 = arith.constant 1 : index
    %c15 = arith.constant 15 : index
    %c0_6 = arith.constant 0 : index
    %5 = vector.load %arg10[%c1, %c15, %c0_6] : memref<18x48x64xbf16, #tpu.memory_space<vmem>>, vector<16x1x64xbf16>
    tpu.vector_store %arg10[%c1, %c15, %c0_6], %4 {strides = array<i32>} : memref<18x48x64xbf16, #tpu.memory_space<vmem>>, vector<16x1x64xbf16>,
    %cst_7 = arith.constant 0.000000e+00 : bf16
    %6 = vector.broadcast %cst_7 : bf16 to vector<16x1x64xbf16>
    %c1_8 = arith.constant 1 : index
    %c32 = arith.constant 32 : index
    %c0_9 = arith.constant 0 : index
    %7 = vector.load %arg10[%c1_8, %c32, %c0_9] : memref<18x48x64xbf16, #tpu.memory_space<vmem>>, vector<16x1x64xbf16>
    tpu.vector_store %arg10[%c1_8, %c32, %c0_9], %6 {strides = array<i32>} : memref<18x48x64xbf16, #tpu.memory_space<vmem>>, vector<16x1x64xbf16>,
    %c0_10 = arith.constant 0 : index
    %c0_11 = arith.constant 0 : index
    %c0_12 = arith.constant 0 : index
    %c0_13 = arith.constant 0 : index
    %8 = vector.load %arg1[%c0_10, %c0_11, %c0_12, %c0_13] : memref<1x16x16x64xf32, #tpu.memory_space<vmem>>, vector<1x16x16x64xf32>
    %9 = vector.shape_cast %8 : vector<1x16x16x64xf32> to vector<16x16x64xf32>
    %10 = arith.truncf %9 : vector<16x16x64xf32> to vector<16x16x64xbf16>
    %c1_14 = arith.constant 1 : index
    %c16 = arith.constant 16 : index
    %c0_15 = arith.constant 0 : index
    %11 = vector.load %arg10[%c1_14, %c16, %c0_15] : memref<18x48x64xbf16, #tpu.memory_space<vmem>>, vector<16x16x64xbf16>
    tpu.vector_store %arg10[%c1_14, %c16, %c0_15], %10 {strides = array<i32>} : memref<18x48x64xbf16, #tpu.memory_space<vmem>>, vector<16x16x64xbf16>,
    %c0_16 = arith.constant 0 : index
    %c15_17 = arith.constant 15 : index
    %c0_18 = arith.constant 0 : index
    %12 = vector.load %arg10[%c0_16, %c15_17, %c0_18] : memref<18x48x64xbf16, #tpu.memory_space<vmem>>, vector<16x16x64xbf16>
    %13 = vector.shape_cast %12 : vector<16x16x64xbf16> to vector<256x64xbf16>
    %c0_19 = arith.constant 0 : index
    %c0_20 = arith.constant 0 : index
    %14 = vector.load %arg11[%c0_19, %c0_20] : memref<256x576xbf16, #tpu.memory_space<vmem>>, vector<256x64xbf16>
    tpu.vector_store %arg11[%c0_19, %c0_20], %13 {strides = array<i32>} : memref<256x576xbf16, #tpu.memory_space<vmem>>, vector<256x64xbf16>,
    %c0_21 = arith.constant 0 : index
    %c16_22 = arith.constant 16 : index
    %c0_23 = arith.constant 0 : index
    %15 = vector.load %arg10[%c0_21, %c16_22, %c0_23] : memref<18x48x64xbf16, #tpu.memory_space<vmem>>, vector<16x16x64xbf16>
    %16 = vector.shape_cast %15 : vector<16x16x64xbf16> to vector<256x64xbf16>
    %c0_24 = arith.constant 0 : index
    %c64 = arith.constant 64 : index
    %17 = vector.load %arg11[%c0_24, %c64] : memref<256x576xbf16, #tpu.memory_space<vmem>>, vector<256x64xbf16>
    tpu.vector_store %arg11[%c0_24, %c64], %16 {strides = array<i32>} : memref<256x576xbf16, #tpu.memory_space<vmem>>, vector<256x64xbf16>,
    %c0_25 = arith.constant 0 : index
    %c17_26 = arith.constant 17 : index
    %c0_27 = arith.constant 0 : index
    %18 = vector.load %arg10[%c0_25, %c17_26, %c0_27] : memref<18x48x64xbf16, #tpu.memory_space<vmem>>, vector<16x16x64xbf16>
    %19 = vector.shape_cast %18 : vector<16x16x64xbf16> to vector<256x64xbf16>
    %c0_28 = arith.constant 0 : index
    %c128 = arith.constant 128 : index
    %20 = vector.load %arg11[%c0_28, %c128] : memref<256x576xbf16, #tpu.memory_space<vmem>>, vector<256x64xbf16>
    tpu.vector_store %arg11[%c0_28, %c128], %19 {strides = array<i32>} : memref<256x576xbf16, #tpu.memory_space<vmem>>, vector<256x64xbf16>,
    %c1_29 = arith.constant 1 : index
    %c15_30 = arith.constant 15 : index
    %c0_31 = arith.constant 0 : index
    %21 = vector.load %arg10[%c1_29, %c15_30, %c0_31] : memref<18x48x64xbf16, #tpu.memory_space<vmem>>, vector<16x16x64xbf16>
    %22 = vector.shape_cast %21 : vector<16x16x64xbf16> to vector<256x64xbf16>
    %c0_32 = arith.constant 0 : index
    %c192 = arith.constant 192 : index
    %23 = vector.load %arg11[%c0_32, %c192] : memref<256x576xbf16, #tpu.memory_space<vmem>>, vector<256x64xbf16>
    tpu.vector_store %arg11[%c0_32, %c192], %22 {strides = array<i32>} : memref<256x576xbf16, #tpu.memory_space<vmem>>, vector<256x64xbf16>,
    %c1_33 = arith.constant 1 : index
    %c16_34 = arith.constant 16 : index
    %c0_35 = arith.constant 0 : index
    %24 = vector.load %arg10[%c1_33, %c16_34, %c0_35] : memref<18x48x64xbf16, #tpu.memory_space<vmem>>, vector<16x16x64xbf16>
    %25 = vector.shape_cast %24 : vector<16x16x64xbf16> to vector<256x64xbf16>
    %c0_36 = arith.constant 0 : index
    %c256 = arith.constant 256 : index
    %26 = vector.load %arg11[%c0_36, %c256] : memref<256x576xbf16, #tpu.memory_space<vmem>>, vector<256x64xbf16>
    tpu.vector_store %arg11[%c0_36, %c256], %25 {strides = array<i32>} : memref<256x576xbf16, #tpu.memory_space<vmem>>, vector<256x64xbf16>,
    %c1_37 = arith.constant 1 : index
    %c17_38 = arith.constant 17 : index
    %c0_39 = arith.constant 0 : index
    %27 = vector.load %arg10[%c1_37, %c17_38, %c0_39] : memref<18x48x64xbf16, #tpu.memory_space<vmem>>, vector<16x16x64xbf16>
    %28 = vector.shape_cast %27 : vector<16x16x64xbf16> to vector<256x64xbf16>
    %c0_40 = arith.constant 0 : index
    %c320 = arith.constant 320 : index
    %29 = vector.load %arg11[%c0_40, %c320] : memref<256x576xbf16, #tpu.memory_space<vmem>>, vector<256x64xbf16>
    tpu.vector_store %arg11[%c0_40, %c320], %28 {strides = array<i32>} : memref<256x576xbf16, #tpu.memory_space<vmem>>, vector<256x64xbf16>,
    %c2 = arith.constant 2 : index
    %c15_41 = arith.constant 15 : index
    %c0_42 = arith.constant 0 : index
    %30 = vector.load %arg10[%c2, %c15_41, %c0_42] : memref<18x48x64xbf16, #tpu.memory_space<vmem>>, vector<16x16x64xbf16>
    %31 = vector.shape_cast %30 : vector<16x16x64xbf16> to vector<256x64xbf16>
    %c0_43 = arith.constant 0 : index
    %c384 = arith.constant 384 : index
    %32 = vector.load %arg11[%c0_43, %c384] : memref<256x576xbf16, #tpu.memory_space<vmem>>, vector<256x64xbf16>
    tpu.vector_store %arg11[%c0_43, %c384], %31 {strides = array<i32>} : memref<256x576xbf16, #tpu.memory_space<vmem>>, vector<256x64xbf16>,
    %c2_44 = arith.constant 2 : index
    %c16_45 = arith.constant 16 : index
    %c0_46 = arith.constant 0 : index
    %33 = vector.load %arg10[%c2_44, %c16_45, %c0_46] : memref<18x48x64xbf16, #tpu.memory_space<vmem>>, vector<16x16x64xbf16>
    %34 = vector.shape_cast %33 : vector<16x16x64xbf16> to vector<256x64xbf16>
    %c0_47 = arith.constant 0 : index
    %c448 = arith.constant 448 : index
    %35 = vector.load %arg11[%c0_47, %c448] : memref<256x576xbf16, #tpu.memory_space<vmem>>, vector<256x64xbf16>
    tpu.vector_store %arg11[%c0_47, %c448], %34 {strides = array<i32>} : memref<256x576xbf16, #tpu.memory_space<vmem>>, vector<256x64xbf16>,
    %c2_48 = arith.constant 2 : index
    %c17_49 = arith.constant 17 : index
    %c0_50 = arith.constant 0 : index
    %36 = vector.load %arg10[%c2_48, %c17_49, %c0_50] : memref<18x48x64xbf16, #tpu.memory_space<vmem>>, vector<16x16x64xbf16>
    %37 = vector.shape_cast %36 : vector<16x16x64xbf16> to vector<256x64xbf16>
    %c0_51 = arith.constant 0 : index
    %c512 = arith.constant 512 : index
    %38 = vector.load %arg11[%c0_51, %c512] : memref<256x576xbf16, #tpu.memory_space<vmem>>, vector<256x64xbf16>
    tpu.vector_store %arg11[%c0_51, %c512], %37 {strides = array<i32>} : memref<256x576xbf16, #tpu.memory_space<vmem>>, vector<256x64xbf16>,
    %c0_52 = arith.constant 0 : index
    %c0_53 = arith.constant 0 : index
    %39 = vector.load %arg11[%c0_52, %c0_53] : memref<256x576xbf16, #tpu.memory_space<vmem>>, vector<256x576xbf16>
    %c0_54 = arith.constant 0 : index
    %c0_55 = arith.constant 0 : index
    %40 = vector.load %arg2[%c0_54, %c0_55] : memref<576x64xbf16, #tpu.memory_space<vmem>>, vector<576x64xbf16>
    %cst_56 = arith.constant dense<0.000000e+00> : vector<256x64xf32>
    %41 = tpu.matmul %39, %40, %cst_56 {dimension_numbers = #tpu.dot_dimension_numbers<[1], [0], [0], [1], [0, 0, 1, 1], [], []>} : vector<256x576xbf16>, vector<576x64xbf16>, vector<256x64xf32> -> vector<256x64xf32>
    %c0_57 = arith.constant 0 : index
    %c0_58 = arith.constant 0 : index
    %42 = vector.load %arg3[%c0_57, %c0_58] : memref<1x64xf32, #tpu.memory_space<vmem>>, vector<1x64xf32>
    %43 = vector.broadcast %42 : vector<1x64xf32> to vector<256x64xf32>
    %44 = arith.addf %41, %43 : vector<256x64xf32>
    %c0_59 = arith.constant 0 : index
    %45 = memref.load %arg8[%c0_59] : memref<2xf32, #tpu.memory_space<smem>>
    %cst_60 = arith.constant 0.000000e+00 : f32
    %46 = vector.broadcast %cst_60 : f32 to vector<256x64xf32>
    %47 = arith.cmpf oge, %44, %46 : vector<256x64xf32>
    %48 = vector.broadcast %45 : f32 to vector<256x64xf32>
    %49 = arith.mulf %48, %44 : vector<256x64xf32>
    %50 = arith.select %47, %44, %49 : vector<256x64xi1>, vector<256x64xf32>
    %51 = arith.truncf %50 : vector<256x64xf32> to vector<256x64xbf16>
    %52 = vector.shape_cast %51 : vector<256x64xbf16> to vector<16x16x64xbf16>
    %c1_61 = arith.constant 1 : index
    %c16_62 = arith.constant 16 : index
    %c0_63 = arith.constant 0 : index
    %53 = vector.load %arg10[%c1_61, %c16_62, %c0_63] : memref<18x48x64xbf16, #tpu.memory_space<vmem>>, vector<16x16x64xbf16>
    tpu.vector_store %arg10[%c1_61, %c16_62, %c0_63], %52 {strides = array<i32>} : memref<18x48x64xbf16, #tpu.memory_space<vmem>>, vector<16x16x64xbf16>,
    %c0_64 = arith.constant 0 : index
    %c15_65 = arith.constant 15 : index
    %c0_66 = arith.constant 0 : index
    %54 = vector.load %arg10[%c0_64, %c15_65, %c0_66] : memref<18x48x64xbf16, #tpu.memory_space<vmem>>, vector<16x16x64xbf16>
    %55 = vector.shape_cast %54 : vector<16x16x64xbf16> to vector<256x64xbf16>
    %c0_67 = arith.constant 0 : index
    %c0_68 = arith.constant 0 : index
    %56 = vector.load %arg11[%c0_67, %c0_68] : memref<256x576xbf16, #tpu.memory_space<vmem>>, vector<256x64xbf16>
    tpu.vector_store %arg11[%c0_67, %c0_68], %55 {strides = array<i32>} : memref<256x576xbf16, #tpu.memory_space<vmem>>, vector<256x64xbf16>,
    %c0_69 = arith.constant 0 : index
    %c16_70 = arith.constant 16 : index
    %c0_71 = arith.constant 0 : index
    %57 = vector.load %arg10[%c0_69, %c16_70, %c0_71] : memref<18x48x64xbf16, #tpu.memory_space<vmem>>, vector<16x16x64xbf16>
    %58 = vector.shape_cast %57 : vector<16x16x64xbf16> to vector<256x64xbf16>
    %c0_72 = arith.constant 0 : index
    %c64_73 = arith.constant 64 : index
    %59 = vector.load %arg11[%c0_72, %c64_73] : memref<256x576xbf16, #tpu.memory_space<vmem>>, vector<256x64xbf16>
    tpu.vector_store %arg11[%c0_72, %c64_73], %58 {strides = array<i32>} : memref<256x576xbf16, #tpu.memory_space<vmem>>, vector<256x64xbf16>,
    %c0_74 = arith.constant 0 : index
    %c17_75 = arith.constant 17 : index
    %c0_76 = arith.constant 0 : index
    %60 = vector.load %arg10[%c0_74, %c17_75, %c0_76] : memref<18x48x64xbf16, #tpu.memory_space<vmem>>, vector<16x16x64xbf16>
    %61 = vector.shape_cast %60 : vector<16x16x64xbf16> to vector<256x64xbf16>
    %c0_77 = arith.constant 0 : index
    %c128_78 = arith.constant 128 : index
    %62 = vector.load %arg11[%c0_77, %c128_78] : memref<256x576xbf16, #tpu.memory_space<vmem>>, vector<256x64xbf16>
    tpu.vector_store %arg11[%c0_77, %c128_78], %61 {strides = array<i32>} : memref<256x576xbf16, #tpu.memory_space<vmem>>, vector<256x64xbf16>,
    %c1_79 = arith.constant 1 : index
    %c15_80 = arith.constant 15 : index
    %c0_81 = arith.constant 0 : index
    %63 = vector.load %arg10[%c1_79, %c15_80, %c0_81] : memref<18x48x64xbf16, #tpu.memory_space<vmem>>, vector<16x16x64xbf16>
    %64 = vector.shape_cast %63 : vector<16x16x64xbf16> to vector<256x64xbf16>
    %c0_82 = arith.constant 0 : index
    %c192_83 = arith.constant 192 : index
    %65 = vector.load %arg11[%c0_82, %c192_83] : memref<256x576xbf16, #tpu.memory_space<vmem>>, vector<256x64xbf16>
    tpu.vector_store %arg11[%c0_82, %c192_83], %64 {strides = array<i32>} : memref<256x576xbf16, #tpu.memory_space<vmem>>, vector<256x64xbf16>,
    %c1_84 = arith.constant 1 : index
    %c16_85 = arith.constant 16 : index
    %c0_86 = arith.constant 0 : index
    %66 = vector.load %arg10[%c1_84, %c16_85, %c0_86] : memref<18x48x64xbf16, #tpu.memory_space<vmem>>, vector<16x16x64xbf16>
    %67 = vector.shape_cast %66 : vector<16x16x64xbf16> to vector<256x64xbf16>
    %c0_87 = arith.constant 0 : index
    %c256_88 = arith.constant 256 : index
    %68 = vector.load %arg11[%c0_87, %c256_88] : memref<256x576xbf16, #tpu.memory_space<vmem>>, vector<256x64xbf16>
    tpu.vector_store %arg11[%c0_87, %c256_88], %67 {strides = array<i32>} : memref<256x576xbf16, #tpu.memory_space<vmem>>, vector<256x64xbf16>,
    %c1_89 = arith.constant 1 : index
    %c17_90 = arith.constant 17 : index
    %c0_91 = arith.constant 0 : index
    %69 = vector.load %arg10[%c1_89, %c17_90, %c0_91] : memref<18x48x64xbf16, #tpu.memory_space<vmem>>, vector<16x16x64xbf16>
    %70 = vector.shape_cast %69 : vector<16x16x64xbf16> to vector<256x64xbf16>
    %c0_92 = arith.constant 0 : index
    %c320_93 = arith.constant 320 : index
    %71 = vector.load %arg11[%c0_92, %c320_93] : memref<256x576xbf16, #tpu.memory_space<vmem>>, vector<256x64xbf16>
    tpu.vector_store %arg11[%c0_92, %c320_93], %70 {strides = array<i32>} : memref<256x576xbf16, #tpu.memory_space<vmem>>, vector<256x64xbf16>,
    %c2_94 = arith.constant 2 : index
    %c15_95 = arith.constant 15 : index
    %c0_96 = arith.constant 0 : index
    %72 = vector.load %arg10[%c2_94, %c15_95, %c0_96] : memref<18x48x64xbf16, #tpu.memory_space<vmem>>, vector<16x16x64xbf16>
    %73 = vector.shape_cast %72 : vector<16x16x64xbf16> to vector<256x64xbf16>
    %c0_97 = arith.constant 0 : index
    %c384_98 = arith.constant 384 : index
    %74 = vector.load %arg11[%c0_97, %c384_98] : memref<256x576xbf16, #tpu.memory_space<vmem>>, vector<256x64xbf16>
    tpu.vector_store %arg11[%c0_97, %c384_98], %73 {strides = array<i32>} : memref<256x576xbf16, #tpu.memory_space<vmem>>, vector<256x64xbf16>,
    %c2_99 = arith.constant 2 : index
    %c16_100 = arith.constant 16 : index
    %c0_101 = arith.constant 0 : index
    %75 = vector.load %arg10[%c2_99, %c16_100, %c0_101] : memref<18x48x64xbf16, #tpu.memory_space<vmem>>, vector<16x16x64xbf16>
    %76 = vector.shape_cast %75 : vector<16x16x64xbf16> to vector<256x64xbf16>
    %c0_102 = arith.constant 0 : index
    %c448_103 = arith.constant 448 : index
    %77 = vector.load %arg11[%c0_102, %c448_103] : memref<256x576xbf16, #tpu.memory_space<vmem>>, vector<256x64xbf16>
    tpu.vector_store %arg11[%c0_102, %c448_103], %76 {strides = array<i32>} : memref<256x576xbf16, #tpu.memory_space<vmem>>, vector<256x64xbf16>,
    %c2_104 = arith.constant 2 : index
    %c17_105 = arith.constant 17 : index
    %c0_106 = arith.constant 0 : index
    %78 = vector.load %arg10[%c2_104, %c17_105, %c0_106] : memref<18x48x64xbf16, #tpu.memory_space<vmem>>, vector<16x16x64xbf16>
    %79 = vector.shape_cast %78 : vector<16x16x64xbf16> to vector<256x64xbf16>
    %c0_107 = arith.constant 0 : index
    %c512_108 = arith.constant 512 : index
    %80 = vector.load %arg11[%c0_107, %c512_108] : memref<256x576xbf16, #tpu.memory_space<vmem>>, vector<256x64xbf16>
    tpu.vector_store %arg11[%c0_107, %c512_108], %79 {strides = array<i32>} : memref<256x576xbf16, #tpu.memory_space<vmem>>, vector<256x64xbf16>,
    %c0_109 = arith.constant 0 : index
    %c0_110 = arith.constant 0 : index
    %81 = vector.load %arg11[%c0_109, %c0_110] : memref<256x576xbf16, #tpu.memory_space<vmem>>, vector<256x576xbf16>
    %c0_111 = arith.constant 0 : index
    %c0_112 = arith.constant 0 : index
    %82 = vector.load %arg4[%c0_111, %c0_112] : memref<576x64xbf16, #tpu.memory_space<vmem>>, vector<576x64xbf16>
    %cst_113 = arith.constant dense<0.000000e+00> : vector<256x64xf32>
    %83 = tpu.matmul %81, %82, %cst_113 {dimension_numbers = #tpu.dot_dimension_numbers<[1], [0], [0], [1], [0, 0, 1, 1], [], []>} : vector<256x576xbf16>, vector<576x64xbf16>, vector<256x64xf32> -> vector<256x64xf32>
    %c0_114 = arith.constant 0 : index
    %c0_115 = arith.constant 0 : index
    %84 = vector.load %arg5[%c0_114, %c0_115] : memref<1x64xf32, #tpu.memory_space<vmem>>, vector<1x64xf32>
    %85 = vector.broadcast %84 : vector<1x64xf32> to vector<256x64xf32>
    %86 = arith.addf %83, %85 : vector<256x64xf32>
    %87 = arith.truncf %86 : vector<256x64xf32> to vector<256x64xbf16>
    %c0_116 = arith.constant 0 : index
    %c0_117 = arith.constant 0 : index
    %88 = vector.load %arg6[%c0_116, %c0_117] : memref<64x64xbf16, #tpu.memory_space<vmem>>, vector<64x64xbf16>
    %cst_118 = arith.constant dense<0.000000e+00> : vector<256x64xf32>
    %89 = tpu.matmul %87, %88, %cst_118 {dimension_numbers = #tpu.dot_dimension_numbers<[1], [0], [0], [1], [0, 0, 1, 1], [], []>} : vector<256x64xbf16>, vector<64x64xbf16>, vector<256x64xf32> -> vector<256x64xf32>
    %c0_119 = arith.constant 0 : index
    %c0_120 = arith.constant 0 : index
    %90 = vector.load %arg7[%c0_119, %c0_120] : memref<1x64xf32, #tpu.memory_space<vmem>>, vector<1x64xf32>
    %91 = vector.broadcast %90 : vector<1x64xf32> to vector<256x64xf32>
    %92 = arith.addf %89, %91 : vector<256x64xf32>
    %c1_121 = arith.constant 1 : index
    %93 = memref.load %arg8[%c1_121] : memref<2xf32, #tpu.memory_space<smem>>
    %cst_122 = arith.constant 0.000000e+00 : f32
    %94 = vector.broadcast %cst_122 : f32 to vector<256x64xf32>
    %95 = arith.cmpf oge, %92, %94 : vector<256x64xf32>
    %96 = vector.broadcast %93 : f32 to vector<256x64xf32>
    %97 = arith.mulf %96, %92 : vector<256x64xf32>
    %98 = arith.select %95, %92, %97 : vector<256x64xi1>, vector<256x64xf32>
    %c0_123 = arith.constant 0 : index
    %c0_124 = arith.constant 0 : index
    %c0_125 = arith.constant 0 : index
    %c0_126 = arith.constant 0 : index
    %99 = vector.load %arg1[%c0_123, %c0_124, %c0_125, %c0_126] : memref<1x16x16x64xf32, #tpu.memory_space<vmem>>, vector<1x16x16x64xf32>
    %100 = vector.shape_cast %99 : vector<1x16x16x64xf32> to vector<16x16x64xf32>
    %101 = vector.shape_cast %100 : vector<16x16x64xf32> to vector<256x64xf32>
    %102 = arith.addf %98, %101 : vector<256x64xf32>
    %103 = vector.shape_cast %102 : vector<256x64xf32> to vector<1x16x16x64xf32>
    %c0_127 = arith.constant 0 : index
    %c0_128 = arith.constant 0 : index
    %c0_129 = arith.constant 0 : index
    %c0_130 = arith.constant 0 : index
    %104 = vector.load %arg9[%c0_127, %c0_128, %c0_129, %c0_130] : memref<1x16x16x64xf32, #tpu.memory_space<vmem>>, vector<1x16x16x64xf32>
    tpu.vector_store %arg9[%c0_127, %c0_128, %c0_129, %c0_130], %103 {strides = array<i32>} : memref<1x16x16x64xf32, #tpu.memory_space<vmem>>, vector<1x16x16x64xf32>,
    return
  }
  func.func @transform_0(%arg0: i32) -> (i32, i32, i32, i32) {
    %c0_i32 = arith.constant 0 : i32
    %c0_i32_0 = arith.constant 0 : i32
    %c0_i32_1 = arith.constant 0 : i32
    %c0_i32_2 = arith.constant 0 : i32
    return %arg0, %c0_i32, %c0_i32_0, %c0_i32_1 : i32, i32, i32, i32
  }
  func.func @transform_1(%arg0: i32) -> (i32, i32) {
    %c0_i32 = arith.constant 0 : i32
    %c0_i32_0 = arith.constant 0 : i32
    %c0_i32_1 = arith.constant 0 : i32
    return %c0_i32, %c0_i32_0 : i32, i32
  }
  func.func @transform_2(%arg0: i32) -> (i32, i32) {
    %c0_i32 = arith.constant 0 : i32
    %c0_i32_0 = arith.constant 0 : i32
    %c0_i32_1 = arith.constant 0 : i32
    return %c0_i32, %c0_i32_0 : i32, i32
  }
  func.func @transform_3(%arg0: i32) -> (i32, i32) {
    %c0_i32 = arith.constant 0 : i32
    %c0_i32_0 = arith.constant 0 : i32
    %c0_i32_1 = arith.constant 0 : i32
    return %c0_i32, %c0_i32_0 : i32, i32
  }
  func.func @transform_4(%arg0: i32) -> (i32, i32) {
    %c0_i32 = arith.constant 0 : i32
    %c0_i32_0 = arith.constant 0 : i32
    %c0_i32_1 = arith.constant 0 : i32
    return %c0_i32, %c0_i32_0 : i32, i32
  }
  func.func @transform_5(%arg0: i32) -> (i32, i32) {
    %c0_i32 = arith.constant 0 : i32
    %c0_i32_0 = arith.constant 0 : i32
    %c0_i32_1 = arith.constant 0 : i32
    return %c0_i32, %c0_i32_0 : i32, i32
  }
  func.func @transform_6(%arg0: i32) -> (i32, i32) {
    %c0_i32 = arith.constant 0 : i32
    %c0_i32_0 = arith.constant 0 : i32
    %c0_i32_1 = arith.constant 0 : i32
    return %c0_i32, %c0_i32_0 : i32, i32
  }
  func.func @transform_7(%arg0: i32) -> i32 {
    %c0_i32 = arith.constant 0 : i32
    %c0_i32_0 = arith.constant 0 : i32
    return %c0_i32 : i32
  }
  func.func @transform_8(%arg0: i32) -> (i32, i32, i32, i32) {
    %c0_i32 = arith.constant 0 : i32
    %c0_i32_0 = arith.constant 0 : i32
    %c0_i32_1 = arith.constant 0 : i32
    %c0_i32_2 = arith.constant 0 : i32
    return %arg0, %c0_i32, %c0_i32_0, %c0_i32_1 : i32, i32, i32, i32
  }
}

</mosaic_0001>

<llo_original>
// kernel: ex_sr_residual_block_forward.1
$region0: #{ex_sr_residual_block_forward.1}
  #allocation0 [shape = 'u32[]', space=smem, size = 0x4, offset = 0x4, fixed_abs, tag = 'smem constant byte address 0x4 - core index']
  #allocation1 [shape = 'u32[144,128]{1,0:T(1,128)}', space=vmem, size = 0x12000, scoped, tag = 'internal scratch']
  #allocation2 [shape = 'bf16[18,48,64]{2,1,0:T(16,128)(2,1)}', space=vmem, size = 0x36000, scoped, tag = 'scratch operand']
  #allocation3 [shape = 'bf16[256,576]{1,0:T(16,128)(2,1)}', space=vmem, size = 0x50000, scoped, tag = 'scratch operand']
  %s0 = inlined_call_operand.vmem [shape: f32[2,16,16,64], index: 0, kind: input, shape index: {}]
  %s1 = inlined_call_operand.vmem [shape: bf16[576,64], index: 1, kind: input, shape index: {}]
  %s2 = inlined_call_operand.vmem [shape: f32[1,64], index: 2, kind: input, shape index: {}]
  %s3 = inlined_call_operand.vmem [shape: bf16[576,64], index: 3, kind: input, shape index: {}]
  %s4 = inlined_call_operand.vmem [shape: f32[1,64], index: 4, kind: input, shape index: {}]
  %s5 = inlined_call_operand.vmem [shape: bf16[64,64], index: 5, kind: input, shape index: {}]
  %s6 = inlined_call_operand.vmem [shape: f32[1,64], index: 6, kind: input, shape index: {}]
  %s7 = inlined_call_operand.vmem [shape: f32[2], index: 7, kind: input, shape index: {}]
  %s8 = inlined_call_operand.hbm [shape: f32[2,16,16,64], index: 8, kind: output, shape index: {}]
  %s9 = sld [smem:[#allocation0]]
  $region69: #{ex_sr_residual_block_forward.1} parent=0
    _
  %s11 = ssub.s32 1, %s9
  %s12 = scalar_select 0, %s11, %s9
  $region1: #{ex_sr_residual_block_forward.1} parent=0
    #allocation4 [shape = 'u8[512]{0}', space=smem, size = 0x200, scoped, tag = 'input window, operand 7, single buffered']
    #allocation5 [shape = 's32[2]{0}', space=sflag, size = 0x8, scoped, tag = 'scoped memory for ex_sr_residual_block_forward.1']
    #allocation6 [shape = 's32[2]{0}', space=sflag, size = 0x8, scoped, tag = 'scoped memory for ex_sr_residual_block_forward.1']
    #allocation7 [shape = 'u8[262144]{0}', space=vmem, size = 0x40000, scoped, tag = 'output window, operand 0']
    %13 = vsyncpa [#allocation6], 0
    %14 = vsyncpa [#allocation5], 0
    %s15 = scalar_lea.sflag [#allocation5], 1
    %16 = vsyncpa %s15, 0
    loop: start=0, step=1, limit=4
    $region2: #{ex_sr_residual_block_forward.1} parent=1 // loop_pre_header
      _
    $region3: #{ex_sr_residual_block_forward.1} parent=1 // loop_header
      %s18 = sphi 0, %s22
      %p19 = scmp.ge.s32.totalorder %s18, 4
      %s28 = sphi 0, %s30
      %s31 = sphi 0, %s28
      %s32 = sphi 0, %s31
      %s48 = sphi 0, %s32
      %s52 = sphi 0, %s52
      %s54 = sphi 0, %s52
      %s55 = sphi 0, %s54
      %s69 = sphi 0, %s55
      %s73 = sphi 0, %s73
      %s75 = sphi 0, %s73
      %s76 = sphi 0, %s75
      %s90 = sphi 0, %s76
      %s94 = sphi 0, %s94
      %s96 = sphi 0, %s94
      %s97 = sphi 0, %s96
      %s111 = sphi 0, %s97
      %s115 = sphi 0, %s115
      %s117 = sphi 0, %s115
      %s118 = sphi 0, %s117
      %s132 = sphi 0, %s118
      %s136 = sphi 0, %s136
      %s138 = sphi 0, %s136
      %s139 = sphi 0, %s138
      %s153 = sphi 0, %s139
      %s157 = sphi 0, %s157
      %s159 = sphi 0, %s157
      %s160 = sphi 0, %s159
      %s174 = sphi 0, %s160
      %s178 = sphi 0, %s178
      %s180 = sphi 0, %s178
      %s181 = sphi 0, %s180
      %s195 = sphi 0, %s181
      %s201 = sphi 0, %s203
      %s204 = sphi 0, %s201
      %s205 = sphi 0, %s204
      %s221 = sphi 0, %s205
    $region4: #{ex_sr_residual_block_forward.1} parent=1 // loop_header_branch
      %21 = sbr.rel (%p19) target = $region8
    $region5: #{ex_sr_residual_block_forward.1} parent=1 // loop_body
      %s23 = ssub.s32 %s18, 1
      %s24 = ssub.s32 %s18, 2
      %s25 = sadd.s32 %s18, 1
      %s26 = ssub.s32 %s18, %s25
      %p27 = scmp.eq.s32.totalorder %s26, 0
      %s29 = sadd.s32 %s28, 1
      %s30 = scalar_select %p27, %s28, %s29
      %p33 = pneg %p27
      %p34 = scmp.eq.s32.totalorder %s18, 1
      %p35 = por %p33, %p34
      %p36 = scmp.ne.s32.totalorder %s28, %s31
      %p37 = scmp.eq.s32.totalorder %s18, 0
      %p38 = por %p36, %p37
      %p39 = scmp.ne.s32.totalorder %s28, %s31
      %p40 = scmp.eq.s32.totalorder %s23, 1
      %p41 = por %p39, %p40
      %p42 = scmp.ne.s32.totalorder %s31, %s32
      %p43 = scmp.eq.s32.totalorder %s23, 0
      %p44 = por %p42, %p43
      %p45 = scmp.ne.s32.totalorder %s31, %s32
      %p46 = scmp.eq.s32.totalorder %s24, 1
      %p47 = por %p45, %p46
      %p49 = scmp.ne.s32.totalorder %s32, %s48
      %p50 = scmp.eq.s32.totalorder %s24, 0
      %p51 = por %p49, %p50
      %s53 = sadd.s32 %s52, 1
      %p56 = scmp.eq.s32.totalorder %s18, 1
      %p57 = scmp.ne.s32.totalorder %s52, %s54
      %p58 = scmp.eq.s32.totalorder %s18, 0
      %p59 = por %p57, %p58
      %p60 = scmp.ne.s32.totalorder %s52, %s54
      %p61 = scmp.eq.s32.totalorder %s23, 1
      %p62 = por %p60, %p61
      %p63 = scmp.ne.s32.totalorder %s54, %s55
      %p64 = scmp.eq.s32.totalorder %s23, 0
      %p65 = por %p63, %p64
      %p66 = scmp.ne.s32.totalorder %s54, %s55
      %p67 = scmp.eq.s32.totalorder %s24, 1
      %p68 = por %p66, %p67
      %p70 = scmp.ne.s32.totalorder %s55, %s69
      %p71 = scmp.eq.s32.totalorder %s24, 0
      %p72 = por %p70, %p71
      %s74 = sadd.s32 %s73, 1
      %p77 = scmp.eq.s32.totalorder %s18, 1
      %p78 = scmp.ne.s32.totalorder %s73, %s75
      %p79 = scmp.eq.s32.totalorder %s18, 0
      %p80 = por %p78, %p79
      %p81 = scmp.ne.s32.totalorder %s73, %s75
      %p82 = scmp.eq.s32.totalorder %s23, 1
      %p83 = por %p81, %p82
      %p84 = scmp.ne.s32.totalorder %s75, %s76
      %p85 = scmp.eq.s32.totalorder %s23, 0
      %p86 = por %p84, %p85
      %p87 = scmp.ne.s32.totalorder %s75, %s76
      %p88 = scmp.eq.s32.totalorder %s24, 1
      %p89 = por %p87, %p88
      %p91 = scmp.ne.s32.totalorder %s76, %s90
      %p92 = scmp.eq.s32.totalorder %s24, 0
      %p93 = por %p91, %p92
      %s95 = sadd.s32 %s94, 1
      %p98 = scmp.eq.s32.totalorder %s18, 1
      %p99 = scmp.ne.s32.totalorder %s94, %s96
      %p100 = scmp.eq.s32.totalorder %s18, 0
      %p101 = por %p99, %p100
      %p102 = scmp.ne.s32.totalorder %s94, %s96
      %p103 = scmp.eq.s32.totalorder %s23, 1
      %p104 = por %p102, %p103
      %p105 = scmp.ne.s32.totalorder %s96, %s97
      %p106 = scmp.eq.s32.totalorder %s23, 0
      %p107 = por %p105, %p106
      %p108 = scmp.ne.s32.totalorder %s96, %s97
      %p109 = scmp.eq.s32.totalorder %s24, 1
      %p110 = por %p108, %p109
      %p112 = scmp.ne.s32.totalorder %s97, %s111
      %p113 = scmp.eq.s32.totalorder %s24, 0
      %p114 = por %p112, %p113
      %s116 = sadd.s32 %s115, 1
      %p119 = scmp.eq.s32.totalorder %s18, 1
      %p120 = scmp.ne.s32.totalorder %s115, %s117
      %p121 = scmp.eq.s32.totalorder %s18, 0
      %p122 = por %p120, %p121
      %p123 = scmp.ne.s32.totalorder %s115, %s117
      %p124 = scmp.eq.s32.totalorder %s23, 1
      %p125 = por %p123, %p124
      %p126 = scmp.ne.s32.totalorder %s117, %s118
      %p127 = scmp.eq.s32.totalorder %s23, 0
      %p128 = por %p126, %p127
      %p129 = scmp.ne.s32.totalorder %s117, %s118
      %p130 = scmp.eq.s32.totalorder %s24, 1
      %p131 = por %p129, %p130
      %p133 = scmp.ne.s32.totalorder %s118, %s132
      %p134 = scmp.eq.s32.totalorder %s24, 0
      %p135 = por %p133, %p134
      %s137 = sadd.s32 %s136, 1
      %p140 = scmp.eq.s32.totalorder %s18, 1
      %p141 = scmp.ne.s32.totalorder %s136, %s138
      %p142 = scmp.eq.s32.totalorder %s18, 0
      %p143 = por %p141, %p142
      %p144 = scmp.ne.s32.totalorder %s136, %s138
      %p145 = scmp.eq.s32.totalorder %s23, 1
      %p146 = por %p144, %p145
      %p147 = scmp.ne.s32.totalorder %s138, %s139
      %p148 = scmp.eq.s32.totalorder %s23, 0
      %p149 = por %p147, %p148
      %p150 = scmp.ne.s32.totalorder %s138, %s139
      %p151 = scmp.eq.s32.totalorder %s24, 1
      %p152 = por %p150, %p151
      %p154 = scmp.ne.s32.totalorder %s139, %s153
      %p155 = scmp.eq.s32.totalorder %s24, 0
      %p156 = por %p154, %p155
      %s158 = sadd.s32 %s157, 1
      %p161 = scmp.eq.s32.totalorder %s18, 1
      %p162 = scmp.ne.s32.totalorder %s157, %s159
      %p163 = scmp.eq.s32.totalorder %s18, 0
      %p164 = por %p162, %p163
      %p165 = scmp.ne.s32.totalorder %s157, %s159
      %p166 = scmp.eq.s32.totalorder %s23, 1
      %p167 = por %p165, %p166
      %p168 = scmp.ne.s32.totalorder %s159, %s160
      %p169 = scmp.eq.s32.totalorder %s23, 0
      %p170 = por %p168, %p169
      %p171 = scmp.ne.s32.totalorder %s159, %s160
      %p172 = scmp.eq.s32.totalorder %s24, 1
      %p173 = por %p171, %p172
      %p175 = scmp.ne.s32.totalorder %s160, %s174
      %p176 = scmp.eq.s32.totalorder %s24, 0
      %p177 = por %p175, %p176
      %s179 = sadd.s32 %s178, 1
      %p182 = scmp.eq.s32.totalorder %s18, 1
      %p183 = scmp.ne.s32.totalorder %s178, %s180
      %p184 = scmp.eq.s32.totalorder %s18, 0
      %p185 = por %p183, %p184
      %p186 = scmp.ne.s32.totalorder %s178, %s180
      %p187 = scmp.eq.s32.totalorder %s23, 1
      %p188 = por %p186, %p187
      %p189 = scmp.ne.s32.totalorder %s180, %s181
      %p190 = scmp.eq.s32.totalorder %s23, 0
      %p191 = por %p189, %p190
      %p192 = scmp.ne.s32.totalorder %s180, %s181
      %p193 = scmp.eq.s32.totalorder %s24, 1
      %p194 = por %p192, %p193
      %p196 = scmp.ne.s32.totalorder %s181, %s195
      %p197 = scmp.eq.s32.totalorder %s24, 0
      %p198 = por %p196, %p197
      %s199 = ssub.s32 %s18, %s25
      %p200 = scmp.eq.s32.totalorder %s199, 0
      %s202 = sadd.s32 %s201, 1
      %s203 = scalar_select %p200, %s201, %s202
      %p206 = pneg %p200
      %p207 = scmp.eq.s32.totalorder %s18, 1
      %p208 = por %p206, %p207
      %p209 = scmp.ne.s32.totalorder %s201, %s204
      %p210 = scmp.eq.s32.totalorder %s18, 0
      %p211 = por %p209, %p210
      %p212 = scmp.ne.s32.totalorder %s201, %s204
      %p213 = scmp.eq.s32.totalorder %s23, 1
      %p214 = por %p212, %p213
      %p215 = scmp.ne.s32.totalorder %s204, %s205
      %p216 = scmp.eq.s32.totalorder %s23, 0
      %p217 = por %p215, %p216
      %p218 = scmp.ne.s32.totalorder %s204, %s205
      %p219 = scmp.eq.s32.totalorder %s24, 1
      %p220 = por %p218, %p219
      %p222 = scmp.ne.s32.totalorder %s205, %s221
      %p223 = scmp.eq.s32.totalorder %s24, 0
      %p224 = por %p222, %p223
      %p225 = scmp.le.s32.totalorder 1, %s18
      %p226 = scmp.lt.s32.totalorder %s18, 3
      %p227 = pnand %p225, %p226
      %p228 = pneg %p227
      // Predicated region
      $region9: #{ex_sr_residual_block_forward.1} parent=5 // pred_check
        _
      $region10: #{ex_sr_residual_block_forward.1} parent=5 // pred_check_branch
        %230 = sbr.rel (%p227) target = $region12
      $region11: #{ex_sr_residual_block_forward.1} parent=5 // pred_region
        %s231 = ssub.s32 %s18, 1
        // Predicated region
        $region13: #{ex_sr_residual_block_forward.1} parent=11 // pred_check
          %p232 = pneg %p65
        $region14: #{ex_sr_residual_block_forward.1} parent=11 // pred_check_branch
          %234 = sbr.rel (%p232) target = $region16
        $region15: #{ex_sr_residual_block_forward.1} parent=11 // pred_region
          _
        $region16: #{ex_sr_residual_block_forward.1} parent=11 // pred_fallthru
          _
        // Predicated region
        $region17: #{ex_sr_residual_block_forward.1} parent=11 // pred_check
          %p235 = pneg %p86
        $region18: #{ex_sr_residual_block_forward.1} parent=11 // pred_check_branch
          %237 = sbr.rel (%p235) target = $region20
        $region19: #{ex_sr_residual_block_forward.1} parent=11 // pred_region
          _
        $region20: #{ex_sr_residual_block_forward.1} parent=11 // pred_fallthru
          _
        // Predicated region
        $region21: #{ex_sr_residual_block_forward.1} parent=11 // pred_check
          %p238 = pneg %p107
        $region22: #{ex_sr_residual_block_forward.1} parent=11 // pred_check_branch
          %240 = sbr.rel (%p238) target = $region24
        $region23: #{ex_sr_residual_block_forward.1} parent=11 // pred_region
          _
        $region24: #{ex_sr_residual_block_forward.1} parent=11 // pred_fallthru
          _
        // Predicated region
        $region25: #{ex_sr_residual_block_forward.1} parent=11 // pred_check
          %p241 = pneg %p128
        $region26: #{ex_sr_residual_block_forward.1} parent=11 // pred_check_branch
          %243 = sbr.rel (%p241) target = $region28
        $region27: #{ex_sr_residual_block_forward.1} parent=11 // pred_region
          _
        $region28: #{ex_sr_residual_block_forward.1} parent=11 // pred_fallthru
          _
        // Predicated region
        $region29: #{ex_sr_residual_block_forward.1} parent=11 // pred_check
          %p244 = pneg %p149
        $region30: #{ex_sr_residual_block_forward.1} parent=11 // pred_check_branch
          %246 = sbr.rel (%p244) target = $region32
        $region31: #{ex_sr_residual_block_forward.1} parent=11 // pred_region
          _
        $region32: #{ex_sr_residual_block_forward.1} parent=11 // pred_fallthru
          _
        // Predicated region
        $region33: #{ex_sr_residual_block_forward.1} parent=11 // pred_check
          %p247 = pneg %p170
        $region34: #{ex_sr_residual_block_forward.1} parent=11 // pred_check_branch
          %249 = sbr.rel (%p247) target = $region36
        $region35: #{ex_sr_residual_block_forward.1} parent=11 // pred_region
          _
        $region36: #{ex_sr_residual_block_forward.1} parent=11 // pred_fallthru
          _
        // Predicated region
        $region37: #{ex_sr_residual_block_forward.1} parent=11 // pred_check
          %p250 = pneg %p191
        $region38: #{ex_sr_residual_block_forward.1} parent=11 // pred_check_branch
          %252 = sbr.rel (%p250) target = $region40
        $region39: #{ex_sr_residual_block_forward.1} parent=11 // pred_region
          %s254 = ssub.s32 16, 16
          %255 = vsyncadd [#allocation6], %s254
          %s257 = sshll.u32 %s7, 4
          %s258 = int_to_ptr.vmem [resolvable:$true] %s257
          %260 = dma.vmem_to_smem %s258, 16, [#allocation4], [#allocation6]
        $region40: #{ex_sr_residual_block_forward.1} parent=11 // pred_fallthru
          _
      $region12: #{ex_sr_residual_block_forward.1} parent=5 // pred_fallthru
        _
      %p261 = scmp.lt.s32.totalorder %s18, 2
      // Predicated region
      $region41: #{ex_sr_residual_block_forward.1} parent=5 // pred_check
        %p262 = pneg %p261
      $region42: #{ex_sr_residual_block_forward.1} parent=5 // pred_check_branch
        %264 = sbr.rel (%p262) target = $region44
      $region43: #{ex_sr_residual_block_forward.1} parent=5 // pred_region
        // Predicated region
        $region45: #{ex_sr_residual_block_forward.1} parent=43 // pred_check
          %p265 = pneg %p38
        $region46: #{ex_sr_residual_block_forward.1} parent=43 // pred_check_branch
          %267 = sbr.rel (%p265) target = $region48
        $region47: #{ex_sr_residual_block_forward.1} parent=43 // pred_region
          %p268 = scmp.lt.s32.totalorder %s18, 1
          %s269 = scalar_select %p268, %s18, 1
          %s270 = smul.addr %s269, 32
          %s271 = smul.addr %s270, 8
          %s272 = scalar_lea.vmem %s0, %s271
        $region48: #{ex_sr_residual_block_forward.1} parent=43 // pred_fallthru
          _
      $region44: #{ex_sr_residual_block_forward.1} parent=5 // pred_fallthru
        _
      %p273 = scmp.le.s32.totalorder 1, %s18
      %p274 = scmp.lt.s32.totalorder %s18, 3
      %p275 = pnand %p273, %p274
      %p276 = pneg %p275
      // Predicated region
      $region49: #{ex_sr_residual_block_forward.1} parent=5 // pred_check
        _
      $region50: #{ex_sr_residual_block_forward.1} parent=5 // pred_check_branch
        %278 = sbr.rel (%p275) target = $region52
      $region51: #{ex_sr_residual_block_forward.1} parent=5 // pred_region
        %s279 = ssub.s32 %s18, 1
        // Predicated region
        $region53: #{ex_sr_residual_block_forward.1} parent=51 // pred_check
          %p280 = pneg %p191
        $region54: #{ex_sr_residual_block_forward.1} parent=51 // pred_check_branch
          %282 = sbr.rel (%p280) target = $region56
        $region55: #{ex_sr_residual_block_forward.1} parent=51 // pred_region
          %283 = dma.done [#allocation6], 16
        $region56: #{ex_sr_residual_block_forward.1} parent=51 // pred_fallthru
          _
        %284 = sfence
        %p285 = scmp.lt.s32.totalorder %s23, 1
        %s286 = scalar_select %p285, %s23, 1
        %s287 = smul.addr %s286, 32
        %s288 = smul.addr %s287, 8
        %s289 = scalar_lea.vmem %s0, %s288
        %p290 = pneg %p44
        %p291 = pneg %p41
        %p292 = pneg %p65
        %p293 = pneg %p62
        %p294 = pneg %p86
        %p295 = pneg %p83
        %p296 = pneg %p107
        %p297 = pneg %p104
        %p298 = pneg %p128
        %p299 = pneg %p125
        %p300 = pneg %p149
        %p301 = pneg %p146
        %p302 = pneg %p170
        %p303 = pneg %p167
        %p304 = pneg %p191
        %p305 = pneg %p188
        %p306 = pneg %p217
        %p307 = pneg %p214
        %s308 = sand.u32 %s204, 1
        %s309 = scalar_lea.sflag [#allocation5], %s308
        %s310 = sand.u32 %s204, 1
        %s311 = smul.addr %s310, 256
        %s312 = scalar_lea.vmem [#allocation7], %s311
        %p313 = scmp.lt.s32.totalorder %s23, 1
        %s314 = scalar_select %p313, %s23, 1
        %s315 = smul.addr %s314, 32
        %s316 = smul.addr %s315, 8
        %s317 = scalar_lea.vmem %s0, %s316
        %vm319 = vcmask 523264
        %320 = vst.msk [vmem:[#allocation2] sm:$0xff] %vm319, 0
        %321 = vst.msk [vmem:[#allocation2 + $0x8] sm:$0xff] %vm319, 0
        %322 = vst.msk [vmem:[#allocation2 + $0x10] sm:$0xff] %vm319, 0
        %s323 = scalar_lea.vmem [#allocation2], 408
        %324 = vst.msk [vmem:[%s323] sm:$0xff] %vm319, 0
        %325 = vst.msk [vmem:[%s323 + $0x8] sm:$0xff] %vm319, 0
        %326 = vst.msk [vmem:[%s323 + $0x10] sm:$0xff] %vm319, 0
        %s327 = scalar_lea.vmem [#allocation2], 24
        %vm328 = vcmask 523271
        %vm329 = vsmask.f32 7966
        %vm330 = vmand %vm328, %vm329
        %v331 = vld [vmem:[%s327] sm:$0x80]
        %v332 = vsel %vm330, 0, %v331
        %333 = vst [vmem:[%s327] sm:$0x80] %v332
        %v334 = vld [vmem:[%s327 + $0x18] sm:$0x80]
        %v335 = vsel %vm330, 0, %v334
        %336 = vst [vmem:[%s327 + $0x18] sm:$0x80] %v335
        %v337 = vld [vmem:[%s327 + $0x30] sm:$0x80]
        %v338 = vsel %vm330, 0, %v337
        %339 = vst [vmem:[%s327 + $0x30] sm:$0x80] %v338
        %v340 = vld [vmem:[%s327 + $0x48] sm:$0x80]
        %v341 = vsel %vm330, 0, %v340
        %342 = vst [vmem:[%s327 + $0x48] sm:$0x80] %v341
        %v343 = vld [vmem:[%s327 + $0x60] sm:$0x80]
        %v344 = vsel %vm330, 0, %v343
        %345 = vst [vmem:[%s327 + $0x60] sm:$0x80] %v344
        %v346 = vld [vmem:[%s327 + $0x78] sm:$0x80]
        %v347 = vsel %vm330, 0, %v346
        %348 = vst [vmem:[%s327 + $0x78] sm:$0x80] %v347
        %v349 = vld [vmem:[%s327 + $0x90] sm:$0x80]
        %v350 = vsel %vm330, 0, %v349
        %351 = vst [vmem:[%s327 + $0x90] sm:$0x80] %v350
        %v352 = vld [vmem:[%s327 + $0xa8] sm:$0x80]
        %v353 = vsel %vm330, 0, %v352
        %354 = vst [vmem:[%s327 + $0xa8] sm:$0x80] %v353
        %v355 = vld [vmem:[%s327 + $0xc0] sm:$0x80]
        %v356 = vsel %vm330, 0, %v355
        %357 = vst [vmem:[%s327 + $0xc0] sm:$0x80] %v356
        %v358 = vld [vmem:[%s327 + $0xd8] sm:$0x80]
        %v359 = vsel %vm330, 0, %v358
        %360 = vst [vmem:[%s327 + $0xd8] sm:$0x80] %v359
        %v361 = vld [vmem:[%s327 + $0xf0] sm:$0x80]
        %v362 = vsel %vm330, 0, %v361
        %363 = vst [vmem:[%s327 + $0xf0] sm:$0x80] %v362
        %v364 = vld [vmem:[%s327 + $0x108] sm:$0x80]
        %v365 = vsel %vm330, 0, %v364
        %366 = vst [vmem:[%s327 + $0x108] sm:$0x80] %v365
        %v367 = vld [vmem:[%s327 + $0x120] sm:$0x80]
        %v368 = vsel %vm330, 0, %v367
        %369 = vst [vmem:[%s327 + $0x120] sm:$0x80] %v368
        %v370 = vld [vmem:[%s327 + $0x138] sm:$0x80]
        %v371 = vsel %vm330, 0, %v370
        %372 = vst [vmem:[%s327 + $0x138] sm:$0x80] %v371
        %v373 = vld [vmem:[%s327 + $0x150] sm:$0x80]
        %v374 = vsel %vm330, 0, %v373
        %375 = vst [vmem:[%s327 + $0x150] sm:$0x80] %v374
        %v376 = vld [vmem:[%s327 + $0x168] sm:$0x80]
        %v377 = vsel %vm330, 0, %v376
        %378 = vst [vmem:[%s327 + $0x168] sm:$0x80] %v377
        %vm379 = vcmask 516096
        %vm380 = vsmask.f32 256
        %vm381 = vmand %vm379, %vm380
        %v382 = vld [vmem:[%s327 + $0x10] sm:$0x1]
        %v383 = vsel %vm381, 0, %v382
        %384 = vst [vmem:[%s327 + $0x10] sm:$0x1] %v383
        %v385 = vld [vmem:[%s327 + $0x28] sm:$0x1]
        %v386 = vsel %vm381, 0, %v385
        %387 = vst [vmem:[%s327 + $0x28] sm:$0x1] %v386
        %v388 = vld [vmem:[%s327 + $0x40] sm:$0x1]
        %v389 = vsel %vm381, 0, %v388
        %390 = vst [vmem:[%s327 + $0x40] sm:$0x1] %v389
        %v391 = vld [vmem:[%s327 + $0x58] sm:$0x1]
        %v392 = vsel %vm381, 0, %v391
        %393 = vst [vmem:[%s327 + $0x58] sm:$0x1] %v392
        %v394 = vld [vmem:[%s327 + $0x70] sm:$0x1]
        %v395 = vsel %vm381, 0, %v394
        %396 = vst [vmem:[%s327 + $0x70] sm:$0x1] %v395
        %v397 = vld [vmem:[%s327 + $0x88] sm:$0x1]
        %v398 = vsel %vm381, 0, %v397
        %399 = vst [vmem:[%s327 + $0x88] sm:$0x1] %v398
        %v400 = vld [vmem:[%s327 + $0xa0] sm:$0x1]
        %v401 = vsel %vm381, 0, %v400
        %402 = vst [vmem:[%s327 + $0xa0] sm:$0x1] %v401
        %v403 = vld [vmem:[%s327 + $0xb8] sm:$0x1]
        %v404 = vsel %vm381, 0, %v403
        %405 = vst [vmem:[%s327 + $0xb8] sm:$0x1] %v404
        %v406 = vld [vmem:[%s327 + $0xd0] sm:$0x1]
        %v407 = vsel %vm381, 0, %v406
        %408 = vst [vmem:[%s327 + $0xd0] sm:$0x1] %v407
        %v409 = vld [vmem:[%s327 + $0xe8] sm:$0x1]
        %v410 = vsel %vm381, 0, %v409
        %411 = vst [vmem:[%s327 + $0xe8] sm:$0x1] %v410
        %v412 = vld [vmem:[%s327 + $0x100] sm:$0x1]
        %v413 = vsel %vm381, 0, %v412
        %414 = vst [vmem:[%s327 + $0x100] sm:$0x1] %v413
        %v415 = vld [vmem:[%s327 + $0x118] sm:$0x1]
        %v416 = vsel %vm381, 0, %v415
        %417 = vst [vmem:[%s327 + $0x118] sm:$0x1] %v416
        %v418 = vld [vmem:[%s327 + $0x130] sm:$0x1]
        %v419 = vsel %vm381, 0, %v418
        %420 = vst [vmem:[%s327 + $0x130] sm:$0x1] %v419
        %v421 = vld [vmem:[%s327 + $0x148] sm:$0x1]
        %v422 = vsel %vm381, 0, %v421
        %423 = vst [vmem:[%s327 + $0x148] sm:$0x1] %v422
        %v424 = vld [vmem:[%s327 + $0x160] sm:$0x1]
        %v425 = vsel %vm381, 0, %v424
        %426 = vst [vmem:[%s327 + $0x160] sm:$0x1] %v425
        %v427 = vld [vmem:[%s327 + $0x178] sm:$0x1]
        %v428 = vsel %vm381, 0, %v427
        %429 = vst [vmem:[%s327 + $0x178] sm:$0x1] %v428
        %v430 = vld [vmem:[%s317] sm:$0xff]
        %v431 = vld [vmem:[%s317 + $0x8] sm:$0xff]
        %v432 = vld [vmem:[%s317 + $0x10] sm:$0xff]
        %v433 = vld [vmem:[%s317 + $0x18] sm:$0xff]
        %v434 = vld [vmem:[%s317 + $0x20] sm:$0xff]
        %v435 = vld [vmem:[%s317 + $0x28] sm:$0xff]
        %v436 = vld [vmem:[%s317 + $0x30] sm:$0xff]
        %v437 = vld [vmem:[%s317 + $0x38] sm:$0xff]
        %v438 = vld [vmem:[%s317 + $0x40] sm:$0xff]
        %v439 = vld [vmem:[%s317 + $0x48] sm:$0xff]
        %v440 = vld [vmem:[%s317 + $0x50] sm:$0xff]
        %v441 = vld [vmem:[%s317 + $0x58] sm:$0xff]
        %v442 = vld [vmem:[%s317 + $0x60] sm:$0xff]
        %v443 = vld [vmem:[%s317 + $0x68] sm:$0xff]
        %v444 = vld [vmem:[%s317 + $0x70] sm:$0xff]
        %v445 = vld [vmem:[%s317 + $0x78] sm:$0xff]
        %v446 = vld [vmem:[%s317 + $0x80] sm:$0xff]
        %v447 = vld [vmem:[%s317 + $0x88] sm:$0xff]
        %v448 = vld [vmem:[%s317 + $0x90] sm:$0xff]
        %v449 = vld [vmem:[%s317 + $0x98] sm:$0xff]
        %v450 = vld [vmem:[%s317 + $0xa0] sm:$0xff]
        %v451 = vld [vmem:[%s317 + $0xa8] sm:$0xff]
        %v452 = vld [vmem:[%s317 + $0xb0] sm:$0xff]
        %v453 = vld [vmem:[%s317 + $0xb8] sm:$0xff]
        %v454 = vld [vmem:[%s317 + $0xc0] sm:$0xff]
        %v455 = vld [vmem:[%s317 + $0xc8] sm:$0xff]
        %v456 = vld [vmem:[%s317 + $0xd0] sm:$0xff]
        %v457 = vld [vmem:[%s317 + $0xd8] sm:$0xff]
        %v458 = vld [vmem:[%s317 + $0xe0] sm:$0xff]
        %v459 = vld [vmem:[%s317 + $0xe8] sm:$0xff]
        %v460 = vld [vmem:[%s317 + $0xf0] sm:$0xff]
        %v461 = vld [vmem:[%s317 + $0xf8] sm:$0xff]
        %v462 = vpack.c.bf16 %v431, %v430
        %v463 = vpack.c.bf16 %v433, %v432
        %v464 = vpack.c.bf16 %v435, %v434
        %v465 = vpack.c.bf16 %v437, %v436
        %v466 = vpack.c.bf16 %v439, %v438
        %v467 = vpack.c.bf16 %v441, %v440
        %v468 = vpack.c.bf16 %v443, %v442
        %v469 = vpack.c.bf16 %v445, %v444
        %v470 = vpack.c.bf16 %v447, %v446
        %v471 = vpack.c.bf16 %v449, %v448
        %v472 = vpack.c.bf16 %v451, %v450
        %v473 = vpack.c.bf16 %v453, %v452
        %v474 = vpack.c.bf16 %v455, %v454
        %v475 = vpack.c.bf16 %v457, %v456
        %v476 = vpack.c.bf16 %v459, %v458
        %v477 = vpack.c.bf16 %v461, %v460
        %478 = vst.msk [vmem:[%s327 + $0x8] sm:$0xff] %vm319, %v462
        %479 = vst.msk [vmem:[%s327 + $0x20] sm:$0xff] %vm319, %v463
        %480 = vst.msk [vmem:[%s327 + $0x38] sm:$0xff] %vm319, %v464
        %481 = vst.msk [vmem:[%s327 + $0x50] sm:$0xff] %vm319, %v465
        %482 = vst.msk [vmem:[%s327 + $0x68] sm:$0xff] %vm319, %v466
        %483 = vst.msk [vmem:[%s327 + $0x80] sm:$0xff] %vm319, %v467
        %484 = vst.msk [vmem:[%s327 + $0x98] sm:$0xff] %vm319, %v468
        %485 = vst.msk [vmem:[%s327 + $0xb0] sm:$0xff] %vm319, %v469
        %486 = vst.msk [vmem:[%s327 + $0xc8] sm:$0xff] %vm319, %v470
        %487 = vst.msk [vmem:[%s327 + $0xe0] sm:$0xff] %vm319, %v471
        %488 = vst.msk [vmem:[%s327 + $0xf8] sm:$0xff] %vm319, %v472
        %489 = vst.msk [vmem:[%s327 + $0x110] sm:$0xff] %vm319, %v473
        %490 = vst.msk [vmem:[%s327 + $0x128] sm:$0xff] %vm319, %v474
        %491 = vst.msk [vmem:[%s327 + $0x140] sm:$0xff] %vm319, %v475
        %492 = vst.msk [vmem:[%s327 + $0x158] sm:$0xff] %vm319, %v476
        %493 = vst.msk [vmem:[%s327 + $0x170] sm:$0xff] %vm319, %v477
        %v494 = vld [vmem:[#allocation2] sm:$0x80]
        %v495 = vld [vmem:[#allocation2 + $0x8] sm:$0xff]
        %v496 = vld [vmem:[#allocation2 + $0x18] sm:$0x80]
        %v497 = vld [vmem:[#allocation2 + $0x20] sm:$0xff]
        %v498 = vld [vmem:[#allocation2 + $0x30] sm:$0x80]
        %v499 = vld [vmem:[#allocation2 + $0x38] sm:$0xff]
        %v500 = vld [vmem:[#allocation2 + $0x48] sm:$0x80]
        %v501 = vld [vmem:[#allocation2 + $0x50] sm:$0xff]
        %v502 = vld [vmem:[#allocation2 + $0x60] sm:$0x80]
        %v503 = vld [vmem:[#allocation2 + $0x68] sm:$0xff]
        %v504 = vld [vmem:[#allocation2 + $0x78] sm:$0x80]
        %v505 = vld [vmem:[#allocation2 + $0x80] sm:$0xff]
        %v506 = vld [vmem:[#allocation2 + $0x90] sm:$0x80]
        %v507 = vld [vmem:[#allocation2 + $0x98] sm:$0xff]
        %v508 = vld [vmem:[#allocation2 + $0xa8] sm:$0x80]
        %v509 = vld [vmem:[#allocation2 + $0xb0] sm:$0xff]
        %v510 = vld [vmem:[#allocation2 + $0xc0] sm:$0x80]
        %v511 = vld [vmem:[#allocation2 + $0xc8] sm:$0xff]
        %v512 = vld [vmem:[#allocation2 + $0xd8] sm:$0x80]
        %v513 = vld [vmem:[#allocation2 + $0xe0] sm:$0xff]
        %v514 = vld [vmem:[#allocation2 + $0xf0] sm:$0x80]
        %v515 = vld [vmem:[#allocation2 + $0xf8] sm:$0xff]
        %v516 = vld [vmem:[#allocation2 + $0x108] sm:$0x80]
        %v517 = vld [vmem:[#allocation2 + $0x110] sm:$0xff]
        %v518 = vld [vmem:[#allocation2 + $0x120] sm:$0x80]
        %v519 = vld [vmem:[#allocation2 + $0x128] sm:$0xff]
        %v520 = vld [vmem:[#allocation2 + $0x138] sm:$0x80]
        %v521 = vld [vmem:[#allocation2 + $0x140] sm:$0xff]
        %v522 = vld [vmem:[#allocation2 + $0x150] sm:$0x80]
        %v523 = vld [vmem:[#allocation2 + $0x158] sm:$0xff]
        %v524 = vld [vmem:[#allocation2 + $0x168] sm:$0x80]
        %v525 = vld [vmem:[#allocation2 + $0x170] sm:$0xff]
        %v527 = vshrl.u32 %v494, 16
        %v529 = vrot.slane %v527, 7
        %v531 = vshrl.u32 %v495, 16
        %v533 = vrot.slane %v531, 7
        %v534 = vshll.u32 %v495, 16
        %v536 = vor.u32 %v533, %v534
        %v537 = vsel %vm380, %v529, %v536
        %v539 = vshrl.u32 %v496, 16
        %v541 = vrot.slane %v539, 7
        %v543 = vshrl.u32 %v497, 16
        %v545 = vrot.slane %v543, 7
        %v546 = vshll.u32 %v497, 16
        %v548 = vor.u32 %v545, %v546
        %v549 = vsel %vm380, %v541, %v548
        %v551 = vshrl.u32 %v498, 16
        %v553 = vrot.slane %v551, 7
        %v555 = vshrl.u32 %v499, 16
        %v557 = vrot.slane %v555, 7
        %v558 = vshll.u32 %v499, 16
        %v560 = vor.u32 %v557, %v558
        %v561 = vsel %vm380, %v553, %v560
        %v563 = vshrl.u32 %v500, 16
        %v565 = vrot.slane %v563, 7
        %v567 = vshrl.u32 %v501, 16
        %v569 = vrot.slane %v567, 7
        %v570 = vshll.u32 %v501, 16
        %v572 = vor.u32 %v569, %v570
        %v573 = vsel %vm380, %v565, %v572
        %v575 = vshrl.u32 %v502, 16
        %v577 = vrot.slane %v575, 7
        %v579 = vshrl.u32 %v503, 16
        %v581 = vrot.slane %v579, 7
        %v582 = vshll.u32 %v503, 16
        %v584 = vor.u32 %v581, %v582
        %v585 = vsel %vm380, %v577, %v584
        %v587 = vshrl.u32 %v504, 16
        %v589 = vrot.slane %v587, 7
        %v591 = vshrl.u32 %v505, 16
        %v593 = vrot.slane %v591, 7
        %v594 = vshll.u32 %v505, 16
        %v596 = vor.u32 %v593, %v594
        %v597 = vsel %vm380, %v589, %v596
        %v599 = vshrl.u32 %v506, 16
        %v601 = vrot.slane %v599, 7
        %v603 = vshrl.u32 %v507, 16
        %v605 = vrot.slane %v603, 7
        %v606 = vshll.u32 %v507, 16
        %v608 = vor.u32 %v605, %v606
        %v609 = vsel %vm380, %v601, %v608
        %v611 = vshrl.u32 %v508, 16
        %v613 = vrot.slane %v611, 7
        %v615 = vshrl.u32 %v509, 16
        %v617 = vrot.slane %v615, 7
        %v618 = vshll.u32 %v509, 16
        %v620 = vor.u32 %v617, %v618
        %v621 = vsel %vm380, %v613, %v620
        %v623 = vshrl.u32 %v510, 16
        %v625 = vrot.slane %v623, 7
        %v627 = vshrl.u32 %v511, 16
        %v629 = vrot.slane %v627, 7
        %v630 = vshll.u32 %v511, 16
        %v632 = vor.u32 %v629, %v630
        %v633 = vsel %vm380, %v625, %v632
        %v635 = vshrl.u32 %v512, 16
        %v637 = vrot.slane %v635, 7
        %v639 = vshrl.u32 %v513, 16
        %v641 = vrot.slane %v639, 7
        %v642 = vshll.u32 %v513, 16
        %v644 = vor.u32 %v641, %v642
        %v645 = vsel %vm380, %v637, %v644
        %v647 = vshrl.u32 %v514, 16
        %v649 = vrot.slane %v647, 7
        %v651 = vshrl.u32 %v515, 16
        %v653 = vrot.slane %v651, 7
        %v654 = vshll.u32 %v515, 16
        %v656 = vor.u32 %v653, %v654
        %v657 = vsel %vm380, %v649, %v656
        %v659 = vshrl.u32 %v516, 16
        %v661 = vrot.slane %v659, 7
        %v663 = vshrl.u32 %v517, 16
        %v665 = vrot.slane %v663, 7
        %v666 = vshll.u32 %v517, 16
        %v668 = vor.u32 %v665, %v666
        %v669 = vsel %vm380, %v661, %v668
        %v671 = vshrl.u32 %v518, 16
        %v673 = vrot.slane %v671, 7
        %v675 = vshrl.u32 %v519, 16
        %v677 = vrot.slane %v675, 7
        %v678 = vshll.u32 %v519, 16
        %v680 = vor.u32 %v677, %v678
        %v681 = vsel %vm380, %v673, %v680
        %v683 = vshrl.u32 %v520, 16
        %v685 = vrot.slane %v683, 7
        %v687 = vshrl.u32 %v521, 16
        %v689 = vrot.slane %v687, 7
        %v690 = vshll.u32 %v521, 16
        %v692 = vor.u32 %v689, %v690
        %v693 = vsel %vm380, %v685, %v692
        %v695 = vshrl.u32 %v522, 16
        %v697 = vrot.slane %v695, 7
        %v699 = vshrl.u32 %v523, 16
        %v701 = vrot.slane %v699, 7
        %v702 = vshll.u32 %v523, 16
        %v704 = vor.u32 %v701, %v702
        %v705 = vsel %vm380, %v697, %v704
        %v707 = vshrl.u32 %v524, 16
        %v709 = vrot.slane %v707, 7
        %v711 = vshrl.u32 %v525, 16
        %v713 = vrot.slane %v711, 7
        %v714 = vshll.u32 %v525, 16
        %v716 = vor.u32 %v713, %v714
        %v717 = vsel %vm380, %v709, %v716
        %734 = vst.msk [vmem:[#allocation3] sm:$0xff] %vm319, %v537
        %735 = vst.msk [vmem:[#allocation3 + $0x28] sm:$0xff] %vm319, %v549
        %736 = vst.msk [vmem:[#allocation3 + $0x50] sm:$0xff] %vm319, %v561
        %737 = vst.msk [vmem:[#allocation3 + $0x78] sm:$0xff] %vm319, %v573
        %738 = vst.msk [vmem:[#allocation3 + $0xa0] sm:$0xff] %vm319, %v585
        %739 = vst.msk [vmem:[#allocation3 + $0xc8] sm:$0xff] %vm319, %v597
        %740 = vst.msk [vmem:[#allocation3 + $0xf0] sm:$0xff] %vm319, %v609
        %741 = vst.msk [vmem:[#allocation3 + $0x118] sm:$0xff] %vm319, %v621
        %742 = vst.msk [vmem:[#allocation3 + $0x140] sm:$0xff] %vm319, %v633
        %743 = vst.msk [vmem:[#allocation3 + $0x168] sm:$0xff] %vm319, %v645
        %744 = vst.msk [vmem:[#allocation3 + $0x190] sm:$0xff] %vm319, %v657
        %745 = vst.msk [vmem:[#allocation3 + $0x1b8] sm:$0xff] %vm319, %v669
        %746 = vst.msk [vmem:[#allocation3 + $0x1e0] sm:$0xff] %vm319, %v681
        %747 = vst.msk [vmem:[#allocation3 + $0x208] sm:$0xff] %vm319, %v693
        %748 = vst.msk [vmem:[#allocation3 + $0x230] sm:$0xff] %vm319, %v705
        %749 = vst.msk [vmem:[#allocation3 + $0x258] sm:$0xff] %vm319, %v717
        %v750 = vld [vmem:[#allocation2 + $0x8] sm:$0xff]
        %v751 = vld [vmem:[#allocation2 + $0x20] sm:$0xff]
        %v752 = vld [vmem:[#allocation2 + $0x38] sm:$0xff]
        %v753 = vld [vmem:[#allocation2 + $0x50] sm:$0xff]
        %v754 = vld [vmem:[#allocation2 + $0x68] sm:$0xff]
        %v755 = vld [vmem:[#allocation2 + $0x80] sm:$0xff]
        %v756 = vld [vmem:[#allocation2 + $0x98] sm:$0xff]
        %v757 = vld [vmem:[#allocation2 + $0xb0] sm:$0xff]
        %v758 = vld [vmem:[#allocation2 + $0xc8] sm:$0xff]
        %v759 = vld [vmem:[#allocation2 + $0xe0] sm:$0xff]
        %v760 = vld [vmem:[#allocation2 + $0xf8] sm:$0xff]
        %v761 = vld [vmem:[#allocation2 + $0x110] sm:$0xff]
        %v762 = vld [vmem:[#allocation2 + $0x128] sm:$0xff]
        %v763 = vld [vmem:[#allocation2 + $0x140] sm:$0xff]
        %v764 = vld [vmem:[#allocation2 + $0x158] sm:$0xff]
        %v765 = vld [vmem:[#allocation2 + $0x170] sm:$0xff]
        %782 = vrot.lane.b32.xlu0 %v750, 64
        %v783 = vpop.permute.xlu0 %782
        %784 = vrot.lane.b32.xlu0 %v751, 64
        %v785 = vpop.permute.xlu0 %784
        %786 = vrot.lane.b32.xlu0 %v752, 64
        %v787 = vpop.permute.xlu0 %786
        %788 = vrot.lane.b32.xlu0 %v753, 64
        %v789 = vpop.permute.xlu0 %788
        %790 = vrot.lane.b32.xlu0 %v754, 64
        %v791 = vpop.permute.xlu0 %790
        %792 = vrot.lane.b32.xlu0 %v755, 64
        %v793 = vpop.permute.xlu0 %792
        %794 = vrot.lane.b32.xlu0 %v756, 64
        %v795 = vpop.permute.xlu0 %794
        %796 = vrot.lane.b32.xlu0 %v757, 64
        %v797 = vpop.permute.xlu0 %796
        %798 = vrot.lane.b32.xlu0 %v758, 64
        %v799 = vpop.permute.xlu0 %798
        %800 = vrot.lane.b32.xlu0 %v759, 64
        %v801 = vpop.permute.xlu0 %800
        %802 = vrot.lane.b32.xlu0 %v760, 64
        %v803 = vpop.permute.xlu0 %802
        %804 = vrot.lane.b32.xlu0 %v761, 64
        %v805 = vpop.permute.xlu0 %804
        %806 = vrot.lane.b32.xlu0 %v762, 64
        %v807 = vpop.permute.xlu0 %806
        %808 = vrot.lane.b32.xlu0 %v763, 64
        %v809 = vpop.permute.xlu0 %808
        %810 = vrot.lane.b32.xlu0 %v764, 64
        %v811 = vpop.permute.xlu0 %810
        %812 = vrot.lane.b32.xlu0 %v765, 64
        %v813 = vpop.permute.xlu0 %812
        %vm830 = vcmask 1048064
        %831 = vst.msk [vmem:[#allocation3] sm:$0xff] %vm830, %v783
        %832 = vst.msk [vmem:[#allocation3 + $0x28] sm:$0xff] %vm830, %v785
        %833 = vst.msk [vmem:[#allocation3 + $0x50] sm:$0xff] %vm830, %v787
        %834 = vst.msk [vmem:[#allocation3 + $0x78] sm:$0xff] %vm830, %v789
        %835 = vst.msk [vmem:[#allocation3 + $0xa0] sm:$0xff] %vm830, %v791
        %836 = vst.msk [vmem:[#allocation3 + $0xc8] sm:$0xff] %vm830, %v793
        %837 = vst.msk [vmem:[#allocation3 + $0xf0] sm:$0xff] %vm830, %v795
        %838 = vst.msk [vmem:[#allocation3 + $0x118] sm:$0xff] %vm830, %v797
        %839 = vst.msk [vmem:[#allocation3 + $0x140] sm:$0xff] %vm830, %v799
        %840 = vst.msk [vmem:[#allocation3 + $0x168] sm:$0xff] %vm830, %v801
        %841 = vst.msk [vmem:[#allocation3 + $0x190] sm:$0xff] %vm830, %v803
        %842 = vst.msk [vmem:[#allocation3 + $0x1b8] sm:$0xff] %vm830, %v805
        %843 = vst.msk [vmem:[#allocation3 + $0x1e0] sm:$0xff] %vm830, %v807
        %844 = vst.msk [vmem:[#allocation3 + $0x208] sm:$0xff] %vm830, %v809
        %845 = vst.msk [vmem:[#allocation3 + $0x230] sm:$0xff] %vm830, %v811
        %846 = vst.msk [vmem:[#allocation3 + $0x258] sm:$0xff] %vm830, %v813
        %v847 = vld [vmem:[#allocation2 + $0x8] sm:$0xff]
        %v848 = vld [vmem:[#allocation2 + $0x10] sm:$0x1]
        %v849 = vld [vmem:[#allocation2 + $0x20] sm:$0xff]
        %v850 = vld [vmem:[#allocation2 + $0x28] sm:$0x1]
        %v851 = vld [vmem:[#allocation2 + $0x38] sm:$0xff]
        %v852 = vld [vmem:[#allocation2 + $0x40] sm:$0x1]
        %v853 = vld [vmem:[#allocation2 + $0x50] sm:$0xff]
        %v854 = vld [vmem:[#allocation2 + $0x58] sm:$0x1]
        %v855 = vld [vmem:[#allocation2 + $0x68] sm:$0xff]
        %v856 = vld [vmem:[#allocation2 + $0x70] sm:$0x1]
        %v857 = vld [vmem:[#allocation2 + $0x80] sm:$0xff]
        %v858 = vld [vmem:[#allocation2 + $0x88] sm:$0x1]
        %v859 = vld [vmem:[#allocation2 + $0x98] sm:$0xff]
        %v860 = vld [vmem:[#allocation2 + $0xa0] sm:$0x1]
        %v861 = vld [vmem:[#allocation2 + $0xb0] sm:$0xff]
        %v862 = vld [vmem:[#allocation2 + $0xb8] sm:$0x1]
        %v863 = vld [vmem:[#allocation2 + $0xc8] sm:$0xff]
        %v864 = vld [vmem:[#allocation2 + $0xd0] sm:$0x1]
        %v865 = vld [vmem:[#allocation2 + $0xe0] sm:$0xff]
        %v866 = vld [vmem:[#allocation2 + $0xe8] sm:$0x1]
        %v867 = vld [vmem:[#allocation2 + $0xf8] sm:$0xff]
        %v868 = vld [vmem:[#allocation2 + $0x100] sm:$0x1]
        %v869 = vld [vmem:[#allocation2 + $0x110] sm:$0xff]
        %v870 = vld [vmem:[#allocation2 + $0x118] sm:$0x1]
        %v871 = vld [vmem:[#allocation2 + $0x128] sm:$0xff]
        %v872 = vld [vmem:[#allocation2 + $0x130] sm:$0x1]
        %v873 = vld [vmem:[#allocation2 + $0x140] sm:$0xff]
        %v874 = vld [vmem:[#allocation2 + $0x148] sm:$0x1]
        %v875 = vld [vmem:[#allocation2 + $0x158] sm:$0xff]
        %v876 = vld [vmem:[#allocation2 + $0x160] sm:$0x1]
        %v877 = vld [vmem:[#allocation2 + $0x170] sm:$0xff]
        %v878 = vld [vmem:[#allocation2 + $0x178] sm:$0x1]
        %vm879 = vsmask.f32 7424
        %v881 = vshrl.u32 %v847, 16
        %v883 = vshll.u32 %v847, 16
        %v885 = vrot.slane %v883, 1
        %v886 = vor.u32 %v881, %v885
        %v888 = vshll.u32 %v848, 16
        %v890 = vrot.slane %v888, 1
        %v891 = vsel %vm879, %v886, %v890
        %v893 = vshrl.u32 %v849, 16
        %v895 = vshll.u32 %v849, 16
        %v897 = vrot.slane %v895, 1
        %v898 = vor.u32 %v893, %v897
        %v900 = vshll.u32 %v850, 16
        %v902 = vrot.slane %v900, 1
        %v903 = vsel %vm879, %v898, %v902
        %v905 = vshrl.u32 %v851, 16
        %v907 = vshll.u32 %v851, 16
        %v909 = vrot.slane %v907, 1
        %v910 = vor.u32 %v905, %v909
        %v912 = vshll.u32 %v852, 16
        %v914 = vrot.slane %v912, 1
        %v915 = vsel %vm879, %v910, %v914
        %v917 = vshrl.u32 %v853, 16
        %v919 = vshll.u32 %v853, 16
        %v921 = vrot.slane %v919, 1
        %v922 = vor.u32 %v917, %v921
        %v924 = vshll.u32 %v854, 16
        %v926 = vrot.slane %v924, 1
        %v927 = vsel %vm879, %v922, %v926
        %v929 = vshrl.u32 %v855, 16
        %v931 = vshll.u32 %v855, 16
        %v933 = vrot.slane %v931, 1
        %v934 = vor.u32 %v929, %v933
        %v936 = vshll.u32 %v856, 16
        %v938 = vrot.slane %v936, 1
        %v939 = vsel %vm879, %v934, %v938
        %v941 = vshrl.u32 %v857, 16
        %v943 = vshll.u32 %v857, 16
        %v945 = vrot.slane %v943, 1
        %v946 = vor.u32 %v941, %v945
        %v948 = vshll.u32 %v858, 16
        %v950 = vrot.slane %v948, 1
        %v951 = vsel %vm879, %v946, %v950
        %v953 = vshrl.u32 %v859, 16
        %v955 = vshll.u32 %v859, 16
        %v957 = vrot.slane %v955, 1
        %v958 = vor.u32 %v953, %v957
        %v960 = vshll.u32 %v860, 16
        %v962 = vrot.slane %v960, 1
        %v963 = vsel %vm879, %v958, %v962
        %v965 = vshrl.u32 %v861, 16
        %v967 = vshll.u32 %v861, 16
        %v969 = vrot.slane %v967, 1
        %v970 = vor.u32 %v965, %v969
        %v972 = vshll.u32 %v862, 16
        %v974 = vrot.slane %v972, 1
        %v975 = vsel %vm879, %v970, %v974
        %v977 = vshrl.u32 %v863, 16
        %v979 = vshll.u32 %v863, 16
        %v981 = vrot.slane %v979, 1
        %v982 = vor.u32 %v977, %v981
        %v984 = vshll.u32 %v864, 16
        %v986 = vrot.slane %v984, 1
        %v987 = vsel %vm879, %v982, %v986
        %v989 = vshrl.u32 %v865, 16
        %v991 = vshll.u32 %v865, 16
        %v993 = vrot.slane %v991, 1
        %v994 = vor.u32 %v989, %v993
        %v996 = vshll.u32 %v866, 16
        %v998 = vrot.slane %v996, 1
        %v999 = vsel %vm879, %v994, %v998
        %v1001 = vshrl.u32 %v867, 16
        %v1003 = vshll.u32 %v867, 16
        %v1005 = vrot.slane %v1003, 1
        %v1006 = vor.u32 %v1001, %v1005
        %v1008 = vshll.u32 %v868, 16
        %v1010 = vrot.slane %v1008, 1
        %v1011 = vsel %vm879, %v1006, %v1010
        %v1013 = vshrl.u32 %v869, 16
        %v1015 = vshll.u32 %v869, 16
        %v1017 = vrot.slane %v1015, 1
        %v1018 = vor.u32 %v1013, %v1017
        %v1020 = vshll.u32 %v870, 16
        %v1022 = vrot.slane %v1020, 1
        %v1023 = vsel %vm879, %v1018, %v1022
        %v1025 = vshrl.u32 %v871, 16
        %v1027 = vshll.u32 %v871, 16
        %v1029 = vrot.slane %v1027, 1
        %v1030 = vor.u32 %v1025, %v1029
        %v1032 = vshll.u32 %v872, 16
        %v1034 = vrot.slane %v1032, 1
        %v1035 = vsel %vm879, %v1030, %v1034
        %v1037 = vshrl.u32 %v873, 16
        %v1039 = vshll.u32 %v873, 16
        %v1041 = vrot.slane %v1039, 1
        %v1042 = vor.u32 %v1037, %v1041
        %v1044 = vshll.u32 %v874, 16
        %v1046 = vrot.slane %v1044, 1
        %v1047 = vsel %vm879, %v1042, %v1046
        %v1049 = vshrl.u32 %v875, 16
        %v1051 = vshll.u32 %v875, 16
        %v1053 = vrot.slane %v1051, 1
        %v1054 = vor.u32 %v1049, %v1053
        %v1056 = vshll.u32 %v876, 16
        %v1058 = vrot.slane %v1056, 1
        %v1059 = vsel %vm879, %v1054, %v1058
        %v1061 = vshrl.u32 %v877, 16
        %v1063 = vshll.u32 %v877, 16
        %v1065 = vrot.slane %v1063, 1
        %v1066 = vor.u32 %v1061, %v1065
        %v1068 = vshll.u32 %v878, 16
        %v1070 = vrot.slane %v1068, 1
        %v1071 = vsel %vm879, %v1066, %v1070
        %1088 = vst.msk [vmem:[#allocation3 + $0x8] sm:$0xff] %vm319, %v891
        %1089 = vst.msk [vmem:[#allocation3 + $0x30] sm:$0xff] %vm319, %v903
        %1090 = vst.msk [vmem:[#allocation3 + $0x58] sm:$0xff] %vm319, %v915
        %1091 = vst.msk [vmem:[#allocation3 + $0x80] sm:$0xff] %vm319, %v927
        %1092 = vst.msk [vmem:[#allocation3 + $0xa8] sm:$0xff] %vm319, %v939
        %1093 = vst.msk [vmem:[#allocation3 + $0xd0] sm:$0xff] %vm319, %v951
        %1094 = vst.msk [vmem:[#allocation3 + $0xf8] sm:$0xff] %vm319, %v963
        %1095 = vst.msk [vmem:[#allocation3 + $0x120] sm:$0xff] %vm319, %v975
        %1096 = vst.msk [vmem:[#allocation3 + $0x148] sm:$0xff] %vm319, %v987
        %1097 = vst.msk [vmem:[#allocation3 + $0x170] sm:$0xff] %vm319, %v999
        %1098 = vst.msk [vmem:[#allocation3 + $0x198] sm:$0xff] %vm319, %v1011
        %1099 = vst.msk [vmem:[#allocation3 + $0x1c0] sm:$0xff] %vm319, %v1023
        %1100 = vst.msk [vmem:[#allocation3 + $0x1e8] sm:$0xff] %vm319, %v1035
        %1101 = vst.msk [vmem:[#allocation3 + $0x210] sm:$0xff] %vm319, %v1047
        %1102 = vst.msk [vmem:[#allocation3 + $0x238] sm:$0xff] %vm319, %v1059
        %1103 = vst.msk [vmem:[#allocation3 + $0x260] sm:$0xff] %vm319, %v1071
        %v1104 = vld [vmem:[%s327] sm:$0x80]
        %v1105 = vld [vmem:[%s327 + $0x8] sm:$0xff]
        %v1106 = vld [vmem:[%s327 + $0x18] sm:$0x80]
        %v1107 = vld [vmem:[%s327 + $0x20] sm:$0xff]
        %v1108 = vld [vmem:[%s327 + $0x30] sm:$0x80]
        %v1109 = vld [vmem:[%s327 + $0x38] sm:$0xff]
        %v1110 = vld [vmem:[%s327 + $0x48] sm:$0x80]
        %v1111 = vld [vmem:[%s327 + $0x50] sm:$0xff]
        %v1112 = vld [vmem:[%s327 + $0x60] sm:$0x80]
        %v1113 = vld [vmem:[%s327 + $0x68] sm:$0xff]
        %v1114 = vld [vmem:[%s327 + $0x78] sm:$0x80]
        %v1115 = vld [vmem:[%s327 + $0x80] sm:$0xff]
        %v1116 = vld [vmem:[%s327 + $0x90] sm:$0x80]
        %v1117 = vld [vmem:[%s327 + $0x98] sm:$0xff]
        %v1118 = vld [vmem:[%s327 + $0xa8] sm:$0x80]
        %v1119 = vld [vmem:[%s327 + $0xb0] sm:$0xff]
        %v1120 = vld [vmem:[%s327 + $0xc0] sm:$0x80]
        %v1121 = vld [vmem:[%s327 + $0xc8] sm:$0xff]
        %v1122 = vld [vmem:[%s327 + $0xd8] sm:$0x80]
        %v1123 = vld [vmem:[%s327 + $0xe0] sm:$0xff]
        %v1124 = vld [vmem:[%s327 + $0xf0] sm:$0x80]
        %v1125 = vld [vmem:[%s327 + $0xf8] sm:$0xff]
        %v1126 = vld [vmem:[%s327 + $0x108] sm:$0x80]
        %v1127 = vld [vmem:[%s327 + $0x110] sm:$0xff]
        %v1128 = vld [vmem:[%s327 + $0x120] sm:$0x80]
        %v1129 = vld [vmem:[%s327 + $0x128] sm:$0xff]
        %v1130 = vld [vmem:[%s327 + $0x138] sm:$0x80]
        %v1131 = vld [vmem:[%s327 + $0x140] sm:$0xff]
        %v1132 = vld [vmem:[%s327 + $0x150] sm:$0x80]
        %v1133 = vld [vmem:[%s327 + $0x158] sm:$0xff]
        %v1134 = vld [vmem:[%s327 + $0x168] sm:$0x80]
        %v1135 = vld [vmem:[%s327 + $0x170] sm:$0xff]
        %v1137 = vshrl.u32 %v1104, 16
        %v1139 = vrot.slane %v1137, 7
        %v1141 = vshrl.u32 %v1105, 16
        %v1143 = vrot.slane %v1141, 7
        %v1144 = vshll.u32 %v1105, 16
        %v1146 = vor.u32 %v1143, %v1144
        %v1147 = vsel %vm380, %v1139, %v1146
        %v1149 = vshrl.u32 %v1106, 16
        %v1151 = vrot.slane %v1149, 7
        %v1153 = vshrl.u32 %v1107, 16
        %v1155 = vrot.slane %v1153, 7
        %v1156 = vshll.u32 %v1107, 16
        %v1158 = vor.u32 %v1155, %v1156
        %v1159 = vsel %vm380, %v1151, %v1158
        %v1161 = vshrl.u32 %v1108, 16
        %v1163 = vrot.slane %v1161, 7
        %v1165 = vshrl.u32 %v1109, 16
        %v1167 = vrot.slane %v1165, 7
        %v1168 = vshll.u32 %v1109, 16
        %v1170 = vor.u32 %v1167, %v1168
        %v1171 = vsel %vm380, %v1163, %v1170
        %v1173 = vshrl.u32 %v1110, 16
        %v1175 = vrot.slane %v1173, 7
        %v1177 = vshrl.u32 %v1111, 16
        %v1179 = vrot.slane %v1177, 7
        %v1180 = vshll.u32 %v1111, 16
        %v1182 = vor.u32 %v1179, %v1180
        %v1183 = vsel %vm380, %v1175, %v1182
        %v1185 = vshrl.u32 %v1112, 16
        %v1187 = vrot.slane %v1185, 7
        %v1189 = vshrl.u32 %v1113, 16
        %v1191 = vrot.slane %v1189, 7
        %v1192 = vshll.u32 %v1113, 16
        %v1194 = vor.u32 %v1191, %v1192
        %v1195 = vsel %vm380, %v1187, %v1194
        %v1197 = vshrl.u32 %v1114, 16
        %v1199 = vrot.slane %v1197, 7
        %v1201 = vshrl.u32 %v1115, 16
        %v1203 = vrot.slane %v1201, 7
        %v1204 = vshll.u32 %v1115, 16
        %v1206 = vor.u32 %v1203, %v1204
        %v1207 = vsel %vm380, %v1199, %v1206
        %v1209 = vshrl.u32 %v1116, 16
        %v1211 = vrot.slane %v1209, 7
        %v1213 = vshrl.u32 %v1117, 16
        %v1215 = vrot.slane %v1213, 7
        %v1216 = vshll.u32 %v1117, 16
        %v1218 = vor.u32 %v1215, %v1216
        %v1219 = vsel %vm380, %v1211, %v1218
        %v1221 = vshrl.u32 %v1118, 16
        %v1223 = vrot.slane %v1221, 7
        %v1225 = vshrl.u32 %v1119, 16
        %v1227 = vrot.slane %v1225, 7
        %v1228 = vshll.u32 %v1119, 16
        %v1230 = vor.u32 %v1227, %v1228
        %v1231 = vsel %vm380, %v1223, %v1230
        %v1233 = vshrl.u32 %v1120, 16
        %v1235 = vrot.slane %v1233, 7
        %v1237 = vshrl.u32 %v1121, 16
        %v1239 = vrot.slane %v1237, 7
        %v1240 = vshll.u32 %v1121, 16
        %v1242 = vor.u32 %v1239, %v1240
        %v1243 = vsel %vm380, %v1235, %v1242
        %v1245 = vshrl.u32 %v1122, 16
        %v1247 = vrot.slane %v1245, 7
        %v1249 = vshrl.u32 %v1123, 16
        %v1251 = vrot.slane %v1249, 7
        %v1252 = vshll.u32 %v1123, 16
        %v1254 = vor.u32 %v1251, %v1252
        %v1255 = vsel %vm380, %v1247, %v1254
        %v1257 = vshrl.u32 %v1124, 16
        %v1259 = vrot.slane %v1257, 7
        %v1261 = vshrl.u32 %v1125, 16
        %v1263 = vrot.slane %v1261, 7
        %v1264 = vshll.u32 %v1125, 16
        %v1266 = vor.u32 %v1263, %v1264
        %v1267 = vsel %vm380, %v1259, %v1266
        %v1269 = vshrl.u32 %v1126, 16
        %v1271 = vrot.slane %v1269, 7
        %v1273 = vshrl.u32 %v1127, 16
        %v1275 = vrot.slane %v1273, 7
        %v1276 = vshll.u32 %v1127, 16
        %v1278 = vor.u32 %v1275, %v1276
        %v1279 = vsel %vm380, %v1271, %v1278
        %v1281 = vshrl.u32 %v1128, 16
        %v1283 = vrot.slane %v1281, 7
        %v1285 = vshrl.u32 %v1129, 16
        %v1287 = vrot.slane %v1285, 7
        %v1288 = vshll.u32 %v1129, 16
        %v1290 = vor.u32 %v1287, %v1288
        %v1291 = vsel %vm380, %v1283, %v1290
        %v1293 = vshrl.u32 %v1130, 16
        %v1295 = vrot.slane %v1293, 7
        %v1297 = vshrl.u32 %v1131, 16
        %v1299 = vrot.slane %v1297, 7
        %v1300 = vshll.u32 %v1131, 16
        %v1302 = vor.u32 %v1299, %v1300
        %v1303 = vsel %vm380, %v1295, %v1302
        %v1305 = vshrl.u32 %v1132, 16
        %v1307 = vrot.slane %v1305, 7
        %v1309 = vshrl.u32 %v1133, 16
        %v1311 = vrot.slane %v1309, 7
        %v1312 = vshll.u32 %v1133, 16
        %v1314 = vor.u32 %v1311, %v1312
        %v1315 = vsel %vm380, %v1307, %v1314
        %v1317 = vshrl.u32 %v1134, 16
        %v1319 = vrot.slane %v1317, 7
        %v1321 = vshrl.u32 %v1135, 16
        %v1323 = vrot.slane %v1321, 7
        %v1324 = vshll.u32 %v1135, 16
        %v1326 = vor.u32 %v1323, %v1324
        %v1327 = vsel %vm380, %v1319, %v1326
        %1328 = vrot.lane.b32.xlu0 %v1147, 64
        %v1329 = vpop.permute.xlu0 %1328
        %1330 = vrot.lane.b32.xlu0 %v1159, 64
        %v1331 = vpop.permute.xlu0 %1330
        %1332 = vrot.lane.b32.xlu0 %v1171, 64
        %v1333 = vpop.permute.xlu0 %1332
        %1334 = vrot.lane.b32.xlu0 %v1183, 64
        %v1335 = vpop.permute.xlu0 %1334
        %1336 = vrot.lane.b32.xlu0 %v1195, 64
        %v1337 = vpop.permute.xlu0 %1336
        %1338 = vrot.lane.b32.xlu0 %v1207, 64
        %v1339 = vpop.permute.xlu0 %1338
        %1340 = vrot.lane.b32.xlu0 %v1219, 64
        %v1341 = vpop.permute.xlu0 %1340
        %1342 = vrot.lane.b32.xlu0 %v1231, 64
        %v1343 = vpop.permute.xlu0 %1342
        %1344 = vrot.lane.b32.xlu0 %v1243, 64
        %v1345 = vpop.permute.xlu0 %1344
        %1346 = vrot.lane.b32.xlu0 %v1255, 64
        %v1347 = vpop.permute.xlu0 %1346
        %1348 = vrot.lane.b32.xlu0 %v1267, 64
        %v1349 = vpop.permute.xlu0 %1348
        %1350 = vrot.lane.b32.xlu0 %v1279, 64
        %v1351 = vpop.permute.xlu0 %1350
        %1352 = vrot.lane.b32.xlu0 %v1291, 64
        %v1353 = vpop.permute.xlu0 %1352
        %1354 = vrot.lane.b32.xlu0 %v1303, 64
        %v1355 = vpop.permute.xlu0 %1354
        %1356 = vrot.lane.b32.xlu0 %v1315, 64
        %v1357 = vpop.permute.xlu0 %1356
        %1358 = vrot.lane.b32.xlu0 %v1327, 64
        %v1359 = vpop.permute.xlu0 %1358
        %1376 = vst.msk [vmem:[#allocation3 + $0x8] sm:$0xff] %vm830, %v1329
        %1377 = vst.msk [vmem:[#allocation3 + $0x30] sm:$0xff] %vm830, %v1331
        %1378 = vst.msk [vmem:[#allocation3 + $0x58] sm:$0xff] %vm830, %v1333
        %1379 = vst.msk [vmem:[#allocation3 + $0x80] sm:$0xff] %vm830, %v1335
        %1380 = vst.msk [vmem:[#allocation3 + $0xa8] sm:$0xff] %vm830, %v1337
        %1381 = vst.msk [vmem:[#allocation3 + $0xd0] sm:$0xff] %vm830, %v1339
        %1382 = vst.msk [vmem:[#allocation3 + $0xf8] sm:$0xff] %vm830, %v1341
        %1383 = vst.msk [vmem:[#allocation3 + $0x120] sm:$0xff] %vm830, %v1343
        %1384 = vst.msk [vmem:[#allocation3 + $0x148] sm:$0xff] %vm830, %v1345
        %1385 = vst.msk [vmem:[#allocation3 + $0x170] sm:$0xff] %vm830, %v1347
        %1386 = vst.msk [vmem:[#allocation3 + $0x198] sm:$0xff] %vm830, %v1349
        %1387 = vst.msk [vmem:[#allocation3 + $0x1c0] sm:$0xff] %vm830, %v1351
        %1388 = vst.msk [vmem:[#allocation3 + $0x1e8] sm:$0xff] %vm830, %v1353
        %1389 = vst.msk [vmem:[#allocation3 + $0x210] sm:$0xff] %vm830, %v1355
        %1390 = vst.msk [vmem:[#allocation3 + $0x238] sm:$0xff] %vm830, %v1357
        %1391 = vst.msk [vmem:[#allocation3 + $0x260] sm:$0xff] %vm830, %v1359
        %v1392 = vld [vmem:[%s327 + $0x8] sm:$0xff]
        %v1393 = vld [vmem:[%s327 + $0x20] sm:$0xff]
        %v1394 = vld [vmem:[%s327 + $0x38] sm:$0xff]
        %v1395 = vld [vmem:[%s327 + $0x50] sm:$0xff]
        %v1396 = vld [vmem:[%s327 + $0x68] sm:$0xff]
        %v1397 = vld [vmem:[%s327 + $0x80] sm:$0xff]
        %v1398 = vld [vmem:[%s327 + $0x98] sm:$0xff]
        %v1399 = vld [vmem:[%s327 + $0xb0] sm:$0xff]
        %v1400 = vld [vmem:[%s327 + $0xc8] sm:$0xff]
        %v1401 = vld [vmem:[%s327 + $0xe0] sm:$0xff]
        %v1402 = vld [vmem:[%s327 + $0xf8] sm:$0xff]
        %v1403 = vld [vmem:[%s327 + $0x110] sm:$0xff]
        %v1404 = vld [vmem:[%s327 + $0x128] sm:$0xff]
        %v1405 = vld [vmem:[%s327 + $0x140] sm:$0xff]
        %v1406 = vld [vmem:[%s327 + $0x158] sm:$0xff]
        %v1407 = vld [vmem:[%s327 + $0x170] sm:$0xff]
        %1408 = vst.msk [vmem:[#allocation3 + $0x10] sm:$0xff] %vm319, %v1392
        %1409 = vst.msk [vmem:[#allocation3 + $0x38] sm:$0xff] %vm319, %v1393
        %1410 = vst.msk [vmem:[#allocation3 + $0x60] sm:$0xff] %vm319, %v1394
        %1411 = vst.msk [vmem:[#allocation3 + $0x88] sm:$0xff] %vm319, %v1395
        %1412 = vst.msk [vmem:[#allocation3 + $0xb0] sm:$0xff] %vm319, %v1396
        %1413 = vst.msk [vmem:[#allocation3 + $0xd8] sm:$0xff] %vm319, %v1397
        %1414 = vst.msk [vmem:[#allocation3 + $0x100] sm:$0xff] %vm319, %v1398
        %1415 = vst.msk [vmem:[#allocation3 + $0x128] sm:$0xff] %vm319, %v1399
        %1416 = vst.msk [vmem:[#allocation3 + $0x150] sm:$0xff] %vm319, %v1400
        %1417 = vst.msk [vmem:[#allocation3 + $0x178] sm:$0xff] %vm319, %v1401
        %1418 = vst.msk [vmem:[#allocation3 + $0x1a0] sm:$0xff] %vm319, %v1402
        %1419 = vst.msk [vmem:[#allocation3 + $0x1c8] sm:$0xff] %vm319, %v1403
        %1420 = vst.msk [vmem:[#allocation3 + $0x1f0] sm:$0xff] %vm319, %v1404
        %1421 = vst.msk [vmem:[#allocation3 + $0x218] sm:$0xff] %vm319, %v1405
        %1422 = vst.msk [vmem:[#allocation3 + $0x240] sm:$0xff] %vm319, %v1406
        %1423 = vst.msk [vmem:[#allocation3 + $0x268] sm:$0xff] %vm319, %v1407
        %v1424 = vld [vmem:[%s327 + $0x8] sm:$0xff]
        %v1425 = vld [vmem:[%s327 + $0x10] sm:$0x1]
        %v1426 = vld [vmem:[%s327 + $0x20] sm:$0xff]
        %v1427 = vld [vmem:[%s327 + $0x28] sm:$0x1]
        %v1428 = vld [vmem:[%s327 + $0x38] sm:$0xff]
        %v1429 = vld [vmem:[%s327 + $0x40] sm:$0x1]
        %v1430 = vld [vmem:[%s327 + $0x50] sm:$0xff]
        %v1431 = vld [vmem:[%s327 + $0x58] sm:$0x1]
        %v1432 = vld [vmem:[%s327 + $0x68] sm:$0xff]
        %v1433 = vld [vmem:[%s327 + $0x70] sm:$0x1]
        %v1434 = vld [vmem:[%s327 + $0x80] sm:$0xff]
        %v1435 = vld [vmem:[%s327 + $0x88] sm:$0x1]
        %v1436 = vld [vmem:[%s327 + $0x98] sm:$0xff]
        %v1437 = vld [vmem:[%s327 + $0xa0] sm:$0x1]
        %v1438 = vld [vmem:[%s327 + $0xb0] sm:$0xff]
        %v1439 = vld [vmem:[%s327 + $0xb8] sm:$0x1]
        %v1440 = vld [vmem:[%s327 + $0xc8] sm:$0xff]
        %v1441 = vld [vmem:[%s327 + $0xd0] sm:$0x1]
        %v1442 = vld [vmem:[%s327 + $0xe0] sm:$0xff]
        %v1443 = vld [vmem:[%s327 + $0xe8] sm:$0x1]
        %v1444 = vld [vmem:[%s327 + $0xf8] sm:$0xff]
        %v1445 = vld [vmem:[%s327 + $0x100] sm:$0x1]
        %v1446 = vld [vmem:[%s327 + $0x110] sm:$0xff]
        %v1447 = vld [vmem:[%s327 + $0x118] sm:$0x1]
        %v1448 = vld [vmem:[%s327 + $0x128] sm:$0xff]
        %v1449 = vld [vmem:[%s327 + $0x130] sm:$0x1]
        %v1450 = vld [vmem:[%s327 + $0x140] sm:$0xff]
        %v1451 = vld [vmem:[%s327 + $0x148] sm:$0x1]
        %v1452 = vld [vmem:[%s327 + $0x158] sm:$0xff]
        %v1453 = vld [vmem:[%s327 + $0x160] sm:$0x1]
        %v1454 = vld [vmem:[%s327 + $0x170] sm:$0xff]
        %v1455 = vld [vmem:[%s327 + $0x178] sm:$0x1]
        %v1457 = vshrl.u32 %v1424, 16
        %v1459 = vshll.u32 %v1424, 16
        %v1461 = vrot.slane %v1459, 1
        %v1462 = vor.u32 %v1457, %v1461
        %v1464 = vshll.u32 %v1425, 16
        %v1466 = vrot.slane %v1464, 1
        %v1467 = vsel %vm879, %v1462, %v1466
        %v1469 = vshrl.u32 %v1426, 16
        %v1471 = vshll.u32 %v1426, 16
        %v1473 = vrot.slane %v1471, 1
        %v1474 = vor.u32 %v1469, %v1473
        %v1476 = vshll.u32 %v1427, 16
        %v1478 = vrot.slane %v1476, 1
        %v1479 = vsel %vm879, %v1474, %v1478
        %v1481 = vshrl.u32 %v1428, 16
        %v1483 = vshll.u32 %v1428, 16
        %v1485 = vrot.slane %v1483, 1
        %v1486 = vor.u32 %v1481, %v1485
        %v1488 = vshll.u32 %v1429, 16
        %v1490 = vrot.slane %v1488, 1
        %v1491 = vsel %vm879, %v1486, %v1490
        %v1493 = vshrl.u32 %v1430, 16
        %v1495 = vshll.u32 %v1430, 16
        %v1497 = vrot.slane %v1495, 1
        %v1498 = vor.u32 %v1493, %v1497
        %v1500 = vshll.u32 %v1431, 16
        %v1502 = vrot.slane %v1500, 1
        %v1503 = vsel %vm879, %v1498, %v1502
        %v1505 = vshrl.u32 %v1432, 16
        %v1507 = vshll.u32 %v1432, 16
        %v1509 = vrot.slane %v1507, 1
        %v1510 = vor.u32 %v1505, %v1509
        %v1512 = vshll.u32 %v1433, 16
        %v1514 = vrot.slane %v1512, 1
        %v1515 = vsel %vm879, %v1510, %v1514
        %v1517 = vshrl.u32 %v1434, 16
        %v1519 = vshll.u32 %v1434, 16
        %v1521 = vrot.slane %v1519, 1
        %v1522 = vor.u32 %v1517, %v1521
        %v1524 = vshll.u32 %v1435, 16
        %v1526 = vrot.slane %v1524, 1
        %v1527 = vsel %vm879, %v1522, %v1526
        %v1529 = vshrl.u32 %v1436, 16
        %v1531 = vshll.u32 %v1436, 16
        %v1533 = vrot.slane %v1531, 1
        %v1534 = vor.u32 %v1529, %v1533
        %v1536 = vshll.u32 %v1437, 16
        %v1538 = vrot.slane %v1536, 1
        %v1539 = vsel %vm879, %v1534, %v1538
        %v1541 = vshrl.u32 %v1438, 16
        %v1543 = vshll.u32 %v1438, 16
        %v1545 = vrot.slane %v1543, 1
        %v1546 = vor.u32 %v1541, %v1545
        %v1548 = vshll.u32 %v1439, 16
        %v1550 = vrot.slane %v1548, 1
        %v1551 = vsel %vm879, %v1546, %v1550
        %v1553 = vshrl.u32 %v1440, 16
        %v1555 = vshll.u32 %v1440, 16
        %v1557 = vrot.slane %v1555, 1
        %v1558 = vor.u32 %v1553, %v1557
        %v1560 = vshll.u32 %v1441, 16
        %v1562 = vrot.slane %v1560, 1
        %v1563 = vsel %vm879, %v1558, %v1562
        %v1565 = vshrl.u32 %v1442, 16
        %v1567 = vshll.u32 %v1442, 16
        %v1569 = vrot.slane %v1567, 1
        %v1570 = vor.u32 %v1565, %v1569
        %v1572 = vshll.u32 %v1443, 16
        %v1574 = vrot.slane %v1572, 1
        %v1575 = vsel %vm879, %v1570, %v1574
        %v1577 = vshrl.u32 %v1444, 16
        %v1579 = vshll.u32 %v1444, 16
        %v1581 = vrot.slane %v1579, 1
        %v1582 = vor.u32 %v1577, %v1581
        %v1584 = vshll.u32 %v1445, 16
        %v1586 = vrot.slane %v1584, 1
        %v1587 = vsel %vm879, %v1582, %v1586
        %v1589 = vshrl.u32 %v1446, 16
        %v1591 = vshll.u32 %v1446, 16
        %v1593 = vrot.slane %v1591, 1
        %v1594 = vor.u32 %v1589, %v1593
        %v1596 = vshll.u32 %v1447, 16
        %v1598 = vrot.slane %v1596, 1
        %v1599 = vsel %vm879, %v1594, %v1598
        %v1601 = vshrl.u32 %v1448, 16
        %v1603 = vshll.u32 %v1448, 16
        %v1605 = vrot.slane %v1603, 1
        %v1606 = vor.u32 %v1601, %v1605
        %v1608 = vshll.u32 %v1449, 16
        %v1610 = vrot.slane %v1608, 1
        %v1611 = vsel %vm879, %v1606, %v1610
        %v1613 = vshrl.u32 %v1450, 16
        %v1615 = vshll.u32 %v1450, 16
        %v1617 = vrot.slane %v1615, 1
        %v1618 = vor.u32 %v1613, %v1617
        %v1620 = vshll.u32 %v1451, 16
        %v1622 = vrot.slane %v1620, 1
        %v1623 = vsel %vm879, %v1618, %v1622
        %v1625 = vshrl.u32 %v1452, 16
        %v1627 = vshll.u32 %v1452, 16
        %v1629 = vrot.slane %v1627, 1
        %v1630 = vor.u32 %v1625, %v1629
        %v1632 = vshll.u32 %v1453, 16
        %v1634 = vrot.slane %v1632, 1
        %v1635 = vsel %vm879, %v1630, %v1634
        %v1637 = vshrl.u32 %v1454, 16
        %v1639 = vshll.u32 %v1454, 16
        %v1641 = vrot.slane %v1639, 1
        %v1642 = vor.u32 %v1637, %v1641
        %v1644 = vshll.u32 %v1455, 16
        %v1646 = vrot.slane %v1644, 1
        %v1647 = vsel %vm879, %v1642, %v1646
        %1648 = vrot.lane.b32.xlu0 %v1467, 64
        %v1649 = vpop.permute.xlu0 %1648
        %1650 = vrot.lane.b32.xlu0 %v1479, 64
        %v1651 = vpop.permute.xlu0 %1650
        %1652 = vrot.lane.b32.xlu0 %v1491, 64
        %v1653 = vpop.permute.xlu0 %1652
        %1654 = vrot.lane.b32.xlu0 %v1503, 64
        %v1655 = vpop.permute.xlu0 %1654
        %1656 = vrot.lane.b32.xlu0 %v1515, 64
        %v1657 = vpop.permute.xlu0 %1656
        %1658 = vrot.lane.b32.xlu0 %v1527, 64
        %v1659 = vpop.permute.xlu0 %1658
        %1660 = vrot.lane.b32.xlu0 %v1539, 64
        %v1661 = vpop.permute.xlu0 %1660
        %1662 = vrot.lane.b32.xlu0 %v1551, 64
        %v1663 = vpop.permute.xlu0 %1662
        %1664 = vrot.lane.b32.xlu0 %v1563, 64
        %v1665 = vpop.permute.xlu0 %1664
        %1666 = vrot.lane.b32.xlu0 %v1575, 64
        %v1667 = vpop.permute.xlu0 %1666
        %1668 = vrot.lane.b32.xlu0 %v1587, 64
        %v1669 = vpop.permute.xlu0 %1668
        %1670 = vrot.lane.b32.xlu0 %v1599, 64
        %v1671 = vpop.permute.xlu0 %1670
        %1672 = vrot.lane.b32.xlu0 %v1611, 64
        %v1673 = vpop.permute.xlu0 %1672
        %1674 = vrot.lane.b32.xlu0 %v1623, 64
        %v1675 = vpop.permute.xlu0 %1674
        %1676 = vrot.lane.b32.xlu0 %v1635, 64
        %v1677 = vpop.permute.xlu0 %1676
        %1678 = vrot.lane.b32.xlu0 %v1647, 64
        %v1679 = vpop.permute.xlu0 %1678
        %1696 = vst.msk [vmem:[#allocation3 + $0x10] sm:$0xff] %vm830, %v1649
        %1697 = vst.msk [vmem:[#allocation3 + $0x38] sm:$0xff] %vm830, %v1651
        %1698 = vst.msk [vmem:[#allocation3 + $0x60] sm:$0xff] %vm830, %v1653
        %1699 = vst.msk [vmem:[#allocation3 + $0x88] sm:$0xff] %vm830, %v1655
        %1700 = vst.msk [vmem:[#allocation3 + $0xb0] sm:$0xff] %vm830, %v1657
        %1701 = vst.msk [vmem:[#allocation3 + $0xd8] sm:$0xff] %vm830, %v1659
        %1702 = vst.msk [vmem:[#allocation3 + $0x100] sm:$0xff] %vm830, %v1661
        %1703 = vst.msk [vmem:[#allocation3 + $0x128] sm:$0xff] %vm830, %v1663
        %1704 = vst.msk [vmem:[#allocation3 + $0x150] sm:$0xff] %vm830, %v1665
        %1705 = vst.msk [vmem:[#allocation3 + $0x178] sm:$0xff] %vm830, %v1667
        %1706 = vst.msk [vmem:[#allocation3 + $0x1a0] sm:$0xff] %vm830, %v1669
        %1707 = vst.msk [vmem:[#allocation3 + $0x1c8] sm:$0xff] %vm830, %v1671
        %1708 = vst.msk [vmem:[#allocation3 + $0x1f0] sm:$0xff] %vm830, %v1673
        %1709 = vst.msk [vmem:[#allocation3 + $0x218] sm:$0xff] %vm830, %v1675
        %1710 = vst.msk [vmem:[#allocation3 + $0x240] sm:$0xff] %vm830, %v1677
        %1711 = vst.msk [vmem:[#allocation3 + $0x268] sm:$0xff] %vm830, %v1679
        %s1712 = scalar_lea.vmem [#allocation2], 48
        %v1713 = vld [vmem:[%s1712] sm:$0x80]
        %v1714 = vld [vmem:[%s1712 + $0x8] sm:$0xff]
        %v1715 = vld [vmem:[%s1712 + $0x18] sm:$0x80]
        %v1716 = vld [vmem:[%s1712 + $0x20] sm:$0xff]
        %v1717 = vld [vmem:[%s1712 + $0x30] sm:$0x80]
        %v1718 = vld [vmem:[%s1712 + $0x38] sm:$0xff]
        %v1719 = vld [vmem:[%s1712 + $0x48] sm:$0x80]
        %v1720 = vld [vmem:[%s1712 + $0x50] sm:$0xff]
        %v1721 = vld [vmem:[%s1712 + $0x60] sm:$0x80]
        %v1722 = vld [vmem:[%s1712 + $0x68] sm:$0xff]
        %v1723 = vld [vmem:[%s1712 + $0x78] sm:$0x80]
        %v1724 = vld [vmem:[%s1712 + $0x80] sm:$0xff]
        %v1725 = vld [vmem:[%s1712 + $0x90] sm:$0x80]
        %v1726 = vld [vmem:[%s1712 + $0x98] sm:$0xff]
        %v1727 = vld [vmem:[%s1712 + $0xa8] sm:$0x80]
        %v1728 = vld [vmem:[%s1712 + $0xb0] sm:$0xff]
        %v1729 = vld [vmem:[%s1712 + $0xc0] sm:$0x80]
        %v1730 = vld [vmem:[%s1712 + $0xc8] sm:$0xff]
        %v1731 = vld [vmem:[%s1712 + $0xd8] sm:$0x80]
        %v1732 = vld [vmem:[%s1712 + $0xe0] sm:$0xff]
        %v1733 = vld [vmem:[%s1712 + $0xf0] sm:$0x80]
        %v1734 = vld [vmem:[%s1712 + $0xf8] sm:$0xff]
        %v1735 = vld [vmem:[%s1712 + $0x108] sm:$0x80]
        %v1736 = vld [vmem:[%s1712 + $0x110] sm:$0xff]
        %v1737 = vld [vmem:[%s1712 + $0x120] sm:$0x80]
        %v1738 = vld [vmem:[%s1712 + $0x128] sm:$0xff]
        %v1739 = vld [vmem:[%s1712 + $0x138] sm:$0x80]
        %v1740 = vld [vmem:[%s1712 + $0x140] sm:$0xff]
        %v1741 = vld [vmem:[%s1712 + $0x150] sm:$0x80]
        %v1742 = vld [vmem:[%s1712 + $0x158] sm:$0xff]
        %v1743 = vld [vmem:[%s1712 + $0x168] sm:$0x80]
        %v1744 = vld [vmem:[%s1712 + $0x170] sm:$0xff]
        %v1746 = vshrl.u32 %v1713, 16
        %v1748 = vrot.slane %v1746, 7
        %v1750 = vshrl.u32 %v1714, 16
        %v1752 = vrot.slane %v1750, 7
        %v1753 = vshll.u32 %v1714, 16
        %v1755 = vor.u32 %v1752, %v1753
        %v1756 = vsel %vm380, %v1748, %v1755
        %v1758 = vshrl.u32 %v1715, 16
        %v1760 = vrot.slane %v1758, 7
        %v1762 = vshrl.u32 %v1716, 16
        %v1764 = vrot.slane %v1762, 7
        %v1765 = vshll.u32 %v1716, 16
        %v1767 = vor.u32 %v1764, %v1765
        %v1768 = vsel %vm380, %v1760, %v1767
        %v1770 = vshrl.u32 %v1717, 16
        %v1772 = vrot.slane %v1770, 7
        %v1774 = vshrl.u32 %v1718, 16
        %v1776 = vrot.slane %v1774, 7
        %v1777 = vshll.u32 %v1718, 16
        %v1779 = vor.u32 %v1776, %v1777
        %v1780 = vsel %vm380, %v1772, %v1779
        %v1782 = vshrl.u32 %v1719, 16
        %v1784 = vrot.slane %v1782, 7
        %v1786 = vshrl.u32 %v1720, 16
        %v1788 = vrot.slane %v1786, 7
        %v1789 = vshll.u32 %v1720, 16
        %v1791 = vor.u32 %v1788, %v1789
        %v1792 = vsel %vm380, %v1784, %v1791
        %v1794 = vshrl.u32 %v1721, 16
        %v1796 = vrot.slane %v1794, 7
        %v1798 = vshrl.u32 %v1722, 16
        %v1800 = vrot.slane %v1798, 7
        %v1801 = vshll.u32 %v1722, 16
        %v1803 = vor.u32 %v1800, %v1801
        %v1804 = vsel %vm380, %v1796, %v1803
        %v1806 = vshrl.u32 %v1723, 16
        %v1808 = vrot.slane %v1806, 7
        %v1810 = vshrl.u32 %v1724, 16
        %v1812 = vrot.slane %v1810, 7
        %v1813 = vshll.u32 %v1724, 16
        %v1815 = vor.u32 %v1812, %v1813
        %v1816 = vsel %vm380, %v1808, %v1815
        %v1818 = vshrl.u32 %v1725, 16
        %v1820 = vrot.slane %v1818, 7
        %v1822 = vshrl.u32 %v1726, 16
        %v1824 = vrot.slane %v1822, 7
        %v1825 = vshll.u32 %v1726, 16
        %v1827 = vor.u32 %v1824, %v1825
        %v1828 = vsel %vm380, %v1820, %v1827
        %v1830 = vshrl.u32 %v1727, 16
        %v1832 = vrot.slane %v1830, 7
        %v1834 = vshrl.u32 %v1728, 16
        %v1836 = vrot.slane %v1834, 7
        %v1837 = vshll.u32 %v1728, 16
        %v1839 = vor.u32 %v1836, %v1837
        %v1840 = vsel %vm380, %v1832, %v1839
        %v1842 = vshrl.u32 %v1729, 16
        %v1844 = vrot.slane %v1842, 7
        %v1846 = vshrl.u32 %v1730, 16
        %v1848 = vrot.slane %v1846, 7
        %v1849 = vshll.u32 %v1730, 16
        %v1851 = vor.u32 %v1848, %v1849
        %v1852 = vsel %vm380, %v1844, %v1851
        %v1854 = vshrl.u32 %v1731, 16
        %v1856 = vrot.slane %v1854, 7
        %v1858 = vshrl.u32 %v1732, 16
        %v1860 = vrot.slane %v1858, 7
        %v1861 = vshll.u32 %v1732, 16
        %v1863 = vor.u32 %v1860, %v1861
        %v1864 = vsel %vm380, %v1856, %v1863
        %v1866 = vshrl.u32 %v1733, 16
        %v1868 = vrot.slane %v1866, 7
        %v1870 = vshrl.u32 %v1734, 16
        %v1872 = vrot.slane %v1870, 7
        %v1873 = vshll.u32 %v1734, 16
        %v1875 = vor.u32 %v1872, %v1873
        %v1876 = vsel %vm380, %v1868, %v1875
        %v1878 = vshrl.u32 %v1735, 16
        %v1880 = vrot.slane %v1878, 7
        %v1882 = vshrl.u32 %v1736, 16
        %v1884 = vrot.slane %v1882, 7
        %v1885 = vshll.u32 %v1736, 16
        %v1887 = vor.u32 %v1884, %v1885
        %v1888 = vsel %vm380, %v1880, %v1887
        %v1890 = vshrl.u32 %v1737, 16
        %v1892 = vrot.slane %v1890, 7
        %v1894 = vshrl.u32 %v1738, 16
        %v1896 = vrot.slane %v1894, 7
        %v1897 = vshll.u32 %v1738, 16
        %v1899 = vor.u32 %v1896, %v1897
        %v1900 = vsel %vm380, %v1892, %v1899
        %v1902 = vshrl.u32 %v1739, 16
        %v1904 = vrot.slane %v1902, 7
        %v1906 = vshrl.u32 %v1740, 16
        %v1908 = vrot.slane %v1906, 7
        %v1909 = vshll.u32 %v1740, 16
        %v1911 = vor.u32 %v1908, %v1909
        %v1912 = vsel %vm380, %v1904, %v1911
        %v1914 = vshrl.u32 %v1741, 16
        %v1916 = vrot.slane %v1914, 7
        %v1918 = vshrl.u32 %v1742, 16
        %v1920 = vrot.slane %v1918, 7
        %v1921 = vshll.u32 %v1742, 16
        %v1923 = vor.u32 %v1920, %v1921
        %v1924 = vsel %vm380, %v1916, %v1923
        %v1926 = vshrl.u32 %v1743, 16
        %v1928 = vrot.slane %v1926, 7
        %v1930 = vshrl.u32 %v1744, 16
        %v1932 = vrot.slane %v1930, 7
        %v1933 = vshll.u32 %v1744, 16
        %v1935 = vor.u32 %v1932, %v1933
        %v1936 = vsel %vm380, %v1928, %v1935
        %1953 = vst.msk [vmem:[#allocation3 + $0x18] sm:$0xff] %vm319, %v1756
        %1954 = vst.msk [vmem:[#allocation3 + $0x40] sm:$0xff] %vm319, %v1768
        %1955 = vst.msk [vmem:[#allocation3 + $0x68] sm:$0xff] %vm319, %v1780
        %1956 = vst.msk [vmem:[#allocation3 + $0x90] sm:$0xff] %vm319, %v1792
        %1957 = vst.msk [vmem:[#allocation3 + $0xb8] sm:$0xff] %vm319, %v1804
        %1958 = vst.msk [vmem:[#allocation3 + $0xe0] sm:$0xff] %vm319, %v1816
        %1959 = vst.msk [vmem:[#allocation3 + $0x108] sm:$0xff] %vm319, %v1828
        %1960 = vst.msk [vmem:[#allocation3 + $0x130] sm:$0xff] %vm319, %v1840
        %1961 = vst.msk [vmem:[#allocation3 + $0x158] sm:$0xff] %vm319, %v1852
        %1962 = vst.msk [vmem:[#allocation3 + $0x180] sm:$0xff] %vm319, %v1864
        %1963 = vst.msk [vmem:[#allocation3 + $0x1a8] sm:$0xff] %vm319, %v1876
        %1964 = vst.msk [vmem:[#allocation3 + $0x1d0] sm:$0xff] %vm319, %v1888
        %1965 = vst.msk [vmem:[#allocation3 + $0x1f8] sm:$0xff] %vm319, %v1900
        %1966 = vst.msk [vmem:[#allocation3 + $0x220] sm:$0xff] %vm319, %v1912
        %1967 = vst.msk [vmem:[#allocation3 + $0x248] sm:$0xff] %vm319, %v1924
        %1968 = vst.msk [vmem:[#allocation3 + $0x270] sm:$0xff] %vm319, %v1936
        %v1969 = vld [vmem:[%s1712 + $0x8] sm:$0xff]
        %v1970 = vld [vmem:[%s1712 + $0x20] sm:$0xff]
        %v1971 = vld [vmem:[%s1712 + $0x38] sm:$0xff]
        %v1972 = vld [vmem:[%s1712 + $0x50] sm:$0xff]
        %v1973 = vld [vmem:[%s1712 + $0x68] sm:$0xff]
        %v1974 = vld [vmem:[%s1712 + $0x80] sm:$0xff]
        %v1975 = vld [vmem:[%s1712 + $0x98] sm:$0xff]
        %v1976 = vld [vmem:[%s1712 + $0xb0] sm:$0xff]
        %v1977 = vld [vmem:[%s1712 + $0xc8] sm:$0xff]
        %v1978 = vld [vmem:[%s1712 + $0xe0] sm:$0xff]
        %v1979 = vld [vmem:[%s1712 + $0xf8] sm:$0xff]
        %v1980 = vld [vmem:[%s1712 + $0x110] sm:$0xff]
        %v1981 = vld [vmem:[%s1712 + $0x128] sm:$0xff]
        %v1982 = vld [vmem:[%s1712 + $0x140] sm:$0xff]
        %v1983 = vld [vmem:[%s1712 + $0x158] sm:$0xff]
        %v1984 = vld [vmem:[%s1712 + $0x170] sm:$0xff]
        %2001 = vrot.lane.b32.xlu0 %v1969, 64
        %v2002 = vpop.permute.xlu0 %2001
        %2003 = vrot.lane.b32.xlu0 %v1970, 64
        %v2004 = vpop.permute.xlu0 %2003
        %2005 = vrot.lane.b32.xlu0 %v1971, 64
        %v2006 = vpop.permute.xlu0 %2005
        %2007 = vrot.lane.b32.xlu0 %v1972, 64
        %v2008 = vpop.permute.xlu0 %2007
        %2009 = vrot.lane.b32.xlu0 %v1973, 64
        %v2010 = vpop.permute.xlu0 %2009
        %2011 = vrot.lane.b32.xlu0 %v1974, 64
        %v2012 = vpop.permute.xlu0 %2011
        %2013 = vrot.lane.b32.xlu0 %v1975, 64
        %v2014 = vpop.permute.xlu0 %2013
        %2015 = vrot.lane.b32.xlu0 %v1976, 64
        %v2016 = vpop.permute.xlu0 %2015
        %2017 = vrot.lane.b32.xlu0 %v1977, 64
        %v2018 = vpop.permute.xlu0 %2017
        %2019 = vrot.lane.b32.xlu0 %v1978, 64
        %v2020 = vpop.permute.xlu0 %2019
        %2021 = vrot.lane.b32.xlu0 %v1979, 64
        %v2022 = vpop.permute.xlu0 %2021
        %2023 = vrot.lane.b32.xlu0 %v1980, 64
        %v2024 = vpop.permute.xlu0 %2023
        %2025 = vrot.lane.b32.xlu0 %v1981, 64
        %v2026 = vpop.permute.xlu0 %2025
        %2027 = vrot.lane.b32.xlu0 %v1982, 64
        %v2028 = vpop.permute.xlu0 %2027
        %2029 = vrot.lane.b32.xlu0 %v1983, 64
        %v2030 = vpop.permute.xlu0 %2029
        %2031 = vrot.lane.b32.xlu0 %v1984, 64
        %v2032 = vpop.permute.xlu0 %2031
        %2049 = vst.msk [vmem:[#allocation3 + $0x18] sm:$0xff] %vm830, %v2002
        %2050 = vst.msk [vmem:[#allocation3 + $0x40] sm:$0xff] %vm830, %v2004
        %2051 = vst.msk [vmem:[#allocation3 + $0x68] sm:$0xff] %vm830, %v2006
        %2052 = vst.msk [vmem:[#allocation3 + $0x90] sm:$0xff] %vm830, %v2008
        %2053 = vst.msk [vmem:[#allocation3 + $0xb8] sm:$0xff] %vm830, %v2010
        %2054 = vst.msk [vmem:[#allocation3 + $0xe0] sm:$0xff] %vm830, %v2012
        %2055 = vst.msk [vmem:[#allocation3 + $0x108] sm:$0xff] %vm830, %v2014
        %2056 = vst.msk [vmem:[#allocation3 + $0x130] sm:$0xff] %vm830, %v2016
        %2057 = vst.msk [vmem:[#allocation3 + $0x158] sm:$0xff] %vm830, %v2018
        %2058 = vst.msk [vmem:[#allocation3 + $0x180] sm:$0xff] %vm830, %v2020
        %2059 = vst.msk [vmem:[#allocation3 + $0x1a8] sm:$0xff] %vm830, %v2022
        %2060 = vst.msk [vmem:[#allocation3 + $0x1d0] sm:$0xff] %vm830, %v2024
        %2061 = vst.msk [vmem:[#allocation3 + $0x1f8] sm:$0xff] %vm830, %v2026
        %2062 = vst.msk [vmem:[#allocation3 + $0x220] sm:$0xff] %vm830, %v2028
        %2063 = vst.msk [vmem:[#allocation3 + $0x248] sm:$0xff] %vm830, %v2030
        %2064 = vst.msk [vmem:[#allocation3 + $0x270] sm:$0xff] %vm830, %v2032
        %v2065 = vld [vmem:[%s1712 + $0x8] sm:$0xff]
        %v2066 = vld [vmem:[%s1712 + $0x10] sm:$0x1]
        %v2067 = vld [vmem:[%s1712 + $0x20] sm:$0xff]
        %v2068 = vld [vmem:[%s1712 + $0x28] sm:$0x1]
        %v2069 = vld [vmem:[%s1712 + $0x38] sm:$0xff]
        %v2070 = vld [vmem:[%s1712 + $0x40] sm:$0x1]
        %v2071 = vld [vmem:[%s1712 + $0x50] sm:$0xff]
        %v2072 = vld [vmem:[%s1712 + $0x58] sm:$0x1]
        %v2073 = vld [vmem:[%s1712 + $0x68] sm:$0xff]
        %v2074 = vld [vmem:[%s1712 + $0x70] sm:$0x1]
        %v2075 = vld [vmem:[%s1712 + $0x80] sm:$0xff]
        %v2076 = vld [vmem:[%s1712 + $0x88] sm:$0x1]
        %v2077 = vld [vmem:[%s1712 + $0x98] sm:$0xff]
        %v2078 = vld [vmem:[%s1712 + $0xa0] sm:$0x1]
        %v2079 = vld [vmem:[%s1712 + $0xb0] sm:$0xff]
        %v2080 = vld [vmem:[%s1712 + $0xb8] sm:$0x1]
        %v2081 = vld [vmem:[%s1712 + $0xc8] sm:$0xff]
        %v2082 = vld [vmem:[%s1712 + $0xd0] sm:$0x1]
        %v2083 = vld [vmem:[%s1712 + $0xe0] sm:$0xff]
        %v2084 = vld [vmem:[%s1712 + $0xe8] sm:$0x1]
        %v2085 = vld [vmem:[%s1712 + $0xf8] sm:$0xff]
        %v2086 = vld [vmem:[%s1712 + $0x100] sm:$0x1]
        %v2087 = vld [vmem:[%s1712 + $0x110] sm:$0xff]
        %v2088 = vld [vmem:[%s1712 + $0x118] sm:$0x1]
        %v2089 = vld [vmem:[%s1712 + $0x128] sm:$0xff]
        %v2090 = vld [vmem:[%s1712 + $0x130] sm:$0x1]
        %v2091 = vld [vmem:[%s1712 + $0x140] sm:$0xff]
        %v2092 = vld [vmem:[%s1712 + $0x148] sm:$0x1]
        %v2093 = vld [vmem:[%s1712 + $0x158] sm:$0xff]
        %v2094 = vld [vmem:[%s1712 + $0x160] sm:$0x1]
        %v2095 = vld [vmem:[%s1712 + $0x170] sm:$0xff]
        %v2096 = vld [vmem:[%s1712 + $0x178] sm:$0x1]
        %v2098 = vshrl.u32 %v2065, 16
        %v2100 = vshll.u32 %v2065, 16
        %v2102 = vrot.slane %v2100, 1
        %v2103 = vor.u32 %v2098, %v2102
        %v2105 = vshll.u32 %v2066, 16
        %v2107 = vrot.slane %v2105, 1
        %v2108 = vsel %vm879, %v2103, %v2107
        %v2110 = vshrl.u32 %v2067, 16
        %v2112 = vshll.u32 %v2067, 16
        %v2114 = vrot.slane %v2112, 1
        %v2115 = vor.u32 %v2110, %v2114
        %v2117 = vshll.u32 %v2068, 16
        %v2119 = vrot.slane %v2117, 1
        %v2120 = vsel %vm879, %v2115, %v2119
        %v2122 = vshrl.u32 %v2069, 16
        %v2124 = vshll.u32 %v2069, 16
        %v2126 = vrot.slane %v2124, 1
        %v2127 = vor.u32 %v2122, %v2126
        %v2129 = vshll.u32 %v2070, 16
        %v2131 = vrot.slane %v2129, 1
        %v2132 = vsel %vm879, %v2127, %v2131
        %v2134 = vshrl.u32 %v2071, 16
        %v2136 = vshll.u32 %v2071, 16
        %v2138 = vrot.slane %v2136, 1
        %v2139 = vor.u32 %v2134, %v2138
        %v2141 = vshll.u32 %v2072, 16
        %v2143 = vrot.slane %v2141, 1
        %v2144 = vsel %vm879, %v2139, %v2143
        %v2146 = vshrl.u32 %v2073, 16
        %v2148 = vshll.u32 %v2073, 16
        %v2150 = vrot.slane %v2148, 1
        %v2151 = vor.u32 %v2146, %v2150
        %v2153 = vshll.u32 %v2074, 16
        %v2155 = vrot.slane %v2153, 1
        %v2156 = vsel %vm879, %v2151, %v2155
        %v2158 = vshrl.u32 %v2075, 16
        %v2160 = vshll.u32 %v2075, 16
        %v2162 = vrot.slane %v2160, 1
        %v2163 = vor.u32 %v2158, %v2162
        %v2165 = vshll.u32 %v2076, 16
        %v2167 = vrot.slane %v2165, 1
        %v2168 = vsel %vm879, %v2163, %v2167
        %v2170 = vshrl.u32 %v2077, 16
        %v2172 = vshll.u32 %v2077, 16
        %v2174 = vrot.slane %v2172, 1
        %v2175 = vor.u32 %v2170, %v2174
        %v2177 = vshll.u32 %v2078, 16
        %v2179 = vrot.slane %v2177, 1
        %v2180 = vsel %vm879, %v2175, %v2179
        %v2182 = vshrl.u32 %v2079, 16
        %v2184 = vshll.u32 %v2079, 16
        %v2186 = vrot.slane %v2184, 1
        %v2187 = vor.u32 %v2182, %v2186
        %v2189 = vshll.u32 %v2080, 16
        %v2191 = vrot.slane %v2189, 1
        %v2192 = vsel %vm879, %v2187, %v2191
        %v2194 = vshrl.u32 %v2081, 16
        %v2196 = vshll.u32 %v2081, 16
        %v2198 = vrot.slane %v2196, 1
        %v2199 = vor.u32 %v2194, %v2198
        %v2201 = vshll.u32 %v2082, 16
        %v2203 = vrot.slane %v2201, 1
        %v2204 = vsel %vm879, %v2199, %v2203
        %v2206 = vshrl.u32 %v2083, 16
        %v2208 = vshll.u32 %v2083, 16
        %v2210 = vrot.slane %v2208, 1
        %v2211 = vor.u32 %v2206, %v2210
        %v2213 = vshll.u32 %v2084, 16
        %v2215 = vrot.slane %v2213, 1
        %v2216 = vsel %vm879, %v2211, %v2215
        %v2218 = vshrl.u32 %v2085, 16
        %v2220 = vshll.u32 %v2085, 16
        %v2222 = vrot.slane %v2220, 1
        %v2223 = vor.u32 %v2218, %v2222
        %v2225 = vshll.u32 %v2086, 16
        %v2227 = vrot.slane %v2225, 1
        %v2228 = vsel %vm879, %v2223, %v2227
        %v2230 = vshrl.u32 %v2087, 16
        %v2232 = vshll.u32 %v2087, 16
        %v2234 = vrot.slane %v2232, 1
        %v2235 = vor.u32 %v2230, %v2234
        %v2237 = vshll.u32 %v2088, 16
        %v2239 = vrot.slane %v2237, 1
        %v2240 = vsel %vm879, %v2235, %v2239
        %v2242 = vshrl.u32 %v2089, 16
        %v2244 = vshll.u32 %v2089, 16
        %v2246 = vrot.slane %v2244, 1
        %v2247 = vor.u32 %v2242, %v2246
        %v2249 = vshll.u32 %v2090, 16
        %v2251 = vrot.slane %v2249, 1
        %v2252 = vsel %vm879, %v2247, %v2251
        %v2254 = vshrl.u32 %v2091, 16
        %v2256 = vshll.u32 %v2091, 16
        %v2258 = vrot.slane %v2256, 1
        %v2259 = vor.u32 %v2254, %v2258
        %v2261 = vshll.u32 %v2092, 16
        %v2263 = vrot.slane %v2261, 1
        %v2264 = vsel %vm879, %v2259, %v2263
        %v2266 = vshrl.u32 %v2093, 16
        %v2268 = vshll.u32 %v2093, 16
        %v2270 = vrot.slane %v2268, 1
        %v2271 = vor.u32 %v2266, %v2270
        %v2273 = vshll.u32 %v2094, 16
        %v2275 = vrot.slane %v2273, 1
        %v2276 = vsel %vm879, %v2271, %v2275
        %v2278 = vshrl.u32 %v2095, 16
        %v2280 = vshll.u32 %v2095, 16
        %v2282 = vrot.slane %v2280, 1
        %v2283 = vor.u32 %v2278, %v2282
        %v2285 = vshll.u32 %v2096, 16
        %v2287 = vrot.slane %v2285, 1
        %v2288 = vsel %vm879, %v2283, %v2287
        %2305 = vst.msk [vmem:[#allocation3 + $0x20] sm:$0xff] %vm319, %v2108
        %2306 = vst.msk [vmem:[#allocation3 + $0x48] sm:$0xff] %vm319, %v2120
        %2307 = vst.msk [vmem:[#allocation3 + $0x70] sm:$0xff] %vm319, %v2132
        %2308 = vst.msk [vmem:[#allocation3 + $0x98] sm:$0xff] %vm319, %v2144
        %2309 = vst.msk [vmem:[#allocation3 + $0xc0] sm:$0xff] %vm319, %v2156
        %2310 = vst.msk [vmem:[#allocation3 + $0xe8] sm:$0xff] %vm319, %v2168
        %2311 = vst.msk [vmem:[#allocation3 + $0x110] sm:$0xff] %vm319, %v2180
        %2312 = vst.msk [vmem:[#allocation3 + $0x138] sm:$0xff] %vm319, %v2192
        %2313 = vst.msk [vmem:[#allocation3 + $0x160] sm:$0xff] %vm319, %v2204
        %2314 = vst.msk [vmem:[#allocation3 + $0x188] sm:$0xff] %vm319, %v2216
        %2315 = vst.msk [vmem:[#allocation3 + $0x1b0] sm:$0xff] %vm319, %v2228
        %2316 = vst.msk [vmem:[#allocation3 + $0x1d8] sm:$0xff] %vm319, %v2240
        %2317 = vst.msk [vmem:[#allocation3 + $0x200] sm:$0xff] %vm319, %v2252
        %2318 = vst.msk [vmem:[#allocation3 + $0x228] sm:$0xff] %vm319, %v2264
        %2319 = vst.msk [vmem:[#allocation3 + $0x250] sm:$0xff] %vm319, %v2276
        %2320 = vst.msk [vmem:[#allocation3 + $0x278] sm:$0xff] %vm319, %v2288
        %v2321 = vld [vmem:[#allocation3] sm:$0xff]
        %v2322 = vld [vmem:[#allocation3 + $0x8] sm:$0xff]
        %v2323 = vld [vmem:[#allocation3 + $0x10] sm:$0xff]
        %v2324 = vld [vmem:[#allocation3 + $0x18] sm:$0xff]
        %v2325 = vld [vmem:[#allocation3 + $0x20] sm:$0xff]
        %v2326 = vld [vmem:[#allocation3 + $0x28] sm:$0xff]
        %v2327 = vld [vmem:[#allocation3 + $0x30] sm:$0xff]
        %v2328 = vld [vmem:[#allocation3 + $0x38] sm:$0xff]
        %v2329 = vld [vmem:[#allocation3 + $0x40] sm:$0xff]
        %v2330 = vld [vmem:[#allocation3 + $0x48] sm:$0xff]
        %v2331 = vld [vmem:[#allocation3 + $0x50] sm:$0xff]
        %v2332 = vld [vmem:[#allocation3 + $0x58] sm:$0xff]
        %v2333 = vld [vmem:[#allocation3 + $0x60] sm:$0xff]
        %v2334 = vld [vmem:[#allocation3 + $0x68] sm:$0xff]
        %v2335 = vld [vmem:[#allocation3 + $0x70] sm:$0xff]
        %v2336 = vld [vmem:[#allocation3 + $0x78] sm:$0xff]
        %v2337 = vld [vmem:[#allocation3 + $0x80] sm:$0xff]
        %v2338 = vld [vmem:[#allocation3 + $0x88] sm:$0xff]
        %v2339 = vld [vmem:[#allocation3 + $0x90] sm:$0xff]
        %v2340 = vld [vmem:[#allocation3 + $0x98] sm:$0xff]
        %v2341 = vld [vmem:[#allocation3 + $0xa0] sm:$0xff]
        %v2342 = vld [vmem:[#allocation3 + $0xa8] sm:$0xff]
        %v2343 = vld [vmem:[#allocation3 + $0xb0] sm:$0xff]
        %v2344 = vld [vmem:[#allocation3 + $0xb8] sm:$0xff]
        %v2345 = vld [vmem:[#allocation3 + $0xc0] sm:$0xff]
        %v2346 = vld [vmem:[#allocation3 + $0xc8] sm:$0xff]
        %v2347 = vld [vmem:[#allocation3 + $0xd0] sm:$0xff]
        %v2348 = vld [vmem:[#allocation3 + $0xd8] sm:$0xff]
        %v2349 = vld [vmem:[#allocation3 + $0xe0] sm:$0xff]
        %v2350 = vld [vmem:[#allocation3 + $0xe8] sm:$0xff]
        %v2351 = vld [vmem:[#allocation3 + $0xf0] sm:$0xff]
        %v2352 = vld [vmem:[#allocation3 + $0xf8] sm:$0xff]
        %v2353 = vld [vmem:[#allocation3 + $0x100] sm:$0xff]
        %v2354 = vld [vmem:[#allocation3 + $0x108] sm:$0xff]
        %v2355 = vld [vmem:[#allocation3 + $0x110] sm:$0xff]
        %v2356 = vld [vmem:[#allocation3 + $0x118] sm:$0xff]
        %v2357 = vld [vmem:[#allocation3 + $0x120] sm:$0xff]
        %v2358 = vld [vmem:[#allocation3 + $0x128] sm:$0xff]
        %v2359 = vld [vmem:[#allocation3 + $0x130] sm:$0xff]
        %v2360 = vld [vmem:[#allocation3 + $0x138] sm:$0xff]
        %v2361 = vld [vmem:[#allocation3 + $0x140] sm:$0xff]
        %v2362 = vld [vmem:[#allocation3 + $0x148] sm:$0xff]
        %v2363 = vld [vmem:[#allocation3 + $0x150] sm:$0xff]
        %v2364 = vld [vmem:[#allocation3 + $0x158] sm:$0xff]
        %v2365 = vld [vmem:[#allocation3 + $0x160] sm:$0xff]
        %v2366 = vld [vmem:[#allocation3 + $0x168] sm:$0xff]
        %v2367 = vld [vmem:[#allocation3 + $0x170] sm:$0xff]
        %v2368 = vld [vmem:[#allocation3 + $0x178] sm:$0xff]
        %v2369 = vld [vmem:[#allocation3 + $0x180] sm:$0xff]
        %v2370 = vld [vmem:[#allocation3 + $0x188] sm:$0xff]
        %v2371 = vld [vmem:[#allocation3 + $0x190] sm:$0xff]
        %v2372 = vld [vmem:[#allocation3 + $0x198] sm:$0xff]
        %v2373 = vld [vmem:[#allocation3 + $0x1a0] sm:$0xff]
        %v2374 = vld [vmem:[#allocation3 + $0x1a8] sm:$0xff]
        %v2375 = vld [vmem:[#allocation3 + $0x1b0] sm:$0xff]
        %v2376 = vld [vmem:[#allocation3 + $0x1b8] sm:$0xff]
        %v2377 = vld [vmem:[#allocation3 + $0x1c0] sm:$0xff]
        %v2378 = vld [vmem:[#allocation3 + $0x1c8] sm:$0xff]
        %v2379 = vld [vmem:[#allocation3 + $0x1d0] sm:$0xff]
        %v2380 = vld [vmem:[#allocation3 + $0x1d8] sm:$0xff]
        %v2381 = vld [vmem:[#allocation3 + $0x1e0] sm:$0xff]
        %v2382 = vld [vmem:[#allocation3 + $0x1e8] sm:$0xff]
        %v2383 = vld [vmem:[#allocation3 + $0x1f0] sm:$0xff]
        %v2384 = vld [vmem:[#allocation3 + $0x1f8] sm:$0xff]
        %v2385 = vld [vmem:[#allocation3 + $0x200] sm:$0xff]
        %v2386 = vld [vmem:[#allocation3 + $0x208] sm:$0xff]
        %v2387 = vld [vmem:[#allocation3 + $0x210] sm:$0xff]
        %v2388 = vld [vmem:[#allocation3 + $0x218] sm:$0xff]
        %v2389 = vld [vmem:[#allocation3 + $0x220] sm:$0xff]
        %v2390 = vld [vmem:[#allocation3 + $0x228] sm:$0xff]
        %v2391 = vld [vmem:[#allocation3 + $0x230] sm:$0xff]
        %v2392 = vld [vmem:[#allocation3 + $0x238] sm:$0xff]
        %v2393 = vld [vmem:[#allocation3 + $0x240] sm:$0xff]
        %v2394 = vld [vmem:[#allocation3 + $0x248] sm:$0xff]
        %v2395 = vld [vmem:[#allocation3 + $0x250] sm:$0xff]
        %v2396 = vld [vmem:[#allocation3 + $0x258] sm:$0xff]
        %v2397 = vld [vmem:[#allocation3 + $0x260] sm:$0xff]
        %v2398 = vld [vmem:[#allocation3 + $0x268] sm:$0xff]
        %v2399 = vld [vmem:[#allocation3 + $0x270] sm:$0xff]
        %v2400 = vld [vmem:[#allocation3 + $0x278] sm:$0xff]
        %v2401 = vld [vmem:[%s1] sm:$0xf]
        %v2402 = vld [vmem:[%s1 + $0x4] sm:$0xf]
        %v2403 = vld [vmem:[%s1 + $0x8] sm:$0xf]
        %v2404 = vld [vmem:[%s1 + $0xc] sm:$0xf]
        %v2405 = vld [vmem:[%s1 + $0x10] sm:$0xf]
        %v2406 = vld [vmem:[%s1 + $0x14] sm:$0xf]
        %v2407 = vld [vmem:[%s1 + $0x18] sm:$0xf]
        %v2408 = vld [vmem:[%s1 + $0x1c] sm:$0xf]
        %v2409 = vld [vmem:[%s1 + $0x20] sm:$0xf]
        %v2410 = vld [vmem:[%s1 + $0x24] sm:$0xf]
        %v2411 = vld [vmem:[%s1 + $0x28] sm:$0xf]
        %v2412 = vld [vmem:[%s1 + $0x2c] sm:$0xf]
        %v2413 = vld [vmem:[%s1 + $0x30] sm:$0xf]
        %v2414 = vld [vmem:[%s1 + $0x34] sm:$0xf]
        %v2415 = vld [vmem:[%s1 + $0x38] sm:$0xf]
        %v2416 = vld [vmem:[%s1 + $0x3c] sm:$0xf]
        %v2417 = vld [vmem:[%s1 + $0x40] sm:$0xf]
        %v2418 = vld [vmem:[%s1 + $0x44] sm:$0xf]
        %v2419 = vld [vmem:[%s1 + $0x48] sm:$0xf]
        %v2420 = vld [vmem:[%s1 + $0x4c] sm:$0xf]
        %v2421 = vld [vmem:[%s1 + $0x50] sm:$0xf]
        %v2422 = vld [vmem:[%s1 + $0x54] sm:$0xf]
        %v2423 = vld [vmem:[%s1 + $0x58] sm:$0xf]
        %v2424 = vld [vmem:[%s1 + $0x5c] sm:$0xf]
        %v2425 = vld [vmem:[%s1 + $0x60] sm:$0xf]
        %v2426 = vld [vmem:[%s1 + $0x64] sm:$0xf]
        %v2427 = vld [vmem:[%s1 + $0x68] sm:$0xf]
        %v2428 = vld [vmem:[%s1 + $0x6c] sm:$0xf]
        %v2429 = vld [vmem:[%s1 + $0x70] sm:$0xf]
        %v2430 = vld [vmem:[%s1 + $0x74] sm:$0xf]
        %v2431 = vld [vmem:[%s1 + $0x78] sm:$0xf]
        %v2432 = vld [vmem:[%s1 + $0x7c] sm:$0xf]
        %v2433 = vld [vmem:[%s1 + $0x80] sm:$0xf]
        %v2434 = vld [vmem:[%s1 + $0x84] sm:$0xf]
        %v2435 = vld [vmem:[%s1 + $0x88] sm:$0xf]
        %v2436 = vld [vmem:[%s1 + $0x8c] sm:$0xf]
        %v2437 = vld [vmem:[%s1 + $0x90] sm:$0xf]
        %v2438 = vld [vmem:[%s1 + $0x94] sm:$0xf]
        %v2439 = vld [vmem:[%s1 + $0x98] sm:$0xf]
        %v2440 = vld [vmem:[%s1 + $0x9c] sm:$0xf]
        %v2441 = vld [vmem:[%s1 + $0xa0] sm:$0xf]
        %v2442 = vld [vmem:[%s1 + $0xa4] sm:$0xf]
        %v2443 = vld [vmem:[%s1 + $0xa8] sm:$0xf]
        %v2444 = vld [vmem:[%s1 + $0xac] sm:$0xf]
        %v2445 = vld [vmem:[%s1 + $0xb0] sm:$0xf]
        %v2446 = vld [vmem:[%s1 + $0xb4] sm:$0xf]
        %v2447 = vld [vmem:[%s1 + $0xb8] sm:$0xf]
        %v2448 = vld [vmem:[%s1 + $0xbc] sm:$0xf]
        %v2449 = vld [vmem:[%s1 + $0xc0] sm:$0xf]
        %v2450 = vld [vmem:[%s1 + $0xc4] sm:$0xf]
        %v2451 = vld [vmem:[%s1 + $0xc8] sm:$0xf]
        %v2452 = vld [vmem:[%s1 + $0xcc] sm:$0xf]
        %v2453 = vld [vmem:[%s1 + $0xd0] sm:$0xf]
        %v2454 = vld [vmem:[%s1 + $0xd4] sm:$0xf]
        %v2455 = vld [vmem:[%s1 + $0xd8] sm:$0xf]
        %v2456 = vld [vmem:[%s1 + $0xdc] sm:$0xf]
        %v2457 = vld [vmem:[%s1 + $0xe0] sm:$0xf]
        %v2458 = vld [vmem:[%s1 + $0xe4] sm:$0xf]
        %v2459 = vld [vmem:[%s1 + $0xe8] sm:$0xf]
        %v2460 = vld [vmem:[%s1 + $0xec] sm:$0xf]
        %v2461 = vld [vmem:[%s1 + $0xf0] sm:$0xf]
        %v2462 = vld [vmem:[%s1 + $0xf4] sm:$0xf]
        %v2463 = vld [vmem:[%s1 + $0xf8] sm:$0xf]
        %v2464 = vld [vmem:[%s1 + $0xfc] sm:$0xf]
        %v2465 = vld [vmem:[%s1 + $0x100] sm:$0xf]
        %v2466 = vld [vmem:[%s1 + $0x104] sm:$0xf]
        %v2467 = vld [vmem:[%s1 + $0x108] sm:$0xf]
        %v2468 = vld [vmem:[%s1 + $0x10c] sm:$0xf]
        %v2469 = vld [vmem:[%s1 + $0x110] sm:$0xf]
        %v2470 = vld [vmem:[%s1 + $0x114] sm:$0xf]
        %v2471 = vld [vmem:[%s1 + $0x118] sm:$0xf]
        %v2472 = vld [vmem:[%s1 + $0x11c] sm:$0xf]
        %v2473 = vld [vmem:[%s2] sm:$0x1]
        %v2475 = vlaneseq
        %v2476 = vshrl.u32 %v2475, 7
        %v2477 = vsub.s32 0, %v2476
        %v2478 = vrot.slane %v2473, %v2477
        %v2552 = vunpack.c.l.b16 %v2401
        %v2553 = vunpack.c.l.b16 %v2402
        %v2554 = vunpack.c.l.b16 %v2403
        %v2555 = vunpack.c.l.b16 %v2404
        %v2556 = vunpack.c.l.b16 %v2405
        %v2557 = vunpack.c.l.b16 %v2406
        %v2558 = vunpack.c.l.b16 %v2407
        %v2559 = vunpack.c.l.b16 %v2408
        %v2560 = vunpack.c.l.b16 %v2409
        %v2561 = vunpack.c.l.b16 %v2410
        %v2562 = vunpack.c.l.b16 %v2411
        %v2563 = vunpack.c.l.b16 %v2412
        %v2564 = vunpack.c.l.b16 %v2413
        %v2565 = vunpack.c.l.b16 %v2414
        %v2566 = vunpack.c.l.b16 %v2415
        %v2567 = vunpack.c.l.b16 %v2416
        %v2568 = vunpack.c.l.b16 %v2417
        %v2569 = vunpack.c.l.b16 %v2418
        %v2570 = vunpack.c.l.b16 %v2419
        %v2571 = vunpack.c.l.b16 %v2420
        %v2572 = vunpack.c.l.b16 %v2421
        %v2573 = vunpack.c.l.b16 %v2422
        %v2574 = vunpack.c.l.b16 %v2423
        %v2575 = vunpack.c.l.b16 %v2424
        %v2576 = vunpack.c.l.b16 %v2425
        %v2577 = vunpack.c.l.b16 %v2426
        %v2578 = vunpack.c.l.b16 %v2427
        %v2579 = vunpack.c.l.b16 %v2428
        %v2580 = vunpack.c.l.b16 %v2429
        %v2581 = vunpack.c.l.b16 %v2430
        %v2582 = vunpack.c.l.b16 %v2431
        %v2583 = vunpack.c.l.b16 %v2432
        %v2584 = vunpack.c.l.b16 %v2433
        %v2585 = vunpack.c.l.b16 %v2434
        %v2586 = vunpack.c.l.b16 %v2435
        %v2587 = vunpack.c.l.b16 %v2436
        %v2588 = vunpack.c.l.b16 %v2437
        %v2589 = vunpack.c.l.b16 %v2438
        %v2590 = vunpack.c.l.b16 %v2439
        %v2591 = vunpack.c.l.b16 %v2440
        %v2592 = vunpack.c.l.b16 %v2441
        %v2593 = vunpack.c.l.b16 %v2442
        %v2594 = vunpack.c.l.b16 %v2443
        %v2595 = vunpack.c.l.b16 %v2444
        %v2596 = vunpack.c.l.b16 %v2445
        %v2597 = vunpack.c.l.b16 %v2446
        %v2598 = vunpack.c.l.b16 %v2447
        %v2599 = vunpack.c.l.b16 %v2448
        %v2600 = vunpack.c.l.b16 %v2449
        %v2601 = vunpack.c.l.b16 %v2450
        %v2602 = vunpack.c.l.b16 %v2451
        %v2603 = vunpack.c.l.b16 %v2452
        %v2604 = vunpack.c.l.b16 %v2453
        %v2605 = vunpack.c.l.b16 %v2454
        %v2606 = vunpack.c.l.b16 %v2455
        %v2607 = vunpack.c.l.b16 %v2456
        %v2608 = vunpack.c.l.b16 %v2457
        %v2609 = vunpack.c.l.b16 %v2458
        %v2610 = vunpack.c.l.b16 %v2459
        %v2611 = vunpack.c.l.b16 %v2460
        %v2612 = vunpack.c.l.b16 %v2461
        %v2613 = vunpack.c.l.b16 %v2462
        %v2614 = vunpack.c.l.b16 %v2463
        %v2615 = vunpack.c.l.b16 %v2464
        %v2616 = vunpack.c.l.b16 %v2465
        %v2617 = vunpack.c.l.b16 %v2466
        %v2618 = vunpack.c.l.b16 %v2467
        %v2619 = vunpack.c.l.b16 %v2468
        %v2620 = vunpack.c.l.b16 %v2469
        %v2621 = vunpack.c.l.b16 %v2470
        %v2622 = vunpack.c.l.b16 %v2471
        %v2623 = vunpack.c.l.b16 %v2472
        %v2624 = vpack.c.b16 %v2553, %v2552
        %v2625 = vpack.c.b16 %v2555, %v2554
        %v2626 = vpack.c.b16 %v2557, %v2556
        %v2627 = vpack.c.b16 %v2559, %v2558
        %v2628 = vpack.c.b16 %v2561, %v2560
        %v2629 = vpack.c.b16 %v2563, %v2562
        %v2630 = vpack.c.b16 %v2565, %v2564
        %v2631 = vpack.c.b16 %v2567, %v2566
        %v2632 = vpack.c.b16 %v2569, %v2568
        %v2633 = vpack.c.b16 %v2571, %v2570
        %v2634 = vpack.c.b16 %v2573, %v2572
        %v2635 = vpack.c.b16 %v2575, %v2574
        %v2636 = vpack.c.b16 %v2577, %v2576
        %v2637 = vpack.c.b16 %v2579, %v2578
        %v2638 = vpack.c.b16 %v2581, %v2580
        %v2639 = vpack.c.b16 %v2583, %v2582
        %v2640 = vpack.c.b16 %v2585, %v2584
        %v2641 = vpack.c.b16 %v2587, %v2586
        %v2642 = vpack.c.b16 %v2589, %v2588
        %v2643 = vpack.c.b16 %v2591, %v2590
        %v2644 = vpack.c.b16 %v2593, %v2592
        %v2645 = vpack.c.b16 %v2595, %v2594
        %v2646 = vpack.c.b16 %v2597, %v2596
        %v2647 = vpack.c.b16 %v2599, %v2598
        %v2648 = vpack.c.b16 %v2601, %v2600
        %v2649 = vpack.c.b16 %v2603, %v2602
        %v2650 = vpack.c.b16 %v2605, %v2604
        %v2651 = vpack.c.b16 %v2607, %v2606
        %v2652 = vpack.c.b16 %v2609, %v2608
        %v2653 = vpack.c.b16 %v2611, %v2610
        %v2654 = vpack.c.b16 %v2613, %v2612
        %v2655 = vpack.c.b16 %v2615, %v2614
        %v2656 = vpack.c.b16 %v2617, %v2616
        %v2657 = vpack.c.b16 %v2619, %v2618
        %v2658 = vpack.c.b16 %v2621, %v2620
        %v2659 = vpack.c.b16 %v2623, %v2622
        %v2697 = vsel %vm319, %v2325, 0
        %v2700 = vsel %vm319, %v2330, 0
        %v2703 = vsel %vm319, %v2335, 0
        %v2706 = vsel %vm319, %v2340, 0
        %v2709 = vsel %vm319, %v2345, 0
        %v2712 = vsel %vm319, %v2350, 0
        %v2715 = vsel %vm319, %v2355, 0
        %v2718 = vsel %vm319, %v2360, 0
        %v2721 = vsel %vm319, %v2365, 0
        %v2724 = vsel %vm319, %v2370, 0
        %v2727 = vsel %vm319, %v2375, 0
        %v2730 = vsel %vm319, %v2380, 0
        %v2733 = vsel %vm319, %v2385, 0
        %v2736 = vsel %vm319, %v2390, 0
        %v2739 = vsel %vm319, %v2395, 0
        %v2742 = vsel %vm319, %v2400, 0
        %2744 = vmatprep.subr.bf16.mxu0 0
        %2745 = vmatpush1.bf16.msra.mxu0 %v2624
        %2746 = vmatprep.subr.bf16.mxu0 0
        %2747 = vmatpush1.bf16.msra.mxu0 %v2625
        %2748 = vmatprep.subr.bf16.mxu0 0
        %2749 = vmatpush1.bf16.msra.mxu0 %v2626
        %2750 = vmatprep.subr.bf16.mxu0 0
        %2751 = vmatpush1.bf16.msra.mxu0 %v2627
        %2752 = vmatprep.subr.bf16.mxu0 0
        %2753 = vmatpush1.bf16.msra.mxu0 %v2628
        %2754 = vmatprep.subr.bf16.mxu0 0
        %2755 = vmatpush1.bf16.msra.mxu0 %v2629
        %2756 = vmatprep.subr.bf16.mxu0 0
        %2757 = vmatpush1.bf16.msra.mxu0 %v2630
        %2758 = vmatprep.subr.bf16.mxu0 0
        %2759 = vmatpush1.bf16.msra.mxu0 %v2631
        %2760 = vmatprep.subr.bf16.mxu0 0
        %2761 = vmatpush1.bf16.msra.mxu0 %v2632
        %2762 = vmatprep.subr.bf16.mxu0 0
        %2763 = vmatpush1.bf16.msra.mxu0 %v2633
        %2764 = vmatprep.subr.bf16.mxu0 0
        %2765 = vmatpush1.bf16.msra.mxu0 %v2634
        %2766 = vmatprep.subr.bf16.mxu0 0
        %2767 = vmatpush1.bf16.msra.mxu0 %v2635
        %2768 = vmatprep.subr.bf16.mxu0 0
        %2769 = vmatpush1.bf16.msra.mxu0 %v2636
        %2770 = vmatprep.subr.bf16.mxu0 0
        %2771 = vmatpush1.bf16.msra.mxu0 %v2637
        %2772 = vmatprep.subr.bf16.mxu0 0
        %2773 = vmatpush1.bf16.msra.mxu0 %v2638
        %2774 = vmatprep.subr.bf16.mxu0 0
        %2775 = vmatpush1.bf16.msra.mxu0 %v2639
        %2776 = vmatprep.mubr.bf16.mxu0 %v2322
        %2777 = vmatmul.mubr.bf16.gmra.mrb[0].mxu0 %v2321
        %v2778 = vpop.f32.mrb[0].mxu0
        %v2779 = vadd.f32 %v2478, %v2778
        %v2780 = vpop.f32.mrb[0].mxu0
        %v2781 = vpop.f32.mrb[0].mxu0
        %v2782 = vadd.f32 %v2478, %v2781
        %v2783 = vpop.f32.mrb[0].mxu0
        %2784 = vmatprep.mubr.bf16.mxu0 %v2327
        %2785 = vmatmul.mubr.bf16.gmra.mrb[0].mxu0 %v2326
        %v2786 = vpop.f32.mrb[0].mxu0
        %v2787 = vadd.f32 %v2478, %v2786
        %v2788 = vpop.f32.mrb[0].mxu0
        %v2789 = vpop.f32.mrb[0].mxu0
        %v2790 = vadd.f32 %v2478, %v2789
        %v2791 = vpop.f32.mrb[0].mxu0
        %2792 = vmatprep.mubr.bf16.mxu0 %v2332
        %2793 = vmatmul.mubr.bf16.gmra.mrb[0].mxu0 %v2331
        %v2794 = vpop.f32.mrb[0].mxu0
        %v2795 = vadd.f32 %v2478, %v2794
        %v2796 = vpop.f32.mrb[0].mxu0
        %v2797 = vpop.f32.mrb[0].mxu0
        %v2798 = vadd.f32 %v2478, %v2797
        %v2799 = vpop.f32.mrb[0].mxu0
        %2800 = vmatprep.mubr.bf16.mxu0 %v2337
        %2801 = vmatmul.mubr.bf16.gmra.mrb[0].mxu0 %v2336
        %v2802 = vpop.f32.mrb[0].mxu0
        %v2803 = vadd.f32 %v2478, %v2802
        %v2804 = vpop.f32.mrb[0].mxu0
        %v2805 = vpop.f32.mrb[0].mxu0
        %v2806 = vadd.f32 %v2478, %v2805
        %v2807 = vpop.f32.mrb[0].mxu0
        %2808 = vmatprep.mubr.bf16.mxu0 %v2342
        %2809 = vmatmul.mubr.bf16.gmra.mrb[0].mxu0 %v2341
        %v2810 = vpop.f32.mrb[0].mxu0
        %v2811 = vadd.f32 %v2478, %v2810
        %v2812 = vpop.f32.mrb[0].mxu0
        %v2813 = vpop.f32.mrb[0].mxu0
        %v2814 = vadd.f32 %v2478, %v2813
        %v2815 = vpop.f32.mrb[0].mxu0
        %2816 = vmatprep.mubr.bf16.mxu0 %v2347
        %2817 = vmatmul.mubr.bf16.gmra.mrb[0].mxu0 %v2346
        %v2818 = vpop.f32.mrb[0].mxu0
        %v2819 = vadd.f32 %v2478, %v2818
        %v2820 = vpop.f32.mrb[0].mxu0
        %v2821 = vpop.f32.mrb[0].mxu0
        %v2822 = vadd.f32 %v2478, %v2821
        %v2823 = vpop.f32.mrb[0].mxu0
        %2824 = vmatprep.mubr.bf16.mxu0 %v2352
        %2825 = vmatmul.mubr.bf16.gmra.mrb[0].mxu0 %v2351
        %v2826 = vpop.f32.mrb[0].mxu0
        %v2827 = vadd.f32 %v2478, %v2826
        %v2828 = vpop.f32.mrb[0].mxu0
        %v2829 = vpop.f32.mrb[0].mxu0
        %v2830 = vadd.f32 %v2478, %v2829
        %v2831 = vpop.f32.mrb[0].mxu0
        %2832 = vmatprep.mubr.bf16.mxu0 %v2357
        %2833 = vmatmul.mubr.bf16.gmra.mrb[0].mxu0 %v2356
        %v2834 = vpop.f32.mrb[0].mxu0
        %v2835 = vadd.f32 %v2478, %v2834
        %v2836 = vpop.f32.mrb[0].mxu0
        %v2837 = vpop.f32.mrb[0].mxu0
        %v2838 = vadd.f32 %v2478, %v2837
        %v2839 = vpop.f32.mrb[0].mxu0
        %2840 = vmatprep.mubr.bf16.mxu0 %v2362
        %2841 = vmatmul.mubr.bf16.gmra.mrb[0].mxu0 %v2361
        %v2842 = vpop.f32.mrb[0].mxu0
        %v2843 = vadd.f32 %v2478, %v2842
        %v2844 = vpop.f32.mrb[0].mxu0
        %v2845 = vpop.f32.mrb[0].mxu0
        %v2846 = vadd.f32 %v2478, %v2845
        %v2847 = vpop.f32.mrb[0].mxu0
        %2848 = vmatprep.mubr.bf16.mxu0 %v2367
        %2849 = vmatmul.mubr.bf16.gmra.mrb[0].mxu0 %v2366
        %v2850 = vpop.f32.mrb[0].mxu0
        %v2851 = vadd.f32 %v2478, %v2850
        %v2852 = vpop.f32.mrb[0].mxu0
        %v2853 = vpop.f32.mrb[0].mxu0
        %v2854 = vadd.f32 %v2478, %v2853
        %v2855 = vpop.f32.mrb[0].mxu0
        %2856 = vmatprep.mubr.bf16.mxu0 %v2372
        %2857 = vmatmul.mubr.bf16.gmra.mrb[0].mxu0 %v2371
        %v2858 = vpop.f32.mrb[0].mxu0
        %v2859 = vadd.f32 %v2478, %v2858
        %v2860 = vpop.f32.mrb[0].mxu0
        %v2861 = vpop.f32.mrb[0].mxu0
        %v2862 = vadd.f32 %v2478, %v2861
        %v2863 = vpop.f32.mrb[0].mxu0
        %2864 = vmatprep.mubr.bf16.mxu0 %v2377
        %2865 = vmatmul.mubr.bf16.gmra.mrb[0].mxu0 %v2376
        %v2866 = vpop.f32.mrb[0].mxu0
        %v2867 = vadd.f32 %v2478, %v2866
        %v2868 = vpop.f32.mrb[0].mxu0
        %v2869 = vpop.f32.mrb[0].mxu0
        %v2870 = vadd.f32 %v2478, %v2869
        %v2871 = vpop.f32.mrb[0].mxu0
        %2872 = vmatprep.mubr.bf16.mxu0 %v2382
        %2873 = vmatmul.mubr.bf16.gmra.mrb[0].mxu0 %v2381
        %v2874 = vpop.f32.mrb[0].mxu0
        %v2875 = vadd.f32 %v2478, %v2874
        %v2876 = vpop.f32.mrb[0].mxu0
        %v2877 = vpop.f32.mrb[0].mxu0
        %v2878 = vadd.f32 %v2478, %v2877
        %v2879 = vpop.f32.mrb[0].mxu0
        %2880 = vmatprep.mubr.bf16.mxu0 %v2387
        %2881 = vmatmul.mubr.bf16.gmra.mrb[0].mxu0 %v2386
        %v2882 = vpop.f32.mrb[0].mxu0
        %v2883 = vadd.f32 %v2478, %v2882
        %v2884 = vpop.f32.mrb[0].mxu0
        %v2885 = vpop.f32.mrb[0].mxu0
        %v2886 = vadd.f32 %v2478, %v2885
        %v2887 = vpop.f32.mrb[0].mxu0
        %2888 = vmatprep.mubr.bf16.mxu0 %v2392
        %2889 = vmatmul.mubr.bf16.gmra.mrb[0].mxu0 %v2391
        %v2890 = vpop.f32.mrb[0].mxu0
        %v2891 = vadd.f32 %v2478, %v2890
        %v2892 = vpop.f32.mrb[0].mxu0
        %v2893 = vpop.f32.mrb[0].mxu0
        %v2894 = vadd.f32 %v2478, %v2893
        %v2895 = vpop.f32.mrb[0].mxu0
        %2896 = vmatprep.mubr.bf16.mxu0 %v2397
        %2897 = vmatmul.mubr.bf16.gmra.mrb[0].mxu0 %v2396
        %v2898 = vpop.f32.mrb[0].mxu0
        %v2899 = vadd.f32 %v2478, %v2898
        %v2900 = vpop.f32.mrb[0].mxu0
        %v2901 = vpop.f32.mrb[0].mxu0
        %v2902 = vadd.f32 %v2478, %v2901
        %v2903 = vpop.f32.mrb[0].mxu0
        %2904 = vdwg.mxu0
        %2905 = vmatprep.subr.bf16.mxu0 0
        %2906 = vmatpush1.bf16.msra.mxu0 %v2640
        %2907 = vmatprep.subr.bf16.mxu0 0
        %2908 = vmatpush1.bf16.msra.mxu0 %v2641
        %2909 = vmatprep.subr.bf16.mxu0 0
        %2910 = vmatpush1.bf16.msra.mxu0 %v2642
        %2911 = vmatprep.subr.bf16.mxu0 0
        %2912 = vmatpush1.bf16.msra.mxu0 %v2643
        %2913 = vmatprep.subr.bf16.mxu0 0
        %2914 = vmatpush1.bf16.msra.mxu0 %v2644
        %2915 = vmatprep.subr.bf16.mxu0 0
        %2916 = vmatpush1.bf16.msra.mxu0 %v2645
        %2917 = vmatprep.subr.bf16.mxu0 0
        %2918 = vmatpush1.bf16.msra.mxu0 %v2646
        %2919 = vmatprep.subr.bf16.mxu0 0
        %2920 = vmatpush1.bf16.msra.mxu0 %v2647
        %2921 = vmatprep.subr.bf16.mxu0 0
        %2922 = vmatpush1.bf16.msra.mxu0 %v2648
        %2923 = vmatprep.subr.bf16.mxu0 0
        %2924 = vmatpush1.bf16.msra.mxu0 %v2649
        %2925 = vmatprep.subr.bf16.mxu0 0
        %2926 = vmatpush1.bf16.msra.mxu0 %v2650
        %2927 = vmatprep.subr.bf16.mxu0 0
        %2928 = vmatpush1.bf16.msra.mxu0 %v2651
        %2929 = vmatprep.subr.bf16.mxu0 0
        %2930 = vmatpush1.bf16.msra.mxu0 %v2652
        %2931 = vmatprep.subr.bf16.mxu0 0
        %2932 = vmatpush1.bf16.msra.mxu0 %v2653
        %2933 = vmatprep.subr.bf16.mxu0 0
        %2934 = vmatpush1.bf16.msra.mxu0 %v2654
        %2935 = vmatprep.subr.bf16.mxu0 0
        %2936 = vmatpush1.bf16.msra.mxu0 %v2655
        %2937 = vmatprep.mubr.bf16.mxu0 %v2324
        %2938 = vmatmul.mubr.bf16.gmra.mrb[0].mxu0 %v2323
        %v2939 = vpop.f32.mrb[0].mxu0
        %v2940 = vadd.f32 %v2779, %v2939
        %v2941 = vpop.f32.mrb[0].mxu0
        %v2942 = vpop.f32.mrb[0].mxu0
        %v2943 = vadd.f32 %v2782, %v2942
        %v2944 = vpop.f32.mrb[0].mxu0
        %2945 = vmatprep.mubr.bf16.mxu0 %v2329
        %2946 = vmatmul.mubr.bf16.gmra.mrb[0].mxu0 %v2328
        %v2947 = vpop.f32.mrb[0].mxu0
        %v2948 = vadd.f32 %v2787, %v2947
        %v2949 = vpop.f32.mrb[0].mxu0
        %v2950 = vpop.f32.mrb[0].mxu0
        %v2951 = vadd.f32 %v2790, %v2950
        %v2952 = vpop.f32.mrb[0].mxu0
        %2953 = vmatprep.mubr.bf16.mxu0 %v2334
        %2954 = vmatmul.mubr.bf16.gmra.mrb[0].mxu0 %v2333
        %v2955 = vpop.f32.mrb[0].mxu0
        %v2956 = vadd.f32 %v2795, %v2955
        %v2957 = vpop.f32.mrb[0].mxu0
        %v2958 = vpop.f32.mrb[0].mxu0
        %v2959 = vadd.f32 %v2798, %v2958
        %v2960 = vpop.f32.mrb[0].mxu0
        %2961 = vmatprep.mubr.bf16.mxu0 %v2339
        %2962 = vmatmul.mubr.bf16.gmra.mrb[0].mxu0 %v2338
        %v2963 = vpop.f32.mrb[0].mxu0
        %v2964 = vadd.f32 %v2803, %v2963
        %v2965 = vpop.f32.mrb[0].mxu0
        %v2966 = vpop.f32.mrb[0].mxu0
        %v2967 = vadd.f32 %v2806, %v2966
        %v2968 = vpop.f32.mrb[0].mxu0
        %2969 = vmatprep.mubr.bf16.mxu0 %v2344
        %2970 = vmatmul.mubr.bf16.gmra.mrb[0].mxu0 %v2343
        %v2971 = vpop.f32.mrb[0].mxu0
        %v2972 = vadd.f32 %v2811, %v2971
        %v2973 = vpop.f32.mrb[0].mxu0
        %v2974 = vpop.f32.mrb[0].mxu0
        %v2975 = vadd.f32 %v2814, %v2974
        %v2976 = vpop.f32.mrb[0].mxu0
        %2977 = vmatprep.mubr.bf16.mxu0 %v2349
        %2978 = vmatmul.mubr.bf16.gmra.mrb[0].mxu0 %v2348
        %v2979 = vpop.f32.mrb[0].mxu0
        %v2980 = vadd.f32 %v2819, %v2979
        %v2981 = vpop.f32.mrb[0].mxu0
        %v2982 = vpop.f32.mrb[0].mxu0
        %v2983 = vadd.f32 %v2822, %v2982
        %v2984 = vpop.f32.mrb[0].mxu0
        %2985 = vmatprep.mubr.bf16.mxu0 %v2354
        %2986 = vmatmul.mubr.bf16.gmra.mrb[0].mxu0 %v2353
        %v2987 = vpop.f32.mrb[0].mxu0
        %v2988 = vadd.f32 %v2827, %v2987
        %v2989 = vpop.f32.mrb[0].mxu0
        %v2990 = vpop.f32.mrb[0].mxu0
        %v2991 = vadd.f32 %v2830, %v2990
        %v2992 = vpop.f32.mrb[0].mxu0
        %2993 = vmatprep.mubr.bf16.mxu0 %v2359
        %2994 = vmatmul.mubr.bf16.gmra.mrb[0].mxu0 %v2358
        %v2995 = vpop.f32.mrb[0].mxu0
        %v2996 = vadd.f32 %v2835, %v2995
        %v2997 = vpop.f32.mrb[0].mxu0
        %v2998 = vpop.f32.mrb[0].mxu0
        %v2999 = vadd.f32 %v2838, %v2998
        %v3000 = vpop.f32.mrb[0].mxu0
        %3001 = vmatprep.mubr.bf16.mxu0 %v2364
        %3002 = vmatmul.mubr.bf16.gmra.mrb[0].mxu0 %v2363
        %v3003 = vpop.f32.mrb[0].mxu0
        %v3004 = vadd.f32 %v2843, %v3003
        %v3005 = vpop.f32.mrb[0].mxu0
        %v3006 = vpop.f32.mrb[0].mxu0
        %v3007 = vadd.f32 %v2846, %v3006
        %v3008 = vpop.f32.mrb[0].mxu0
        %3009 = vmatprep.mubr.bf16.mxu0 %v2369
        %3010 = vmatmul.mubr.bf16.gmra.mrb[0].mxu0 %v2368
        %v3011 = vpop.f32.mrb[0].mxu0
        %v3012 = vadd.f32 %v2851, %v3011
        %v3013 = vpop.f32.mrb[0].mxu0
        %v3014 = vpop.f32.mrb[0].mxu0
        %v3015 = vadd.f32 %v2854, %v3014
        %v3016 = vpop.f32.mrb[0].mxu0
        %3017 = vmatprep.mubr.bf16.mxu0 %v2374
        %3018 = vmatmul.mubr.bf16.gmra.mrb[0].mxu0 %v2373
        %v3019 = vpop.f32.mrb[0].mxu0
        %v3020 = vadd.f32 %v2859, %v3019
        %v3021 = vpop.f32.mrb[0].mxu0
        %v3022 = vpop.f32.mrb[0].mxu0
        %v3023 = vadd.f32 %v2862, %v3022
        %v3024 = vpop.f32.mrb[0].mxu0
        %3025 = vmatprep.mubr.bf16.mxu0 %v2379
        %3026 = vmatmul.mubr.bf16.gmra.mrb[0].mxu0 %v2378
        %v3027 = vpop.f32.mrb[0].mxu0
        %v3028 = vadd.f32 %v2867, %v3027
        %v3029 = vpop.f32.mrb[0].mxu0
        %v3030 = vpop.f32.mrb[0].mxu0
        %v3031 = vadd.f32 %v2870, %v3030
        %v3032 = vpop.f32.mrb[0].mxu0
        %3033 = vmatprep.mubr.bf16.mxu0 %v2384
        %3034 = vmatmul.mubr.bf16.gmra.mrb[0].mxu0 %v2383
        %v3035 = vpop.f32.mrb[0].mxu0
        %v3036 = vadd.f32 %v2875, %v3035
        %v3037 = vpop.f32.mrb[0].mxu0
        %v3038 = vpop.f32.mrb[0].mxu0
        %v3039 = vadd.f32 %v2878, %v3038
        %v3040 = vpop.f32.mrb[0].mxu0
        %3041 = vmatprep.mubr.bf16.mxu0 %v2389
        %3042 = vmatmul.mubr.bf16.gmra.mrb[0].mxu0 %v2388
        %v3043 = vpop.f32.mrb[0].mxu0
        %v3044 = vadd.f32 %v2883, %v3043
        %v3045 = vpop.f32.mrb[0].mxu0
        %v3046 = vpop.f32.mrb[0].mxu0
        %v3047 = vadd.f32 %v2886, %v3046
        %v3048 = vpop.f32.mrb[0].mxu0
        %3049 = vmatprep.mubr.bf16.mxu0 %v2394
        %3050 = vmatmul.mubr.bf16.gmra.mrb[0].mxu0 %v2393
        %v3051 = vpop.f32.mrb[0].mxu0
        %v3052 = vadd.f32 %v2891, %v3051
        %v3053 = vpop.f32.mrb[0].mxu0
        %v3054 = vpop.f32.mrb[0].mxu0
        %v3055 = vadd.f32 %v2894, %v3054
        %v3056 = vpop.f32.mrb[0].mxu0
        %3057 = vmatprep.mubr.bf16.mxu0 %v2399
        %3058 = vmatmul.mubr.bf16.gmra.mrb[0].mxu0 %v2398
        %v3059 = vpop.f32.mrb[0].mxu0
        %v3060 = vadd.f32 %v2899, %v3059
        %v3061 = vpop.f32.mrb[0].mxu0
        %v3062 = vpop.f32.mrb[0].mxu0
        %v3063 = vadd.f32 %v2902, %v3062
        %v3064 = vpop.f32.mrb[0].mxu0
        %3065 = vdwg.mxu0
        %3066 = vmatprep.subr.bf16.mxu0 0
        %3067 = vmatpush1.bf16.msra.mxu0 %v2656
        %3068 = vmatprep.subr.bf16.mxu0 0
        %3069 = vmatpush1.bf16.msra.mxu0 %v2657
        %3070 = vmatprep.subr.bf16.mxu0 0
        %3071 = vmatpush1.bf16.msra.mxu0 %v2658
        %3072 = vmatprep.subr.bf16.mxu0 0
        %3073 = vmatpush1.bf16.msra.mxu0 %v2659
        %3074 = vmatprep.subr.bf16.mxu0 0
        %3075 = vmatpush1.bf16.msra.mxu0 0
        %3076 = vmatprep.subr.bf16.mxu0 0
        %3077 = vmatpush1.bf16.msra.mxu0 0
        %3078 = vmatprep.subr.bf16.mxu0 0
        %3079 = vmatpush1.bf16.msra.mxu0 0
        %3080 = vmatprep.subr.bf16.mxu0 0
        %3081 = vmatpush1.bf16.msra.mxu0 0
        %3082 = vmatprep.subr.bf16.mxu0 0
        %3083 = vmatpush1.bf16.msra.mxu0 0
        %3084 = vmatprep.subr.bf16.mxu0 0
        %3085 = vmatpush1.bf16.msra.mxu0 0
        %3086 = vmatprep.subr.bf16.mxu0 0
        %3087 = vmatpush1.bf16.msra.mxu0 0
        %3088 = vmatprep.subr.bf16.mxu0 0
        %3089 = vmatpush1.bf16.msra.mxu0 0
        %3090 = vmatprep.subr.bf16.mxu0 0
        %3091 = vmatpush1.bf16.msra.mxu0 0
        %3092 = vmatprep.subr.bf16.mxu0 0
        %3093 = vmatpush1.bf16.msra.mxu0 0
        %3094 = vmatprep.subr.bf16.mxu0 0
        %3095 = vmatpush1.bf16.msra.mxu0 0
        %3096 = vmatprep.subr.bf16.mxu0 0
        %3097 = vmatpush1.bf16.msra.mxu0 0
        %3098 = vmatprep.mubr.bf16.mxu0 0
        %3099 = vmatmul.mubr.bf16.gmra.mrb[0].mxu0 %v2697
        %v3100 = vpop.f32.mrb[0].mxu0
        %v3101 = vadd.f32 %v2940, %v3100
        %v3102 = vpop.f32.mrb[0].mxu0
        %v3103 = vpop.f32.mrb[0].mxu0
        %v3104 = vadd.f32 %v2943, %v3103
        %v3105 = vpop.f32.mrb[0].mxu0
        %3106 = vmatprep.mubr.bf16.mxu0 0
        %3107 = vmatmul.mubr.bf16.gmra.mrb[0].mxu0 %v2700
        %v3108 = vpop.f32.mrb[0].mxu0
        %v3109 = vadd.f32 %v2948, %v3108
        %v3110 = vpop.f32.mrb[0].mxu0
        %v3111 = vpop.f32.mrb[0].mxu0
        %v3112 = vadd.f32 %v2951, %v3111
        %v3113 = vpop.f32.mrb[0].mxu0
        %3114 = vmatprep.mubr.bf16.mxu0 0
        %3115 = vmatmul.mubr.bf16.gmra.mrb[0].mxu0 %v2703
        %v3116 = vpop.f32.mrb[0].mxu0
        %v3117 = vadd.f32 %v2956, %v3116
        %v3118 = vpop.f32.mrb[0].mxu0
        %v3119 = vpop.f32.mrb[0].mxu0
        %v3120 = vadd.f32 %v2959, %v3119
        %v3121 = vpop.f32.mrb[0].mxu0
        %3122 = vmatprep.mubr.bf16.mxu0 0
        %3123 = vmatmul.mubr.bf16.gmra.mrb[0].mxu0 %v2706
        %v3124 = vpop.f32.mrb[0].mxu0
        %v3125 = vadd.f32 %v2964, %v3124
        %v3126 = vpop.f32.mrb[0].mxu0
        %v3127 = vpop.f32.mrb[0].mxu0
        %v3128 = vadd.f32 %v2967, %v3127
        %v3129 = vpop.f32.mrb[0].mxu0
        %3130 = vmatprep.mubr.bf16.mxu0 0
        %3131 = vmatmul.mubr.bf16.gmra.mrb[0].mxu0 %v2709
        %v3132 = vpop.f32.mrb[0].mxu0
        %v3133 = vadd.f32 %v2972, %v3132
        %v3134 = vpop.f32.mrb[0].mxu0
        %v3135 = vpop.f32.mrb[0].mxu0
        %v3136 = vadd.f32 %v2975, %v3135
        %v3137 = vpop.f32.mrb[0].mxu0
        %3138 = vmatprep.mubr.bf16.mxu0 0
        %3139 = vmatmul.mubr.bf16.gmra.mrb[0].mxu0 %v2712
        %v3140 = vpop.f32.mrb[0].mxu0
        %v3141 = vadd.f32 %v2980, %v3140
        %v3142 = vpop.f32.mrb[0].mxu0
        %v3143 = vpop.f32.mrb[0].mxu0
        %v3144 = vadd.f32 %v2983, %v3143
        %v3145 = vpop.f32.mrb[0].mxu0
        %3146 = vmatprep.mubr.bf16.mxu0 0
        %3147 = vmatmul.mubr.bf16.gmra.mrb[0].mxu0 %v2715
        %v3148 = vpop.f32.mrb[0].mxu0
        %v3149 = vadd.f32 %v2988, %v3148
        %v3150 = vpop.f32.mrb[0].mxu0
        %v3151 = vpop.f32.mrb[0].mxu0
        %v3152 = vadd.f32 %v2991, %v3151
        %v3153 = vpop.f32.mrb[0].mxu0
        %3154 = vmatprep.mubr.bf16.mxu0 0
        %3155 = vmatmul.mubr.bf16.gmra.mrb[0].mxu0 %v2718
        %v3156 = vpop.f32.mrb[0].mxu0
        %v3157 = vadd.f32 %v2996, %v3156
        %v3158 = vpop.f32.mrb[0].mxu0
        %v3159 = vpop.f32.mrb[0].mxu0
        %v3160 = vadd.f32 %v2999, %v3159
        %v3161 = vpop.f32.mrb[0].mxu0
        %3162 = vmatprep.mubr.bf16.mxu0 0
        %3163 = vmatmul.mubr.bf16.gmra.mrb[0].mxu0 %v2721
        %v3164 = vpop.f32.mrb[0].mxu0
        %v3165 = vadd.f32 %v3004, %v3164
        %v3166 = vpop.f32.mrb[0].mxu0
        %v3167 = vpop.f32.mrb[0].mxu0
        %v3168 = vadd.f32 %v3007, %v3167
        %v3169 = vpop.f32.mrb[0].mxu0
        %3170 = vmatprep.mubr.bf16.mxu0 0
        %3171 = vmatmul.mubr.bf16.gmra.mrb[0].mxu0 %v2724
        %v3172 = vpop.f32.mrb[0].mxu0
        %v3173 = vadd.f32 %v3012, %v3172
        %v3174 = vpop.f32.mrb[0].mxu0
        %v3175 = vpop.f32.mrb[0].mxu0
        %v3176 = vadd.f32 %v3015, %v3175
        %v3177 = vpop.f32.mrb[0].mxu0
        %3178 = vmatprep.mubr.bf16.mxu0 0
        %3179 = vmatmul.mubr.bf16.gmra.mrb[0].mxu0 %v2727
        %v3180 = vpop.f32.mrb[0].mxu0
        %v3181 = vadd.f32 %v3020, %v3180
        %v3182 = vpop.f32.mrb[0].mxu0
        %v3183 = vpop.f32.mrb[0].mxu0
        %v3184 = vadd.f32 %v3023, %v3183
        %v3185 = vpop.f32.mrb[0].mxu0
        %3186 = vmatprep.mubr.bf16.mxu0 0
        %3187 = vmatmul.mubr.bf16.gmra.mrb[0].mxu0 %v2730
        %v3188 = vpop.f32.mrb[0].mxu0
        %v3189 = vadd.f32 %v3028, %v3188
        %v3190 = vpop.f32.mrb[0].mxu0
        %v3191 = vpop.f32.mrb[0].mxu0
        %v3192 = vadd.f32 %v3031, %v3191
        %v3193 = vpop.f32.mrb[0].mxu0
        %3194 = vmatprep.mubr.bf16.mxu0 0
        %3195 = vmatmul.mubr.bf16.gmra.mrb[0].mxu0 %v2733
        %v3196 = vpop.f32.mrb[0].mxu0
        %v3197 = vadd.f32 %v3036, %v3196
        %v3198 = vpop.f32.mrb[0].mxu0
        %v3199 = vpop.f32.mrb[0].mxu0
        %v3200 = vadd.f32 %v3039, %v3199
        %v3201 = vpop.f32.mrb[0].mxu0
        %3202 = vmatprep.mubr.bf16.mxu0 0
        %3203 = vmatmul.mubr.bf16.gmra.mrb[0].mxu0 %v2736
        %v3204 = vpop.f32.mrb[0].mxu0
        %v3205 = vadd.f32 %v3044, %v3204
        %v3206 = vpop.f32.mrb[0].mxu0
        %v3207 = vpop.f32.mrb[0].mxu0
        %v3208 = vadd.f32 %v3047, %v3207
        %v3209 = vpop.f32.mrb[0].mxu0
        %3210 = vmatprep.mubr.bf16.mxu0 0
        %3211 = vmatmul.mubr.bf16.gmra.mrb[0].mxu0 %v2739
        %v3212 = vpop.f32.mrb[0].mxu0
        %v3213 = vadd.f32 %v3052, %v3212
        %v3214 = vpop.f32.mrb[0].mxu0
        %v3215 = vpop.f32.mrb[0].mxu0
        %v3216 = vadd.f32 %v3055, %v3215
        %v3217 = vpop.f32.mrb[0].mxu0
        %3218 = vmatprep.mubr.bf16.mxu0 0
        %3219 = vmatmul.mubr.bf16.gmra.mrb[0].mxu0 %v2742
        %v3220 = vpop.f32.mrb[0].mxu0
        %v3221 = vadd.f32 %v3060, %v3220
        %v3222 = vpop.f32.mrb[0].mxu0
        %v3223 = vpop.f32.mrb[0].mxu0
        %v3224 = vadd.f32 %v3063, %v3223
        %v3225 = vpop.f32.mrb[0].mxu0
        %3226 = vdwg.mxu0
        %s3227 = sld [smem:[#allocation4]]
        %vm3228 = vcmp.ge.f32.partialorder %v3101, 0.0
        %vm3229 = vcmp.ge.f32.partialorder %v3104, 0.0
        %vm3230 = vcmp.ge.f32.partialorder %v3109, 0.0
        %vm3231 = vcmp.ge.f32.partialorder %v3112, 0.0
        %vm3232 = vcmp.ge.f32.partialorder %v3117, 0.0
        %vm3233 = vcmp.ge.f32.partialorder %v3120, 0.0
        %vm3234 = vcmp.ge.f32.partialorder %v3125, 0.0
        %vm3235 = vcmp.ge.f32.partialorder %v3128, 0.0
        %vm3236 = vcmp.ge.f32.partialorder %v3133, 0.0
        %vm3237 = vcmp.ge.f32.partialorder %v3136, 0.0
        %vm3238 = vcmp.ge.f32.partialorder %v3141, 0.0
        %vm3239 = vcmp.ge.f32.partialorder %v3144, 0.0
        %vm3240 = vcmp.ge.f32.partialorder %v3149, 0.0
        %vm3241 = vcmp.ge.f32.partialorder %v3152, 0.0
        %vm3242 = vcmp.ge.f32.partialorder %v3157, 0.0
        %vm3243 = vcmp.ge.f32.partialorder %v3160, 0.0
        %vm3244 = vcmp.ge.f32.partialorder %v3165, 0.0
        %vm3245 = vcmp.ge.f32.partialorder %v3168, 0.0
        %vm3246 = vcmp.ge.f32.partialorder %v3173, 0.0
        %vm3247 = vcmp.ge.f32.partialorder %v3176, 0.0
        %vm3248 = vcmp.ge.f32.partialorder %v3181, 0.0
        %vm3249 = vcmp.ge.f32.partialorder %v3184, 0.0
        %vm3250 = vcmp.ge.f32.partialorder %v3189, 0.0
        %vm3251 = vcmp.ge.f32.partialorder %v3192, 0.0
        %vm3252 = vcmp.ge.f32.partialorder %v3197, 0.0
        %vm3253 = vcmp.ge.f32.partialorder %v3200, 0.0
        %vm3254 = vcmp.ge.f32.partialorder %v3205, 0.0
        %vm3255 = vcmp.ge.f32.partialorder %v3208, 0.0
        %vm3256 = vcmp.ge.f32.partialorder %v3213, 0.0
        %vm3257 = vcmp.ge.f32.partialorder %v3216, 0.0
        %vm3258 = vcmp.ge.f32.partialorder %v3221, 0.0
        %vm3259 = vcmp.ge.f32.partialorder %v3224, 0.0
        %v3260 = vstv %s3227
        %v3261 = vmul.f32 %v3260, %v3101
        %v3262 = vmul.f32 %v3260, %v3104
        %v3263 = vmul.f32 %v3260, %v3109
        %v3264 = vmul.f32 %v3260, %v3112
        %v3265 = vmul.f32 %v3260, %v3117
        %v3266 = vmul.f32 %v3260, %v3120
        %v3267 = vmul.f32 %v3260, %v3125
        %v3268 = vmul.f32 %v3260, %v3128
        %v3269 = vmul.f32 %v3260, %v3133
        %v3270 = vmul.f32 %v3260, %v3136
        %v3271 = vmul.f32 %v3260, %v3141
        %v3272 = vmul.f32 %v3260, %v3144
        %v3273 = vmul.f32 %v3260, %v3149
        %v3274 = vmul.f32 %v3260, %v3152
        %v3275 = vmul.f32 %v3260, %v3157
        %v3276 = vmul.f32 %v3260, %v3160
        %v3277 = vmul.f32 %v3260, %v3165
        %v3278 = vmul.f32 %v3260, %v3168
        %v3279 = vmul.f32 %v3260, %v3173
        %v3280 = vmul.f32 %v3260, %v3176
        %v3281 = vmul.f32 %v3260, %v3181
        %v3282 = vmul.f32 %v3260, %v3184
        %v3283 = vmul.f32 %v3260, %v3189
        %v3284 = vmul.f32 %v3260, %v3192
        %v3285 = vmul.f32 %v3260, %v3197
        %v3286 = vmul.f32 %v3260, %v3200
        %v3287 = vmul.f32 %v3260, %v3205
        %v3288 = vmul.f32 %v3260, %v3208
        %v3289 = vmul.f32 %v3260, %v3213
        %v3290 = vmul.f32 %v3260, %v3216
        %v3291 = vmul.f32 %v3260, %v3221
        %v3292 = vmul.f32 %v3260, %v3224
        %v3293 = vsel %vm3228, %v3101, %v3261
        %v3294 = vsel %vm3229, %v3104, %v3262
        %v3295 = vsel %vm3230, %v3109, %v3263
        %v3296 = vsel %vm3231, %v3112, %v3264
        %v3297 = vsel %vm3232, %v3117, %v3265
        %v3298 = vsel %vm3233, %v3120, %v3266
        %v3299 = vsel %vm3234, %v3125, %v3267
        %v3300 = vsel %vm3235, %v3128, %v3268
        %v3301 = vsel %vm3236, %v3133, %v3269
        %v3302 = vsel %vm3237, %v3136, %v3270
        %v3303 = vsel %vm3238, %v3141, %v3271
        %v3304 = vsel %vm3239, %v3144, %v3272
        %v3305 = vsel %vm3240, %v3149, %v3273
        %v3306 = vsel %vm3241, %v3152, %v3274
        %v3307 = vsel %vm3242, %v3157, %v3275
        %v3308 = vsel %vm3243, %v3160, %v3276
        %v3309 = vsel %vm3244, %v3165, %v3277
        %v3310 = vsel %vm3245, %v3168, %v3278
        %v3311 = vsel %vm3246, %v3173, %v3279
        %v3312 = vsel %vm3247, %v3176, %v3280
        %v3313 = vsel %vm3248, %v3181, %v3281
        %v3314 = vsel %vm3249, %v3184, %v3282
        %v3315 = vsel %vm3250, %v3189, %v3283
        %v3316 = vsel %vm3251, %v3192, %v3284
        %v3317 = vsel %vm3252, %v3197, %v3285
        %v3318 = vsel %vm3253, %v3200, %v3286
        %v3319 = vsel %vm3254, %v3205, %v3287
        %v3320 = vsel %vm3255, %v3208, %v3288
        %v3321 = vsel %vm3256, %v3213, %v3289
        %v3322 = vsel %vm3257, %v3216, %v3290
        %v3323 = vsel %vm3258, %v3221, %v3291
        %v3324 = vsel %vm3259, %v3224, %v3292
        %v3325 = vpack.c.bf16 %v3294, %v3293
        %v3326 = vpack.c.bf16 %v3296, %v3295
        %v3327 = vpack.c.bf16 %v3298, %v3297
        %v3328 = vpack.c.bf16 %v3300, %v3299
        %v3329 = vpack.c.bf16 %v3302, %v3301
        %v3330 = vpack.c.bf16 %v3304, %v3303
        %v3331 = vpack.c.bf16 %v3306, %v3305
        %v3332 = vpack.c.bf16 %v3308, %v3307
        %v3333 = vpack.c.bf16 %v3310, %v3309
        %v3334 = vpack.c.bf16 %v3312, %v3311
        %v3335 = vpack.c.bf16 %v3314, %v3313
        %v3336 = vpack.c.bf16 %v3316, %v3315
        %v3337 = vpack.c.bf16 %v3318, %v3317
        %v3338 = vpack.c.bf16 %v3320, %v3319
        %v3339 = vpack.c.bf16 %v3322, %v3321
        %v3340 = vpack.c.bf16 %v3324, %v3323
        %3341 = vst.msk [vmem:[%s327 + $0x8] sm:$0xff] %vm319, %v3325
        %3342 = vst.msk [vmem:[%s327 + $0x20] sm:$0xff] %vm319, %v3326
        %3343 = vst.msk [vmem:[%s327 + $0x38] sm:$0xff] %vm319, %v3327
        %3344 = vst.msk [vmem:[%s327 + $0x50] sm:$0xff] %vm319, %v3328
        %3345 = vst.msk [vmem:[%s327 + $0x68] sm:$0xff] %vm319, %v3329
        %3346 = vst.msk [vmem:[%s327 + $0x80] sm:$0xff] %vm319, %v3330
        %3347 = vst.msk [vmem:[%s327 + $0x98] sm:$0xff] %vm319, %v3331
        %3348 = vst.msk [vmem:[%s327 + $0xb0] sm:$0xff] %vm319, %v3332
        %3349 = vst.msk [vmem:[%s327 + $0xc8] sm:$0xff] %vm319, %v3333
        %3350 = vst.msk [vmem:[%s327 + $0xe0] sm:$0xff] %vm319, %v3334
        %3351 = vst.msk [vmem:[%s327 + $0xf8] sm:$0xff] %vm319, %v3335
        %3352 = vst.msk [vmem:[%s327 + $0x110] sm:$0xff] %vm319, %v3336
        %3353 = vst.msk [vmem:[%s327 + $0x128] sm:$0xff] %vm319, %v3337
        %3354 = vst.msk [vmem:[%s327 + $0x140] sm:$0xff] %vm319, %v3338
        %3355 = vst.msk [vmem:[%s327 + $0x158] sm:$0xff] %vm319, %v3339
        %3356 = vst.msk [vmem:[%s327 + $0x170] sm:$0xff] %vm319, %v3340
        %v3357 = vld [vmem:[#allocation2] sm:$0x80]
        %v3358 = vld [vmem:[#allocation2 + $0x8] sm:$0xff]
        %v3359 = vld [vmem:[#allocation2 + $0x18] sm:$0x80]
        %v3360 = vld [vmem:[#allocation2 + $0x20] sm:$0xff]
        %v3361 = vld [vmem:[#allocation2 + $0x30] sm:$0x80]
        %v3362 = vld [vmem:[#allocation2 + $0x38] sm:$0xff]
        %v3363 = vld [vmem:[#allocation2 + $0x48] sm:$0x80]
        %v3364 = vld [vmem:[#allocation2 + $0x50] sm:$0xff]
        %v3365 = vld [vmem:[#allocation2 + $0x60] sm:$0x80]
        %v3366 = vld [vmem:[#allocation2 + $0x68] sm:$0xff]
        %v3367 = vld [vmem:[#allocation2 + $0x78] sm:$0x80]
        %v3368 = vld [vmem:[#allocation2 + $0x80] sm:$0xff]
        %v3369 = vld [vmem:[#allocation2 + $0x90] sm:$0x80]
        %v3370 = vld [vmem:[#allocation2 + $0x98] sm:$0xff]
        %v3371 = vld [vmem:[#allocation2 + $0xa8] sm:$0x80]
        %v3372 = vld [vmem:[#allocation2 + $0xb0] sm:$0xff]
        %v3373 = vld [vmem:[#allocation2 + $0xc0] sm:$0x80]
        %v3374 = vld [vmem:[#allocation2 + $0xc8] sm:$0xff]
        %v3375 = vld [vmem:[#allocation2 + $0xd8] sm:$0x80]
        %v3376 = vld [vmem:[#allocation2 + $0xe0] sm:$0xff]
        %v3377 = vld [vmem:[#allocation2 + $0xf0] sm:$0x80]
        %v3378 = vld [vmem:[#allocation2 + $0xf8] sm:$0xff]
        %v3379 = vld [vmem:[#allocation2 + $0x108] sm:$0x80]
        %v3380 = vld [vmem:[#allocation2 + $0x110] sm:$0xff]
        %v3381 = vld [vmem:[#allocation2 + $0x120] sm:$0x80]
        %v3382 = vld [vmem:[#allocation2 + $0x128] sm:$0xff]
        %v3383 = vld [vmem:[#allocation2 + $0x138] sm:$0x80]
        %v3384 = vld [vmem:[#allocation2 + $0x140] sm:$0xff]
        %v3385 = vld [vmem:[#allocation2 + $0x150] sm:$0x80]
        %v3386 = vld [vmem:[#allocation2 + $0x158] sm:$0xff]
        %v3387 = vld [vmem:[#allocation2 + $0x168] sm:$0x80]
        %v3388 = vld [vmem:[#allocation2 + $0x170] sm:$0xff]
        %v3390 = vshrl.u32 %v3357, 16
        %v3392 = vrot.slane %v3390, 7
        %v3394 = vshrl.u32 %v3358, 16
        %v3396 = vrot.slane %v3394, 7
        %v3397 = vshll.u32 %v3358, 16
        %v3399 = vor.u32 %v3396, %v3397
        %v3400 = vsel %vm380, %v3392, %v3399
        %v3402 = vshrl.u32 %v3359, 16
        %v3404 = vrot.slane %v3402, 7
        %v3406 = vshrl.u32 %v3360, 16
        %v3408 = vrot.slane %v3406, 7
        %v3409 = vshll.u32 %v3360, 16
        %v3411 = vor.u32 %v3408, %v3409
        %v3412 = vsel %vm380, %v3404, %v3411
        %v3414 = vshrl.u32 %v3361, 16
        %v3416 = vrot.slane %v3414, 7
        %v3418 = vshrl.u32 %v3362, 16
        %v3420 = vrot.slane %v3418, 7
        %v3421 = vshll.u32 %v3362, 16
        %v3423 = vor.u32 %v3420, %v3421
        %v3424 = vsel %vm380, %v3416, %v3423
        %v3426 = vshrl.u32 %v3363, 16
        %v3428 = vrot.slane %v3426, 7
        %v3430 = vshrl.u32 %v3364, 16
        %v3432 = vrot.slane %v3430, 7
        %v3433 = vshll.u32 %v3364, 16
        %v3435 = vor.u32 %v3432, %v3433
        %v3436 = vsel %vm380, %v3428, %v3435
        %v3438 = vshrl.u32 %v3365, 16
        %v3440 = vrot.slane %v3438, 7
        %v3442 = vshrl.u32 %v3366, 16
        %v3444 = vrot.slane %v3442, 7
        %v3445 = vshll.u32 %v3366, 16
        %v3447 = vor.u32 %v3444, %v3445
        %v3448 = vsel %vm380, %v3440, %v3447
        %v3450 = vshrl.u32 %v3367, 16
        %v3452 = vrot.slane %v3450, 7
        %v3454 = vshrl.u32 %v3368, 16
        %v3456 = vrot.slane %v3454, 7
        %v3457 = vshll.u32 %v3368, 16
        %v3459 = vor.u32 %v3456, %v3457
        %v3460 = vsel %vm380, %v3452, %v3459
        %v3462 = vshrl.u32 %v3369, 16
        %v3464 = vrot.slane %v3462, 7
        %v3466 = vshrl.u32 %v3370, 16
        %v3468 = vrot.slane %v3466, 7
        %v3469 = vshll.u32 %v3370, 16
        %v3471 = vor.u32 %v3468, %v3469
        %v3472 = vsel %vm380, %v3464, %v3471
        %v3474 = vshrl.u32 %v3371, 16
        %v3476 = vrot.slane %v3474, 7
        %v3478 = vshrl.u32 %v3372, 16
        %v3480 = vrot.slane %v3478, 7
        %v3481 = vshll.u32 %v3372, 16
        %v3483 = vor.u32 %v3480, %v3481
        %v3484 = vsel %vm380, %v3476, %v3483
        %v3486 = vshrl.u32 %v3373, 16
        %v3488 = vrot.slane %v3486, 7
        %v3490 = vshrl.u32 %v3374, 16
        %v3492 = vrot.slane %v3490, 7
        %v3493 = vshll.u32 %v3374, 16
        %v3495 = vor.u32 %v3492, %v3493
        %v3496 = vsel %vm380, %v3488, %v3495
        %v3498 = vshrl.u32 %v3375, 16
        %v3500 = vrot.slane %v3498, 7
        %v3502 = vshrl.u32 %v3376, 16
        %v3504 = vrot.slane %v3502, 7
        %v3505 = vshll.u32 %v3376, 16
        %v3507 = vor.u32 %v3504, %v3505
        %v3508 = vsel %vm380, %v3500, %v3507
        %v3510 = vshrl.u32 %v3377, 16
        %v3512 = vrot.slane %v3510, 7
        %v3514 = vshrl.u32 %v3378, 16
        %v3516 = vrot.slane %v3514, 7
        %v3517 = vshll.u32 %v3378, 16
        %v3519 = vor.u32 %v3516, %v3517
        %v3520 = vsel %vm380, %v3512, %v3519
        %v3522 = vshrl.u32 %v3379, 16
        %v3524 = vrot.slane %v3522, 7
        %v3526 = vshrl.u32 %v3380, 16
        %v3528 = vrot.slane %v3526, 7
        %v3529 = vshll.u32 %v3380, 16
        %v3531 = vor.u32 %v3528, %v3529
        %v3532 = vsel %vm380, %v3524, %v3531
        %v3534 = vshrl.u32 %v3381, 16
        %v3536 = vrot.slane %v3534, 7
        %v3538 = vshrl.u32 %v3382, 16
        %v3540 = vrot.slane %v3538, 7
        %v3541 = vshll.u32 %v3382, 16
        %v3543 = vor.u32 %v3540, %v3541
        %v3544 = vsel %vm380, %v3536, %v3543
        %v3546 = vshrl.u32 %v3383, 16
        %v3548 = vrot.slane %v3546, 7
        %v3550 = vshrl.u32 %v3384, 16
        %v3552 = vrot.slane %v3550, 7
        %v3553 = vshll.u32 %v3384, 16
        %v3555 = vor.u32 %v3552, %v3553
        %v3556 = vsel %vm380, %v3548, %v3555
        %v3558 = vshrl.u32 %v3385, 16
        %v3560 = vrot.slane %v3558, 7
        %v3562 = vshrl.u32 %v3386, 16
        %v3564 = vrot.slane %v3562, 7
        %v3565 = vshll.u32 %v3386, 16
        %v3567 = vor.u32 %v3564, %v3565
        %v3568 = vsel %vm380, %v3560, %v3567
        %v3570 = vshrl.u32 %v3387, 16
        %v3572 = vrot.slane %v3570, 7
        %v3574 = vshrl.u32 %v3388, 16
        %v3576 = vrot.slane %v3574, 7
        %v3577 = vshll.u32 %v3388, 16
        %v3579 = vor.u32 %v3576, %v3577
        %v3580 = vsel %vm380, %v3572, %v3579
        %3597 = vst.msk [vmem:[#allocation3] sm:$0xff] %vm319, %v3400
        %3598 = vst.msk [vmem:[#allocation3 + $0x28] sm:$0xff] %vm319, %v3412
        %3599 = vst.msk [vmem:[#allocation3 + $0x50] sm:$0xff] %vm319, %v3424
        %3600 = vst.msk [vmem:[#allocation3 + $0x78] sm:$0xff] %vm319, %v3436
        %3601 = vst.msk [vmem:[#allocation3 + $0xa0] sm:$0xff] %vm319, %v3448
        %3602 = vst.msk [vmem:[#allocation3 + $0xc8] sm:$0xff] %vm319, %v3460
        %3603 = vst.msk [vmem:[#allocation3 + $0xf0] sm:$0xff] %vm319, %v3472
        %3604 = vst.msk [vmem:[#allocation3 + $0x118] sm:$0xff] %vm319, %v3484
        %3605 = vst.msk [vmem:[#allocation3 + $0x140] sm:$0xff] %vm319, %v3496
        %3606 = vst.msk [vmem:[#allocation3 + $0x168] sm:$0xff] %vm319, %v3508
        %3607 = vst.msk [vmem:[#allocation3 + $0x190] sm:$0xff] %vm319, %v3520
        %3608 = vst.msk [vmem:[#allocation3 + $0x1b8] sm:$0xff] %vm319, %v3532
        %3609 = vst.msk [vmem:[#allocation3 + $0x1e0] sm:$0xff] %vm319, %v3544
        %3610 = vst.msk [vmem:[#allocation3 + $0x208] sm:$0xff] %vm319, %v3556
        %3611 = vst.msk [vmem:[#allocation3 + $0x230] sm:$0xff] %vm319, %v3568
        %3612 = vst.msk [vmem:[#allocation3 + $0x258] sm:$0xff] %vm319, %v3580
        %v3613 = vld [vmem:[#allocation2 + $0x8] sm:$0xff]
        %v3614 = vld [vmem:[#allocation2 + $0x20] sm:$0xff]
        %v3615 = vld [vmem:[#allocation2 + $0x38] sm:$0xff]
        %v3616 = vld [vmem:[#allocation2 + $0x50] sm:$0xff]
        %v3617 = vld [vmem:[#allocation2 + $0x68] sm:$0xff]
        %v3618 = vld [vmem:[#allocation2 + $0x80] sm:$0xff]
        %v3619 = vld [vmem:[#allocation2 + $0x98] sm:$0xff]
        %v3620 = vld [vmem:[#allocation2 + $0xb0] sm:$0xff]
        %v3621 = vld [vmem:[#allocation2 + $0xc8] sm:$0xff]
        %v3622 = vld [vmem:[#allocation2 + $0xe0] sm:$0xff]
        %v3623 = vld [vmem:[#allocation2 + $0xf8] sm:$0xff]
        %v3624 = vld [vmem:[#allocation2 + $0x110] sm:$0xff]
        %v3625 = vld [vmem:[#allocation2 + $0x128] sm:$0xff]
        %v3626 = vld [vmem:[#allocation2 + $0x140] sm:$0xff]
        %v3627 = vld [vmem:[#allocation2 + $0x158] sm:$0xff]
        %v3628 = vld [vmem:[#allocation2 + $0x170] sm:$0xff]
        %3645 = vrot.lane.b32.xlu0 %v3613, 64
        %v3646 = vpop.permute.xlu0 %3645
        %3647 = vrot.lane.b32.xlu0 %v3614, 64
        %v3648 = vpop.permute.xlu0 %3647
        %3649 = vrot.lane.b32.xlu0 %v3615, 64
        %v3650 = vpop.permute.xlu0 %3649
        %3651 = vrot.lane.b32.xlu0 %v3616, 64
        %v3652 = vpop.permute.xlu0 %3651
        %3653 = vrot.lane.b32.xlu0 %v3617, 64
        %v3654 = vpop.permute.xlu0 %3653
        %3655 = vrot.lane.b32.xlu0 %v3618, 64
        %v3656 = vpop.permute.xlu0 %3655
        %3657 = vrot.lane.b32.xlu0 %v3619, 64
        %v3658 = vpop.permute.xlu0 %3657
        %3659 = vrot.lane.b32.xlu0 %v3620, 64
        %v3660 = vpop.permute.xlu0 %3659
        %3661 = vrot.lane.b32.xlu0 %v3621, 64
        %v3662 = vpop.permute.xlu0 %3661
        %3663 = vrot.lane.b32.xlu0 %v3622, 64
        %v3664 = vpop.permute.xlu0 %3663
        %3665 = vrot.lane.b32.xlu0 %v3623, 64
        %v3666 = vpop.permute.xlu0 %3665
        %3667 = vrot.lane.b32.xlu0 %v3624, 64
        %v3668 = vpop.permute.xlu0 %3667
        %3669 = vrot.lane.b32.xlu0 %v3625, 64
        %v3670 = vpop.permute.xlu0 %3669
        %3671 = vrot.lane.b32.xlu0 %v3626, 64
        %v3672 = vpop.permute.xlu0 %3671
        %3673 = vrot.lane.b32.xlu0 %v3627, 64
        %v3674 = vpop.permute.xlu0 %3673
        %3675 = vrot.lane.b32.xlu0 %v3628, 64
        %v3676 = vpop.permute.xlu0 %3675
        %3693 = vst.msk [vmem:[#allocation3] sm:$0xff] %vm830, %v3646
        %3694 = vst.msk [vmem:[#allocation3 + $0x28] sm:$0xff] %vm830, %v3648
        %3695 = vst.msk [vmem:[#allocation3 + $0x50] sm:$0xff] %vm830, %v3650
        %3696 = vst.msk [vmem:[#allocation3 + $0x78] sm:$0xff] %vm830, %v3652
        %3697 = vst.msk [vmem:[#allocation3 + $0xa0] sm:$0xff] %vm830, %v3654
        %3698 = vst.msk [vmem:[#allocation3 + $0xc8] sm:$0xff] %vm830, %v3656
        %3699 = vst.msk [vmem:[#allocation3 + $0xf0] sm:$0xff] %vm830, %v3658
        %3700 = vst.msk [vmem:[#allocation3 + $0x118] sm:$0xff] %vm830, %v3660
        %3701 = vst.msk [vmem:[#allocation3 + $0x140] sm:$0xff] %vm830, %v3662
        %3702 = vst.msk [vmem:[#allocation3 + $0x168] sm:$0xff] %vm830, %v3664
        %3703 = vst.msk [vmem:[#allocation3 + $0x190] sm:$0xff] %vm830, %v3666
        %3704 = vst.msk [vmem:[#allocation3 + $0x1b8] sm:$0xff] %vm830, %v3668
        %3705 = vst.msk [vmem:[#allocation3 + $0x1e0] sm:$0xff] %vm830, %v3670
        %3706 = vst.msk [vmem:[#allocation3 + $0x208] sm:$0xff] %vm830, %v3672
        %3707 = vst.msk [vmem:[#allocation3 + $0x230] sm:$0xff] %vm830, %v3674
        %3708 = vst.msk [vmem:[#allocation3 + $0x258] sm:$0xff] %vm830, %v3676
        %v3709 = vld [vmem:[#allocation2 + $0x8] sm:$0xff]
        %v3710 = vld [vmem:[#allocation2 + $0x10] sm:$0x1]
        %v3711 = vld [vmem:[#allocation2 + $0x20] sm:$0xff]
        %v3712 = vld [vmem:[#allocation2 + $0x28] sm:$0x1]
        %v3713 = vld [vmem:[#allocation2 + $0x38] sm:$0xff]
        %v3714 = vld [vmem:[#allocation2 + $0x40] sm:$0x1]
        %v3715 = vld [vmem:[#allocation2 + $0x50] sm:$0xff]
        %v3716 = vld [vmem:[#allocation2 + $0x58] sm:$0x1]
        %v3717 = vld [vmem:[#allocation2 + $0x68] sm:$0xff]
        %v3718 = vld [vmem:[#allocation2 + $0x70] sm:$0x1]
        %v3719 = vld [vmem:[#allocation2 + $0x80] sm:$0xff]
        %v3720 = vld [vmem:[#allocation2 + $0x88] sm:$0x1]
        %v3721 = vld [vmem:[#allocation2 + $0x98] sm:$0xff]
        %v3722 = vld [vmem:[#allocation2 + $0xa0] sm:$0x1]
        %v3723 = vld [vmem:[#allocation2 + $0xb0] sm:$0xff]
        %v3724 = vld [vmem:[#allocation2 + $0xb8] sm:$0x1]
        %v3725 = vld [vmem:[#allocation2 + $0xc8] sm:$0xff]
        %v3726 = vld [vmem:[#allocation2 + $0xd0] sm:$0x1]
        %v3727 = vld [vmem:[#allocation2 + $0xe0] sm:$0xff]
        %v3728 = vld [vmem:[#allocation2 + $0xe8] sm:$0x1]
        %v3729 = vld [vmem:[#allocation2 + $0xf8] sm:$0xff]
        %v3730 = vld [vmem:[#allocation2 + $0x100] sm:$0x1]
        %v3731 = vld [vmem:[#allocation2 + $0x110] sm:$0xff]
        %v3732 = vld [vmem:[#allocation2 + $0x118] sm:$0x1]
        %v3733 = vld [vmem:[#allocation2 + $0x128] sm:$0xff]
        %v3734 = vld [vmem:[#allocation2 + $0x130] sm:$0x1]
        %v3735 = vld [vmem:[#allocation2 + $0x140] sm:$0xff]
        %v3736 = vld [vmem:[#allocation2 + $0x148] sm:$0x1]
        %v3737 = vld [vmem:[#allocation2 + $0x158] sm:$0xff]
        %v3738 = vld [vmem:[#allocation2 + $0x160] sm:$0x1]
        %v3739 = vld [vmem:[#allocation2 + $0x170] sm:$0xff]
        %v3740 = vld [vmem:[#allocation2 + $0x178] sm:$0x1]
        %v3742 = vshrl.u32 %v3709, 16
        %v3744 = vshll.u32 %v3709, 16
        %v3746 = vrot.slane %v3744, 1
        %v3747 = vor.u32 %v3742, %v3746
        %v3749 = vshll.u32 %v3710, 16
        %v3751 = vrot.slane %v3749, 1
        %v3752 = vsel %vm879, %v3747, %v3751
        %v3754 = vshrl.u32 %v3711, 16
        %v3756 = vshll.u32 %v3711, 16
        %v3758 = vrot.slane %v3756, 1
        %v3759 = vor.u32 %v3754, %v3758
        %v3761 = vshll.u32 %v3712, 16
        %v3763 = vrot.slane %v3761, 1
        %v3764 = vsel %vm879, %v3759, %v3763
        %v3766 = vshrl.u32 %v3713, 16
        %v3768 = vshll.u32 %v3713, 16
        %v3770 = vrot.slane %v3768, 1
        %v3771 = vor.u32 %v3766, %v3770
        %v3773 = vshll.u32 %v3714, 16
        %v3775 = vrot.slane %v3773, 1
        %v3776 = vsel %vm879, %v3771, %v3775
        %v3778 = vshrl.u32 %v3715, 16
        %v3780 = vshll.u32 %v3715, 16
        %v3782 = vrot.slane %v3780, 1
        %v3783 = vor.u32 %v3778, %v3782
        %v3785 = vshll.u32 %v3716, 16
        %v3787 = vrot.slane %v3785, 1
        %v3788 = vsel %vm879, %v3783, %v3787
        %v3790 = vshrl.u32 %v3717, 16
        %v3792 = vshll.u32 %v3717, 16
        %v3794 = vrot.slane %v3792, 1
        %v3795 = vor.u32 %v3790, %v3794
        %v3797 = vshll.u32 %v3718, 16
        %v3799 = vrot.slane %v3797, 1
        %v3800 = vsel %vm879, %v3795, %v3799
        %v3802 = vshrl.u32 %v3719, 16
        %v3804 = vshll.u32 %v3719, 16
        %v3806 = vrot.slane %v3804, 1
        %v3807 = vor.u32 %v3802, %v3806
        %v3809 = vshll.u32 %v3720, 16
        %v3811 = vrot.slane %v3809, 1
        %v3812 = vsel %vm879, %v3807, %v3811
        %v3814 = vshrl.u32 %v3721, 16
        %v3816 = vshll.u32 %v3721, 16
        %v3818 = vrot.slane %v3816, 1
        %v3819 = vor.u32 %v3814, %v3818
        %v3821 = vshll.u32 %v3722, 16
        %v3823 = vrot.slane %v3821, 1
        %v3824 = vsel %vm879, %v3819, %v3823
        %v3826 = vshrl.u32 %v3723, 16
        %v3828 = vshll.u32 %v3723, 16
        %v3830 = vrot.slane %v3828, 1
        %v3831 = vor.u32 %v3826, %v3830
        %v3833 = vshll.u32 %v3724, 16
        %v3835 = vrot.slane %v3833, 1
        %v3836 = vsel %vm879, %v3831, %v3835
        %v3838 = vshrl.u32 %v3725, 16
        %v3840 = vshll.u32 %v3725, 16
        %v3842 = vrot.slane %v3840, 1
        %v3843 = vor.u32 %v3838, %v3842
        %v3845 = vshll.u32 %v3726, 16
        %v3847 = vrot.slane %v3845, 1
        %v3848 = vsel %vm879, %v3843, %v3847
        %v3850 = vshrl.u32 %v3727, 16
        %v3852 = vshll.u32 %v3727, 16
        %v3854 = vrot.slane %v3852, 1
        %v3855 = vor.u32 %v3850, %v3854
        %v3857 = vshll.u32 %v3728, 16
        %v3859 = vrot.slane %v3857, 1
        %v3860 = vsel %vm879, %v3855, %v3859
        %v3862 = vshrl.u32 %v3729, 16
        %v3864 = vshll.u32 %v3729, 16
        %v3866 = vrot.slane %v3864, 1
        %v3867 = vor.u32 %v3862, %v3866
        %v3869 = vshll.u32 %v3730, 16
        %v3871 = vrot.slane %v3869, 1
        %v3872 = vsel %vm879, %v3867, %v3871
        %v3874 = vshrl.u32 %v3731, 16
        %v3876 = vshll.u32 %v3731, 16
        %v3878 = vrot.slane %v3876, 1
        %v3879 = vor.u32 %v3874, %v3878
        %v3881 = vshll.u32 %v3732, 16
        %v3883 = vrot.slane %v3881, 1
        %v3884 = vsel %vm879, %v3879, %v3883
        %v3886 = vshrl.u32 %v3733, 16
        %v3888 = vshll.u32 %v3733, 16
        %v3890 = vrot.slane %v3888, 1
        %v3891 = vor.u32 %v3886, %v3890
        %v3893 = vshll.u32 %v3734, 16
        %v3895 = vrot.slane %v3893, 1
        %v3896 = vsel %vm879, %v3891, %v3895
        %v3898 = vshrl.u32 %v3735, 16
        %v3900 = vshll.u32 %v3735, 16
        %v3902 = vrot.slane %v3900, 1
        %v3903 = vor.u32 %v3898, %v3902
        %v3905 = vshll.u32 %v3736, 16
        %v3907 = vrot.slane %v3905, 1
        %v3908 = vsel %vm879, %v3903, %v3907
        %v3910 = vshrl.u32 %v3737, 16
        %v3912 = vshll.u32 %v3737, 16
        %v3914 = vrot.slane %v3912, 1
        %v3915 = vor.u32 %v3910, %v3914
        %v3917 = vshll.u32 %v3738, 16
        %v3919 = vrot.slane %v3917, 1
        %v3920 = vsel %vm879, %v3915, %v3919
        %v3922 = vshrl.u32 %v3739, 16
        %v3924 = vshll.u32 %v3739, 16
        %v3926 = vrot.slane %v3924, 1
        %v3927 = vor.u32 %v3922, %v3926
        %v3929 = vshll.u32 %v3740, 16
        %v3931 = vrot.slane %v3929, 1
        %v3932 = vsel %vm879, %v3927, %v3931
        %3949 = vst.msk [vmem:[#allocation3 + $0x8] sm:$0xff] %vm319, %v3752
        %3950 = vst.msk [vmem:[#allocation3 + $0x30] sm:$0xff] %vm319, %v3764
        %3951 = vst.msk [vmem:[#allocation3 + $0x58] sm:$0xff] %vm319, %v3776
        %3952 = vst.msk [vmem:[#allocation3 + $0x80] sm:$0xff] %vm319, %v3788
        %3953 = vst.msk [vmem:[#allocation3 + $0xa8] sm:$0xff] %vm319, %v3800
        %3954 = vst.msk [vmem:[#allocation3 + $0xd0] sm:$0xff] %vm319, %v3812
        %3955 = vst.msk [vmem:[#allocation3 + $0xf8] sm:$0xff] %vm319, %v3824
        %3956 = vst.msk [vmem:[#allocation3 + $0x120] sm:$0xff] %vm319, %v3836
        %3957 = vst.msk [vmem:[#allocation3 + $0x148] sm:$0xff] %vm319, %v3848
        %3958 = vst.msk [vmem:[#allocation3 + $0x170] sm:$0xff] %vm319, %v3860
        %3959 = vst.msk [vmem:[#allocation3 + $0x198] sm:$0xff] %vm319, %v3872
        %3960 = vst.msk [vmem:[#allocation3 + $0x1c0] sm:$0xff] %vm319, %v3884
        %3961 = vst.msk [vmem:[#allocation3 + $0x1e8] sm:$0xff] %vm319, %v3896
        %3962 = vst.msk [vmem:[#allocation3 + $0x210] sm:$0xff] %vm319, %v3908
        %3963 = vst.msk [vmem:[#allocation3 + $0x238] sm:$0xff] %vm319, %v3920
        %3964 = vst.msk [vmem:[#allocation3 + $0x260] sm:$0xff] %vm319, %v3932
        %v3965 = vld [vmem:[%s327] sm:$0x80]
        %v3966 = vld [vmem:[%s327 + $0x8] sm:$0xff]
        %v3967 = vld [vmem:[%s327 + $0x18] sm:$0x80]
        %v3968 = vld [vmem:[%s327 + $0x20] sm:$0xff]
        %v3969 = vld [vmem:[%s327 + $0x30] sm:$0x80]
        %v3970 = vld [vmem:[%s327 + $0x38] sm:$0xff]
        %v3971 = vld [vmem:[%s327 + $0x48] sm:$0x80]
        %v3972 = vld [vmem:[%s327 + $0x50] sm:$0xff]
        %v3973 = vld [vmem:[%s327 + $0x60] sm:$0x80]
        %v3974 = vld [vmem:[%s327 + $0x68] sm:$0xff]
        %v3975 = vld [vmem:[%s327 + $0x78] sm:$0x80]
        %v3976 = vld [vmem:[%s327 + $0x80] sm:$0xff]
        %v3977 = vld [vmem:[%s327 + $0x90] sm:$0x80]
        %v3978 = vld [vmem:[%s327 + $0x98] sm:$0xff]
        %v3979 = vld [vmem:[%s327 + $0xa8] sm:$0x80]
        %v3980 = vld [vmem:[%s327 + $0xb0] sm:$0xff]
        %v3981 = vld [vmem:[%s327 + $0xc0] sm:$0x80]
        %v3982 = vld [vmem:[%s327 + $0xc8] sm:$0xff]
        %v3983 = vld [vmem:[%s327 + $0xd8] sm:$0x80]
        %v3984 = vld [vmem:[%s327 + $0xe0] sm:$0xff]
        %v3985 = vld [vmem:[%s327 + $0xf0] sm:$0x80]
        %v3986 = vld [vmem:[%s327 + $0xf8] sm:$0xff]
        %v3987 = vld [vmem:[%s327 + $0x108] sm:$0x80]
        %v3988 = vld [vmem:[%s327 + $0x110] sm:$0xff]
        %v3989 = vld [vmem:[%s327 + $0x120] sm:$0x80]
        %v3990 = vld [vmem:[%s327 + $0x128] sm:$0xff]
        %v3991 = vld [vmem:[%s327 + $0x138] sm:$0x80]
        %v3992 = vld [vmem:[%s327 + $0x140] sm:$0xff]
        %v3993 = vld [vmem:[%s327 + $0x150] sm:$0x80]
        %v3994 = vld [vmem:[%s327 + $0x158] sm:$0xff]
        %v3995 = vld [vmem:[%s327 + $0x168] sm:$0x80]
        %v3996 = vld [vmem:[%s327 + $0x170] sm:$0xff]
        %v3998 = vshrl.u32 %v3965, 16
        %v4000 = vrot.slane %v3998, 7
        %v4002 = vshrl.u32 %v3966, 16
        %v4004 = vrot.slane %v4002, 7
        %v4005 = vshll.u32 %v3966, 16
        %v4007 = vor.u32 %v4004, %v4005
        %v4008 = vsel %vm380, %v4000, %v4007
        %v4010 = vshrl.u32 %v3967, 16
        %v4012 = vrot.slane %v4010, 7
        %v4014 = vshrl.u32 %v3968, 16
        %v4016 = vrot.slane %v4014, 7
        %v4017 = vshll.u32 %v3968, 16
        %v4019 = vor.u32 %v4016, %v4017
        %v4020 = vsel %vm380, %v4012, %v4019
        %v4022 = vshrl.u32 %v3969, 16
        %v4024 = vrot.slane %v4022, 7
        %v4026 = vshrl.u32 %v3970, 16
        %v4028 = vrot.slane %v4026, 7
        %v4029 = vshll.u32 %v3970, 16
        %v4031 = vor.u32 %v4028, %v4029
        %v4032 = vsel %vm380, %v4024, %v4031
        %v4034 = vshrl.u32 %v3971, 16
        %v4036 = vrot.slane %v4034, 7
        %v4038 = vshrl.u32 %v3972, 16
        %v4040 = vrot.slane %v4038, 7
        %v4041 = vshll.u32 %v3972, 16
        %v4043 = vor.u32 %v4040, %v4041
        %v4044 = vsel %vm380, %v4036, %v4043
        %v4046 = vshrl.u32 %v3973, 16
        %v4048 = vrot.slane %v4046, 7
        %v4050 = vshrl.u32 %v3974, 16
        %v4052 = vrot.slane %v4050, 7
        %v4053 = vshll.u32 %v3974, 16
        %v4055 = vor.u32 %v4052, %v4053
        %v4056 = vsel %vm380, %v4048, %v4055
        %v4058 = vshrl.u32 %v3975, 16
        %v4060 = vrot.slane %v4058, 7
        %v4062 = vshrl.u32 %v3976, 16
        %v4064 = vrot.slane %v4062, 7
        %v4065 = vshll.u32 %v3976, 16
        %v4067 = vor.u32 %v4064, %v4065
        %v4068 = vsel %vm380, %v4060, %v4067
        %v4070 = vshrl.u32 %v3977, 16
        %v4072 = vrot.slane %v4070, 7
        %v4074 = vshrl.u32 %v3978, 16
        %v4076 = vrot.slane %v4074, 7
        %v4077 = vshll.u32 %v3978, 16
        %v4079 = vor.u32 %v4076, %v4077
        %v4080 = vsel %vm380, %v4072, %v4079
        %v4082 = vshrl.u32 %v3979, 16
        %v4084 = vrot.slane %v4082, 7
        %v4086 = vshrl.u32 %v3980, 16
        %v4088 = vrot.slane %v4086, 7
        %v4089 = vshll.u32 %v3980, 16
        %v4091 = vor.u32 %v4088, %v4089
        %v4092 = vsel %vm380, %v4084, %v4091
        %v4094 = vshrl.u32 %v3981, 16
        %v4096 = vrot.slane %v4094, 7
        %v4098 = vshrl.u32 %v3982, 16
        %v4100 = vrot.slane %v4098, 7
        %v4101 = vshll.u32 %v3982, 16
        %v4103 = vor.u32 %v4100, %v4101
        %v4104 = vsel %vm380, %v4096, %v4103
        %v4106 = vshrl.u32 %v3983, 16
        %v4108 = vrot.slane %v4106, 7
        %v4110 = vshrl.u32 %v3984, 16
        %v4112 = vrot.slane %v4110, 7
        %v4113 = vshll.u32 %v3984, 16
        %v4115 = vor.u32 %v4112, %v4113
        %v4116 = vsel %vm380, %v4108, %v4115
        %v4118 = vshrl.u32 %v3985, 16
        %v4120 = vrot.slane %v4118, 7
        %v4122 = vshrl.u32 %v3986, 16
        %v4124 = vrot.slane %v4122, 7
        %v4125 = vshll.u32 %v3986, 16
        %v4127 = vor.u32 %v4124, %v4125
        %v4128 = vsel %vm380, %v4120, %v4127
        %v4130 = vshrl.u32 %v3987, 16
        %v4132 = vrot.slane %v4130, 7
        %v4134 = vshrl.u32 %v3988, 16
        %v4136 = vrot.slane %v4134, 7
        %v4137 = vshll.u32 %v3988, 16
        %v4139 = vor.u32 %v4136, %v4137
        %v4140 = vsel %vm380, %v4132, %v4139
        %v4142 = vshrl.u32 %v3989, 16
        %v4144 = vrot.slane %v4142, 7
        %v4146 = vshrl.u32 %v3990, 16
        %v4148 = vrot.slane %v4146, 7
        %v4149 = vshll.u32 %v3990, 16
        %v4151 = vor.u32 %v4148, %v4149
        %v4152 = vsel %vm380, %v4144, %v4151
        %v4154 = vshrl.u32 %v3991, 16
        %v4156 = vrot.slane %v4154, 7
        %v4158 = vshrl.u32 %v3992, 16
        %v4160 = vrot.slane %v4158, 7
        %v4161 = vshll.u32 %v3992, 16
        %v4163 = vor.u32 %v4160, %v4161
        %v4164 = vsel %vm380, %v4156, %v4163
        %v4166 = vshrl.u32 %v3993, 16
        %v4168 = vrot.slane %v4166, 7
        %v4170 = vshrl.u32 %v3994, 16
        %v4172 = vrot.slane %v4170, 7
        %v4173 = vshll.u32 %v3994, 16
        %v4175 = vor.u32 %v4172, %v4173
        %v4176 = vsel %vm380, %v4168, %v4175
        %v4178 = vshrl.u32 %v3995, 16
        %v4180 = vrot.slane %v4178, 7
        %v4182 = vshrl.u32 %v3996, 16
        %v4184 = vrot.slane %v4182, 7
        %v4185 = vshll.u32 %v3996, 16
        %v4187 = vor.u32 %v4184, %v4185
        %v4188 = vsel %vm380, %v4180, %v4187
        %4189 = vrot.lane.b32.xlu0 %v4008, 64
        %v4190 = vpop.permute.xlu0 %4189
        %4191 = vrot.lane.b32.xlu0 %v4020, 64
        %v4192 = vpop.permute.xlu0 %4191
        %4193 = vrot.lane.b32.xlu0 %v4032, 64
        %v4194 = vpop.permute.xlu0 %4193
        %4195 = vrot.lane.b32.xlu0 %v4044, 64
        %v4196 = vpop.permute.xlu0 %4195
        %4197 = vrot.lane.b32.xlu0 %v4056, 64
        %v4198 = vpop.permute.xlu0 %4197
        %4199 = vrot.lane.b32.xlu0 %v4068, 64
        %v4200 = vpop.permute.xlu0 %4199
        %4201 = vrot.lane.b32.xlu0 %v4080, 64
        %v4202 = vpop.permute.xlu0 %4201
        %4203 = vrot.lane.b32.xlu0 %v4092, 64
        %v4204 = vpop.permute.xlu0 %4203
        %4205 = vrot.lane.b32.xlu0 %v4104, 64
        %v4206 = vpop.permute.xlu0 %4205
        %4207 = vrot.lane.b32.xlu0 %v4116, 64
        %v4208 = vpop.permute.xlu0 %4207
        %4209 = vrot.lane.b32.xlu0 %v4128, 64
        %v4210 = vpop.permute.xlu0 %4209
        %4211 = vrot.lane.b32.xlu0 %v4140, 64
        %v4212 = vpop.permute.xlu0 %4211
        %4213 = vrot.lane.b32.xlu0 %v4152, 64
        %v4214 = vpop.permute.xlu0 %4213
        %4215 = vrot.lane.b32.xlu0 %v4164, 64
        %v4216 = vpop.permute.xlu0 %4215
        %4217 = vrot.lane.b32.xlu0 %v4176, 64
        %v4218 = vpop.permute.xlu0 %4217
        %4219 = vrot.lane.b32.xlu0 %v4188, 64
        %v4220 = vpop.permute.xlu0 %4219
        %4237 = vst.msk [vmem:[#allocation3 + $0x8] sm:$0xff] %vm830, %v4190
        %4238 = vst.msk [vmem:[#allocation3 + $0x30] sm:$0xff] %vm830, %v4192
        %4239 = vst.msk [vmem:[#allocation3 + $0x58] sm:$0xff] %vm830, %v4194
        %4240 = vst.msk [vmem:[#allocation3 + $0x80] sm:$0xff] %vm830, %v4196
        %4241 = vst.msk [vmem:[#allocation3 + $0xa8] sm:$0xff] %vm830, %v4198
        %4242 = vst.msk [vmem:[#allocation3 + $0xd0] sm:$0xff] %vm830, %v4200
        %4243 = vst.msk [vmem:[#allocation3 + $0xf8] sm:$0xff] %vm830, %v4202
        %4244 = vst.msk [vmem:[#allocation3 + $0x120] sm:$0xff] %vm830, %v4204
        %4245 = vst.msk [vmem:[#allocation3 + $0x148] sm:$0xff] %vm830, %v4206
        %4246 = vst.msk [vmem:[#allocation3 + $0x170] sm:$0xff] %vm830, %v4208
        %4247 = vst.msk [vmem:[#allocation3 + $0x198] sm:$0xff] %vm830, %v4210
        %4248 = vst.msk [vmem:[#allocation3 + $0x1c0] sm:$0xff] %vm830, %v4212
        %4249 = vst.msk [vmem:[#allocation3 + $0x1e8] sm:$0xff] %vm830, %v4214
        %4250 = vst.msk [vmem:[#allocation3 + $0x210] sm:$0xff] %vm830, %v4216
        %4251 = vst.msk [vmem:[#allocation3 + $0x238] sm:$0xff] %vm830, %v4218
        %4252 = vst.msk [vmem:[#allocation3 + $0x260] sm:$0xff] %vm830, %v4220
        %v4253 = vld [vmem:[%s327 + $0x8] sm:$0xff]
        %v4254 = vld [vmem:[%s327 + $0x20] sm:$0xff]
        %v4255 = vld [vmem:[%s327 + $0x38] sm:$0xff]
        %v4256 = vld [vmem:[%s327 + $0x50] sm:$0xff]
        %v4257 = vld [vmem:[%s327 + $0x68] sm:$0xff]
        %v4258 = vld [vmem:[%s327 + $0x80] sm:$0xff]
        %v4259 = vld [vmem:[%s327 + $0x98] sm:$0xff]
        %v4260 = vld [vmem:[%s327 + $0xb0] sm:$0xff]
        %v4261 = vld [vmem:[%s327 + $0xc8] sm:$0xff]
        %v4262 = vld [vmem:[%s327 + $0xe0] sm:$0xff]
        %v4263 = vld [vmem:[%s327 + $0xf8] sm:$0xff]
        %v4264 = vld [vmem:[%s327 + $0x110] sm:$0xff]
        %v4265 = vld [vmem:[%s327 + $0x128] sm:$0xff]
        %v4266 = vld [vmem:[%s327 + $0x140] sm:$0xff]
        %v4267 = vld [vmem:[%s327 + $0x158] sm:$0xff]
        %v4268 = vld [vmem:[%s327 + $0x170] sm:$0xff]
        %4269 = vst.msk [vmem:[#allocation3 + $0x10] sm:$0xff] %vm319, %v4253
        %4270 = vst.msk [vmem:[#allocation3 + $0x38] sm:$0xff] %vm319, %v4254
        %4271 = vst.msk [vmem:[#allocation3 + $0x60] sm:$0xff] %vm319, %v4255
        %4272 = vst.msk [vmem:[#allocation3 + $0x88] sm:$0xff] %vm319, %v4256
        %4273 = vst.msk [vmem:[#allocation3 + $0xb0] sm:$0xff] %vm319, %v4257
        %4274 = vst.msk [vmem:[#allocation3 + $0xd8] sm:$0xff] %vm319, %v4258
        %4275 = vst.msk [vmem:[#allocation3 + $0x100] sm:$0xff] %vm319, %v4259
        %4276 = vst.msk [vmem:[#allocation3 + $0x128] sm:$0xff] %vm319, %v4260
        %4277 = vst.msk [vmem:[#allocation3 + $0x150] sm:$0xff] %vm319, %v4261
        %4278 = vst.msk [vmem:[#allocation3 + $0x178] sm:$0xff] %vm319, %v4262
        %4279 = vst.msk [vmem:[#allocation3 + $0x1a0] sm:$0xff] %vm319, %v4263
        %4280 = vst.msk [vmem:[#allocation3 + $0x1c8] sm:$0xff] %vm319, %v4264
        %4281 = vst.msk [vmem:[#allocation3 + $0x1f0] sm:$0xff] %vm319, %v4265
        %4282 = vst.msk [vmem:[#allocation3 + $0x218] sm:$0xff] %vm319, %v4266
        %4283 = vst.msk [vmem:[#allocation3 + $0x240] sm:$0xff] %vm319, %v4267
        %4284 = vst.msk [vmem:[#allocation3 + $0x268] sm:$0xff] %vm319, %v4268
        %v4285 = vld [vmem:[%s327 + $0x8] sm:$0xff]
        %v4286 = vld [vmem:[%s327 + $0x10] sm:$0x1]
        %v4287 = vld [vmem:[%s327 + $0x20] sm:$0xff]
        %v4288 = vld [vmem:[%s327 + $0x28] sm:$0x1]
        %v4289 = vld [vmem:[%s327 + $0x38] sm:$0xff]
        %v4290 = vld [vmem:[%s327 + $0x40] sm:$0x1]
        %v4291 = vld [vmem:[%s327 + $0x50] sm:$0xff]
        %v4292 = vld [vmem:[%s327 + $0x58] sm:$0x1]
        %v4293 = vld [vmem:[%s327 + $0x68] sm:$0xff]
        %v4294 = vld [vmem:[%s327 + $0x70] sm:$0x1]
        %v4295 = vld [vmem:[%s327 + $0x80] sm:$0xff]
        %v4296 = vld [vmem:[%s327 + $0x88] sm:$0x1]
        %v4297 = vld [vmem:[%s327 + $0x98] sm:$0xff]
        %v4298 = vld [vmem:[%s327 + $0xa0] sm:$0x1]
        %v4299 = vld [vmem:[%s327 + $0xb0] sm:$0xff]
        %v4300 = vld [vmem:[%s327 + $0xb8] sm:$0x1]
        %v4301 = vld [vmem:[%s327 + $0xc8] sm:$0xff]
        %v4302 = vld [vmem:[%s327 + $0xd0] sm:$0x1]
        %v4303 = vld [vmem:[%s327 + $0xe0] sm:$0xff]
        %v4304 = vld [vmem:[%s327 + $0xe8] sm:$0x1]
        %v4305 = vld [vmem:[%s327 + $0xf8] sm:$0xff]
        %v4306 = vld [vmem:[%s327 + $0x100] sm:$0x1]
        %v4307 = vld [vmem:[%s327 + $0x110] sm:$0xff]
        %v4308 = vld [vmem:[%s327 + $0x118] sm:$0x1]
        %v4309 = vld [vmem:[%s327 + $0x128] sm:$0xff]
        %v4310 = vld [vmem:[%s327 + $0x130] sm:$0x1]
        %v4311 = vld [vmem:[%s327 + $0x140] sm:$0xff]
        %v4312 = vld [vmem:[%s327 + $0x148] sm:$0x1]
        %v4313 = vld [vmem:[%s327 + $0x158] sm:$0xff]
        %v4314 = vld [vmem:[%s327 + $0x160] sm:$0x1]
        %v4315 = vld [vmem:[%s327 + $0x170] sm:$0xff]
        %v4316 = vld [vmem:[%s327 + $0x178] sm:$0x1]
        %v4318 = vshrl.u32 %v4285, 16
        %v4320 = vshll.u32 %v4285, 16
        %v4322 = vrot.slane %v4320, 1
        %v4323 = vor.u32 %v4318, %v4322
        %v4325 = vshll.u32 %v4286, 16
        %v4327 = vrot.slane %v4325, 1
        %v4328 = vsel %vm879, %v4323, %v4327
        %v4330 = vshrl.u32 %v4287, 16
        %v4332 = vshll.u32 %v4287, 16
        %v4334 = vrot.slane %v4332, 1
        %v4335 = vor.u32 %v4330, %v4334
        %v4337 = vshll.u32 %v4288, 16
        %v4339 = vrot.slane %v4337, 1
        %v4340 = vsel %vm879, %v4335, %v4339
        %v4342 = vshrl.u32 %v4289, 16
        %v4344 = vshll.u32 %v4289, 16
        %v4346 = vrot.slane %v4344, 1
        %v4347 = vor.u32 %v4342, %v4346
        %v4349 = vshll.u32 %v4290, 16
        %v4351 = vrot.slane %v4349, 1
        %v4352 = vsel %vm879, %v4347, %v4351
        %v4354 = vshrl.u32 %v4291, 16
        %v4356 = vshll.u32 %v4291, 16
        %v4358 = vrot.slane %v4356, 1
        %v4359 = vor.u32 %v4354, %v4358
        %v4361 = vshll.u32 %v4292, 16
        %v4363 = vrot.slane %v4361, 1
        %v4364 = vsel %vm879, %v4359, %v4363
        %v4366 = vshrl.u32 %v4293, 16
        %v4368 = vshll.u32 %v4293, 16
        %v4370 = vrot.slane %v4368, 1
        %v4371 = vor.u32 %v4366, %v4370
        %v4373 = vshll.u32 %v4294, 16
        %v4375 = vrot.slane %v4373, 1
        %v4376 = vsel %vm879, %v4371, %v4375
        %v4378 = vshrl.u32 %v4295, 16
        %v4380 = vshll.u32 %v4295, 16
        %v4382 = vrot.slane %v4380, 1
        %v4383 = vor.u32 %v4378, %v4382
        %v4385 = vshll.u32 %v4296, 16
        %v4387 = vrot.slane %v4385, 1
        %v4388 = vsel %vm879, %v4383, %v4387
        %v4390 = vshrl.u32 %v4297, 16
        %v4392 = vshll.u32 %v4297, 16
        %v4394 = vrot.slane %v4392, 1
        %v4395 = vor.u32 %v4390, %v4394
        %v4397 = vshll.u32 %v4298, 16
        %v4399 = vrot.slane %v4397, 1
        %v4400 = vsel %vm879, %v4395, %v4399
        %v4402 = vshrl.u32 %v4299, 16
        %v4404 = vshll.u32 %v4299, 16
        %v4406 = vrot.slane %v4404, 1
        %v4407 = vor.u32 %v4402, %v4406
        %v4409 = vshll.u32 %v4300, 16
        %v4411 = vrot.slane %v4409, 1
        %v4412 = vsel %vm879, %v4407, %v4411
        %v4414 = vshrl.u32 %v4301, 16
        %v4416 = vshll.u32 %v4301, 16
        %v4418 = vrot.slane %v4416, 1
        %v4419 = vor.u32 %v4414, %v4418
        %v4421 = vshll.u32 %v4302, 16
        %v4423 = vrot.slane %v4421, 1
        %v4424 = vsel %vm879, %v4419, %v4423
        %v4426 = vshrl.u32 %v4303, 16
        %v4428 = vshll.u32 %v4303, 16
        %v4430 = vrot.slane %v4428, 1
        %v4431 = vor.u32 %v4426, %v4430
        %v4433 = vshll.u32 %v4304, 16
        %v4435 = vrot.slane %v4433, 1
        %v4436 = vsel %vm879, %v4431, %v4435
        %v4438 = vshrl.u32 %v4305, 16
        %v4440 = vshll.u32 %v4305, 16
        %v4442 = vrot.slane %v4440, 1
        %v4443 = vor.u32 %v4438, %v4442
        %v4445 = vshll.u32 %v4306, 16
        %v4447 = vrot.slane %v4445, 1
        %v4448 = vsel %vm879, %v4443, %v4447
        %v4450 = vshrl.u32 %v4307, 16
        %v4452 = vshll.u32 %v4307, 16
        %v4454 = vrot.slane %v4452, 1
        %v4455 = vor.u32 %v4450, %v4454
        %v4457 = vshll.u32 %v4308, 16
        %v4459 = vrot.slane %v4457, 1
        %v4460 = vsel %vm879, %v4455, %v4459
        %v4462 = vshrl.u32 %v4309, 16
        %v4464 = vshll.u32 %v4309, 16
        %v4466 = vrot.slane %v4464, 1
        %v4467 = vor.u32 %v4462, %v4466
        %v4469 = vshll.u32 %v4310, 16
        %v4471 = vrot.slane %v4469, 1
        %v4472 = vsel %vm879, %v4467, %v4471
        %v4474 = vshrl.u32 %v4311, 16
        %v4476 = vshll.u32 %v4311, 16
        %v4478 = vrot.slane %v4476, 1
        %v4479 = vor.u32 %v4474, %v4478
        %v4481 = vshll.u32 %v4312, 16
        %v4483 = vrot.slane %v4481, 1
        %v4484 = vsel %vm879, %v4479, %v4483
        %v4486 = vshrl.u32 %v4313, 16
        %v4488 = vshll.u32 %v4313, 16
        %v4490 = vrot.slane %v4488, 1
        %v4491 = vor.u32 %v4486, %v4490
        %v4493 = vshll.u32 %v4314, 16
        %v4495 = vrot.slane %v4493, 1
        %v4496 = vsel %vm879, %v4491, %v4495
        %v4498 = vshrl.u32 %v4315, 16
        %v4500 = vshll.u32 %v4315, 16
        %v4502 = vrot.slane %v4500, 1
        %v4503 = vor.u32 %v4498, %v4502
        %v4505 = vshll.u32 %v4316, 16
        %v4507 = vrot.slane %v4505, 1
        %v4508 = vsel %vm879, %v4503, %v4507
        %4509 = vrot.lane.b32.xlu0 %v4328, 64
        %v4510 = vpop.permute.xlu0 %4509
        %4511 = vrot.lane.b32.xlu0 %v4340, 64
        %v4512 = vpop.permute.xlu0 %4511
        %4513 = vrot.lane.b32.xlu0 %v4352, 64
        %v4514 = vpop.permute.xlu0 %4513
        %4515 = vrot.lane.b32.xlu0 %v4364, 64
        %v4516 = vpop.permute.xlu0 %4515
        %4517 = vrot.lane.b32.xlu0 %v4376, 64
        %v4518 = vpop.permute.xlu0 %4517
        %4519 = vrot.lane.b32.xlu0 %v4388, 64
        %v4520 = vpop.permute.xlu0 %4519
        %4521 = vrot.lane.b32.xlu0 %v4400, 64
        %v4522 = vpop.permute.xlu0 %4521
        %4523 = vrot.lane.b32.xlu0 %v4412, 64
        %v4524 = vpop.permute.xlu0 %4523
        %4525 = vrot.lane.b32.xlu0 %v4424, 64
        %v4526 = vpop.permute.xlu0 %4525
        %4527 = vrot.lane.b32.xlu0 %v4436, 64
        %v4528 = vpop.permute.xlu0 %4527
        %4529 = vrot.lane.b32.xlu0 %v4448, 64
        %v4530 = vpop.permute.xlu0 %4529
        %4531 = vrot.lane.b32.xlu0 %v4460, 64
        %v4532 = vpop.permute.xlu0 %4531
        %4533 = vrot.lane.b32.xlu0 %v4472, 64
        %v4534 = vpop.permute.xlu0 %4533
        %4535 = vrot.lane.b32.xlu0 %v4484, 64
        %v4536 = vpop.permute.xlu0 %4535
        %4537 = vrot.lane.b32.xlu0 %v4496, 64
        %v4538 = vpop.permute.xlu0 %4537
        %4539 = vrot.lane.b32.xlu0 %v4508, 64
        %v4540 = vpop.permute.xlu0 %4539
        %4557 = vst.msk [vmem:[#allocation3 + $0x10] sm:$0xff] %vm830, %v4510
        %4558 = vst.msk [vmem:[#allocation3 + $0x38] sm:$0xff] %vm830, %v4512
        %4559 = vst.msk [vmem:[#allocation3 + $0x60] sm:$0xff] %vm830, %v4514
        %4560 = vst.msk [vmem:[#allocation3 + $0x88] sm:$0xff] %vm830, %v4516
        %4561 = vst.msk [vmem:[#allocation3 + $0xb0] sm:$0xff] %vm830, %v4518
        %4562 = vst.msk [vmem:[#allocation3 + $0xd8] sm:$0xff] %vm830, %v4520
        %4563 = vst.msk [vmem:[#allocation3 + $0x100] sm:$0xff] %vm830, %v4522
        %4564 = vst.msk [vmem:[#allocation3 + $0x128] sm:$0xff] %vm830, %v4524
        %4565 = vst.msk [vmem:[#allocation3 + $0x150] sm:$0xff] %vm830, %v4526
        %4566 = vst.msk [vmem:[#allocation3 + $0x178] sm:$0xff] %vm830, %v4528
        %4567 = vst.msk [vmem:[#allocation3 + $0x1a0] sm:$0xff] %vm830, %v4530
        %4568 = vst.msk [vmem:[#allocation3 + $0x1c8] sm:$0xff] %vm830, %v4532
        %4569 = vst.msk [vmem:[#allocation3 + $0x1f0] sm:$0xff] %vm830, %v4534
        %4570 = vst.msk [vmem:[#allocation3 + $0x218] sm:$0xff] %vm830, %v4536
        %4571 = vst.msk [vmem:[#allocation3 + $0x240] sm:$0xff] %vm830, %v4538
        %4572 = vst.msk [vmem:[#allocation3 + $0x268] sm:$0xff] %vm830, %v4540
        %v4573 = vld [vmem:[%s1712] sm:$0x80]
        %v4574 = vld [vmem:[%s1712 + $0x8] sm:$0xff]
        %v4575 = vld [vmem:[%s1712 + $0x18] sm:$0x80]
        %v4576 = vld [vmem:[%s1712 + $0x20] sm:$0xff]
        %v4577 = vld [vmem:[%s1712 + $0x30] sm:$0x80]
        %v4578 = vld [vmem:[%s1712 + $0x38] sm:$0xff]
        %v4579 = vld [vmem:[%s1712 + $0x48] sm:$0x80]
        %v4580 = vld [vmem:[%s1712 + $0x50] sm:$0xff]
        %v4581 = vld [vmem:[%s1712 + $0x60] sm:$0x80]
        %v4582 = vld [vmem:[%s1712 + $0x68] sm:$0xff]
        %v4583 = vld [vmem:[%s1712 + $0x78] sm:$0x80]
        %v4584 = vld [vmem:[%s1712 + $0x80] sm:$0xff]
        %v4585 = vld [vmem:[%s1712 + $0x90] sm:$0x80]
        %v4586 = vld [vmem:[%s1712 + $0x98] sm:$0xff]
        %v4587 = vld [vmem:[%s1712 + $0xa8] sm:$0x80]
        %v4588 = vld [vmem:[%s1712 + $0xb0] sm:$0xff]
        %v4589 = vld [vmem:[%s1712 + $0xc0] sm:$0x80]
        %v4590 = vld [vmem:[%s1712 + $0xc8] sm:$0xff]
        %v4591 = vld [vmem:[%s1712 + $0xd8] sm:$0x80]
        %v4592 = vld [vmem:[%s1712 + $0xe0] sm:$0xff]
        %v4593 = vld [vmem:[%s1712 + $0xf0] sm:$0x80]
        %v4594 = vld [vmem:[%s1712 + $0xf8] sm:$0xff]
        %v4595 = vld [vmem:[%s1712 + $0x108] sm:$0x80]
        %v4596 = vld [vmem:[%s1712 + $0x110] sm:$0xff]
        %v4597 = vld [vmem:[%s1712 + $0x120] sm:$0x80]
        %v4598 = vld [vmem:[%s1712 + $0x128] sm:$0xff]
        %v4599 = vld [vmem:[%s1712 + $0x138] sm:$0x80]
        %v4600 = vld [vmem:[%s1712 + $0x140] sm:$0xff]
        %v4601 = vld [vmem:[%s1712 + $0x150] sm:$0x80]
        %v4602 = vld [vmem:[%s1712 + $0x158] sm:$0xff]
        %v4603 = vld [vmem:[%s1712 + $0x168] sm:$0x80]
        %v4604 = vld [vmem:[%s1712 + $0x170] sm:$0xff]
        %v4606 = vshrl.u32 %v4573, 16
        %v4608 = vrot.slane %v4606, 7
        %v4610 = vshrl.u32 %v4574, 16
        %v4612 = vrot.slane %v4610, 7
        %v4613 = vshll.u32 %v4574, 16
        %v4615 = vor.u32 %v4612, %v4613
        %v4616 = vsel %vm380, %v4608, %v4615
        %v4618 = vshrl.u32 %v4575, 16
        %v4620 = vrot.slane %v4618, 7
        %v4622 = vshrl.u32 %v4576, 16
        %v4624 = vrot.slane %v4622, 7
        %v4625 = vshll.u32 %v4576, 16
        %v4627 = vor.u32 %v4624, %v4625
        %v4628 = vsel %vm380, %v4620, %v4627
        %v4630 = vshrl.u32 %v4577, 16
        %v4632 = vrot.slane %v4630, 7
        %v4634 = vshrl.u32 %v4578, 16
        %v4636 = vrot.slane %v4634, 7
        %v4637 = vshll.u32 %v4578, 16
        %v4639 = vor.u32 %v4636, %v4637
        %v4640 = vsel %vm380, %v4632, %v4639
        %v4642 = vshrl.u32 %v4579, 16
        %v4644 = vrot.slane %v4642, 7
        %v4646 = vshrl.u32 %v4580, 16
        %v4648 = vrot.slane %v4646, 7
        %v4649 = vshll.u32 %v4580, 16
        %v4651 = vor.u32 %v4648, %v4649
        %v4652 = vsel %vm380, %v4644, %v4651
        %v4654 = vshrl.u32 %v4581, 16
        %v4656 = vrot.slane %v4654, 7
        %v4658 = vshrl.u32 %v4582, 16
        %v4660 = vrot.slane %v4658, 7
        %v4661 = vshll.u32 %v4582, 16
        %v4663 = vor.u32 %v4660, %v4661
        %v4664 = vsel %vm380, %v4656, %v4663
        %v4666 = vshrl.u32 %v4583, 16
        %v4668 = vrot.slane %v4666, 7
        %v4670 = vshrl.u32 %v4584, 16
        %v4672 = vrot.slane %v4670, 7
        %v4673 = vshll.u32 %v4584, 16
        %v4675 = vor.u32 %v4672, %v4673
        %v4676 = vsel %vm380, %v4668, %v4675
        %v4678 = vshrl.u32 %v4585, 16
        %v4680 = vrot.slane %v4678, 7
        %v4682 = vshrl.u32 %v4586, 16
        %v4684 = vrot.slane %v4682, 7
        %v4685 = vshll.u32 %v4586, 16
        %v4687 = vor.u32 %v4684, %v4685
        %v4688 = vsel %vm380, %v4680, %v4687
        %v4690 = vshrl.u32 %v4587, 16
        %v4692 = vrot.slane %v4690, 7
        %v4694 = vshrl.u32 %v4588, 16
        %v4696 = vrot.slane %v4694, 7
        %v4697 = vshll.u32 %v4588, 16
        %v4699 = vor.u32 %v4696, %v4697
        %v4700 = vsel %vm380, %v4692, %v4699
        %v4702 = vshrl.u32 %v4589, 16
        %v4704 = vrot.slane %v4702, 7
        %v4706 = vshrl.u32 %v4590, 16
        %v4708 = vrot.slane %v4706, 7
        %v4709 = vshll.u32 %v4590, 16
        %v4711 = vor.u32 %v4708, %v4709
        %v4712 = vsel %vm380, %v4704, %v4711
        %v4714 = vshrl.u32 %v4591, 16
        %v4716 = vrot.slane %v4714, 7
        %v4718 = vshrl.u32 %v4592, 16
        %v4720 = vrot.slane %v4718, 7
        %v4721 = vshll.u32 %v4592, 16
        %v4723 = vor.u32 %v4720, %v4721
        %v4724 = vsel %vm380, %v4716, %v4723
        %v4726 = vshrl.u32 %v4593, 16
        %v4728 = vrot.slane %v4726, 7
        %v4730 = vshrl.u32 %v4594, 16
        %v4732 = vrot.slane %v4730, 7
        %v4733 = vshll.u32 %v4594, 16
        %v4735 = vor.u32 %v4732, %v4733
        %v4736 = vsel %vm380, %v4728, %v4735
        %v4738 = vshrl.u32 %v4595, 16
        %v4740 = vrot.slane %v4738, 7
        %v4742 = vshrl.u32 %v4596, 16
        %v4744 = vrot.slane %v4742, 7
        %v4745 = vshll.u32 %v4596, 16
        %v4747 = vor.u32 %v4744, %v4745
        %v4748 = vsel %vm380, %v4740, %v4747
        %v4750 = vshrl.u32 %v4597, 16
        %v4752 = vrot.slane %v4750, 7
        %v4754 = vshrl.u32 %v4598, 16
        %v4756 = vrot.slane %v4754, 7
        %v4757 = vshll.u32 %v4598, 16
        %v4759 = vor.u32 %v4756, %v4757
        %v4760 = vsel %vm380, %v4752, %v4759
        %v4762 = vshrl.u32 %v4599, 16
        %v4764 = vrot.slane %v4762, 7
        %v4766 = vshrl.u32 %v4600, 16
        %v4768 = vrot.slane %v4766, 7
        %v4769 = vshll.u32 %v4600, 16
        %v4771 = vor.u32 %v4768, %v4769
        %v4772 = vsel %vm380, %v4764, %v4771
        %v4774 = vshrl.u32 %v4601, 16
        %v4776 = vrot.slane %v4774, 7
        %v4778 = vshrl.u32 %v4602, 16
        %v4780 = vrot.slane %v4778, 7
        %v4781 = vshll.u32 %v4602, 16
        %v4783 = vor.u32 %v4780, %v4781
        %v4784 = vsel %vm380, %v4776, %v4783
        %v4786 = vshrl.u32 %v4603, 16
        %v4788 = vrot.slane %v4786, 7
        %v4790 = vshrl.u32 %v4604, 16
        %v4792 = vrot.slane %v4790, 7
        %v4793 = vshll.u32 %v4604, 16
        %v4795 = vor.u32 %v4792, %v4793
        %v4796 = vsel %vm380, %v4788, %v4795
        %4813 = vst.msk [vmem:[#allocation3 + $0x18] sm:$0xff] %vm319, %v4616
        %4814 = vst.msk [vmem:[#allocation3 + $0x40] sm:$0xff] %vm319, %v4628
        %4815 = vst.msk [vmem:[#allocation3 + $0x68] sm:$0xff] %vm319, %v4640
        %4816 = vst.msk [vmem:[#allocation3 + $0x90] sm:$0xff] %vm319, %v4652
        %4817 = vst.msk [vmem:[#allocation3 + $0xb8] sm:$0xff] %vm319, %v4664
        %4818 = vst.msk [vmem:[#allocation3 + $0xe0] sm:$0xff] %vm319, %v4676
        %4819 = vst.msk [vmem:[#allocation3 + $0x108] sm:$0xff] %vm319, %v4688
        %4820 = vst.msk [vmem:[#allocation3 + $0x130] sm:$0xff] %vm319, %v4700
        %4821 = vst.msk [vmem:[#allocation3 + $0x158] sm:$0xff] %vm319, %v4712
        %4822 = vst.msk [vmem:[#allocation3 + $0x180] sm:$0xff] %vm319, %v4724
        %4823 = vst.msk [vmem:[#allocation3 + $0x1a8] sm:$0xff] %vm319, %v4736
        %4824 = vst.msk [vmem:[#allocation3 + $0x1d0] sm:$0xff] %vm319, %v4748
        %4825 = vst.msk [vmem:[#allocation3 + $0x1f8] sm:$0xff] %vm319, %v4760
        %4826 = vst.msk [vmem:[#allocation3 + $0x220] sm:$0xff] %vm319, %v4772
        %4827 = vst.msk [vmem:[#allocation3 + $0x248] sm:$0xff] %vm319, %v4784
        %4828 = vst.msk [vmem:[#allocation3 + $0x270] sm:$0xff] %vm319, %v4796
        %v4829 = vld [vmem:[%s1712 + $0x8] sm:$0xff]
        %v4830 = vld [vmem:[%s1712 + $0x20] sm:$0xff]
        %v4831 = vld [vmem:[%s1712 + $0x38] sm:$0xff]
        %v4832 = vld [vmem:[%s1712 + $0x50] sm:$0xff]
        %v4833 = vld [vmem:[%s1712 + $0x68] sm:$0xff]
        %v4834 = vld [vmem:[%s1712 + $0x80] sm:$0xff]
        %v4835 = vld [vmem:[%s1712 + $0x98] sm:$0xff]
        %v4836 = vld [vmem:[%s1712 + $0xb0] sm:$0xff]
        %v4837 = vld [vmem:[%s1712 + $0xc8] sm:$0xff]
        %v4838 = vld [vmem:[%s1712 + $0xe0] sm:$0xff]
        %v4839 = vld [vmem:[%s1712 + $0xf8] sm:$0xff]
        %v4840 = vld [vmem:[%s1712 + $0x110] sm:$0xff]
        %v4841 = vld [vmem:[%s1712 + $0x128] sm:$0xff]
        %v4842 = vld [vmem:[%s1712 + $0x140] sm:$0xff]
        %v4843 = vld [vmem:[%s1712 + $0x158] sm:$0xff]
        %v4844 = vld [vmem:[%s1712 + $0x170] sm:$0xff]
        %4861 = vrot.lane.b32.xlu0 %v4829, 64
        %v4862 = vpop.permute.xlu0 %4861
        %4863 = vrot.lane.b32.xlu0 %v4830, 64
        %v4864 = vpop.permute.xlu0 %4863
        %4865 = vrot.lane.b32.xlu0 %v4831, 64
        %v4866 = vpop.permute.xlu0 %4865
        %4867 = vrot.lane.b32.xlu0 %v4832, 64
        %v4868 = vpop.permute.xlu0 %4867
        %4869 = vrot.lane.b32.xlu0 %v4833, 64
        %v4870 = vpop.permute.xlu0 %4869
        %4871 = vrot.lane.b32.xlu0 %v4834, 64
        %v4872 = vpop.permute.xlu0 %4871
        %4873 = vrot.lane.b32.xlu0 %v4835, 64
        %v4874 = vpop.permute.xlu0 %4873
        %4875 = vrot.lane.b32.xlu0 %v4836, 64
        %v4876 = vpop.permute.xlu0 %4875
        %4877 = vrot.lane.b32.xlu0 %v4837, 64
        %v4878 = vpop.permute.xlu0 %4877
        %4879 = vrot.lane.b32.xlu0 %v4838, 64
        %v4880 = vpop.permute.xlu0 %4879
        %4881 = vrot.lane.b32.xlu0 %v4839, 64
        %v4882 = vpop.permute.xlu0 %4881
        %4883 = vrot.lane.b32.xlu0 %v4840, 64
        %v4884 = vpop.permute.xlu0 %4883
        %4885 = vrot.lane.b32.xlu0 %v4841, 64
        %v4886 = vpop.permute.xlu0 %4885
        %4887 = vrot.lane.b32.xlu0 %v4842, 64
        %v4888 = vpop.permute.xlu0 %4887
        %4889 = vrot.lane.b32.xlu0 %v4843, 64
        %v4890 = vpop.permute.xlu0 %4889
        %4891 = vrot.lane.b32.xlu0 %v4844, 64
        %v4892 = vpop.permute.xlu0 %4891
        %4909 = vst.msk [vmem:[#allocation3 + $0x18] sm:$0xff] %vm830, %v4862
        %4910 = vst.msk [vmem:[#allocation3 + $0x40] sm:$0xff] %vm830, %v4864
        %4911 = vst.msk [vmem:[#allocation3 + $0x68] sm:$0xff] %vm830, %v4866
        %4912 = vst.msk [vmem:[#allocation3 + $0x90] sm:$0xff] %vm830, %v4868
        %4913 = vst.msk [vmem:[#allocation3 + $0xb8] sm:$0xff] %vm830, %v4870
        %4914 = vst.msk [vmem:[#allocation3 + $0xe0] sm:$0xff] %vm830, %v4872
        %4915 = vst.msk [vmem:[#allocation3 + $0x108] sm:$0xff] %vm830, %v4874
        %4916 = vst.msk [vmem:[#allocation3 + $0x130] sm:$0xff] %vm830, %v4876
        %4917 = vst.msk [vmem:[#allocation3 + $0x158] sm:$0xff] %vm830, %v4878
        %4918 = vst.msk [vmem:[#allocation3 + $0x180] sm:$0xff] %vm830, %v4880
        %4919 = vst.msk [vmem:[#allocation3 + $0x1a8] sm:$0xff] %vm830, %v4882
        %4920 = vst.msk [vmem:[#allocation3 + $0x1d0] sm:$0xff] %vm830, %v4884
        %4921 = vst.msk [vmem:[#allocation3 + $0x1f8] sm:$0xff] %vm830, %v4886
        %4922 = vst.msk [vmem:[#allocation3 + $0x220] sm:$0xff] %vm830, %v4888
        %4923 = vst.msk [vmem:[#allocation3 + $0x248] sm:$0xff] %vm830, %v4890
        %4924 = vst.msk [vmem:[#allocation3 + $0x270] sm:$0xff] %vm830, %v4892
        %v4925 = vld [vmem:[%s1712 + $0x8] sm:$0xff]
        %v4926 = vld [vmem:[%s1712 + $0x10] sm:$0x1]
        %v4927 = vld [vmem:[%s1712 + $0x20] sm:$0xff]
        %v4928 = vld [vmem:[%s1712 + $0x28] sm:$0x1]
        %v4929 = vld [vmem:[%s1712 + $0x38] sm:$0xff]
        %v4930 = vld [vmem:[%s1712 + $0x40] sm:$0x1]
        %v4931 = vld [vmem:[%s1712 + $0x50] sm:$0xff]
        %v4932 = vld [vmem:[%s1712 + $0x58] sm:$0x1]
        %v4933 = vld [vmem:[%s1712 + $0x68] sm:$0xff]
        %v4934 = vld [vmem:[%s1712 + $0x70] sm:$0x1]
        %v4935 = vld [vmem:[%s1712 + $0x80] sm:$0xff]
        %v4936 = vld [vmem:[%s1712 + $0x88] sm:$0x1]
        %v4937 = vld [vmem:[%s1712 + $0x98] sm:$0xff]
        %v4938 = vld [vmem:[%s1712 + $0xa0] sm:$0x1]
        %v4939 = vld [vmem:[%s1712 + $0xb0] sm:$0xff]
        %v4940 = vld [vmem:[%s1712 + $0xb8] sm:$0x1]
        %v4941 = vld [vmem:[%s1712 + $0xc8] sm:$0xff]
        %v4942 = vld [vmem:[%s1712 + $0xd0] sm:$0x1]
        %v4943 = vld [vmem:[%s1712 + $0xe0] sm:$0xff]
        %v4944 = vld [vmem:[%s1712 + $0xe8] sm:$0x1]
        %v4945 = vld [vmem:[%s1712 + $0xf8] sm:$0xff]
        %v4946 = vld [vmem:[%s1712 + $0x100] sm:$0x1]
        %v4947 = vld [vmem:[%s1712 + $0x110] sm:$0xff]
        %v4948 = vld [vmem:[%s1712 + $0x118] sm:$0x1]
        %v4949 = vld [vmem:[%s1712 + $0x128] sm:$0xff]
        %v4950 = vld [vmem:[%s1712 + $0x130] sm:$0x1]
        %v4951 = vld [vmem:[%s1712 + $0x140] sm:$0xff]
        %v4952 = vld [vmem:[%s1712 + $0x148] sm:$0x1]
        %v4953 = vld [vmem:[%s1712 + $0x158] sm:$0xff]
        %v4954 = vld [vmem:[%s1712 + $0x160] sm:$0x1]
        %v4955 = vld [vmem:[%s1712 + $0x170] sm:$0xff]
        %v4956 = vld [vmem:[%s1712 + $0x178] sm:$0x1]
        %v4958 = vshrl.u32 %v4925, 16
        %v4960 = vshll.u32 %v4925, 16
        %v4962 = vrot.slane %v4960, 1
        %v4963 = vor.u32 %v4958, %v4962
        %v4965 = vshll.u32 %v4926, 16
        %v4967 = vrot.slane %v4965, 1
        %v4968 = vsel %vm879, %v4963, %v4967
        %v4970 = vshrl.u32 %v4927, 16
        %v4972 = vshll.u32 %v4927, 16
        %v4974 = vrot.slane %v4972, 1
        %v4975 = vor.u32 %v4970, %v4974
        %v4977 = vshll.u32 %v4928, 16
        %v4979 = vrot.slane %v4977, 1
        %v4980 = vsel %vm879, %v4975, %v4979
        %v4982 = vshrl.u32 %v4929, 16
        %v4984 = vshll.u32 %v4929, 16
        %v4986 = vrot.slane %v4984, 1
        %v4987 = vor.u32 %v4982, %v4986
        %v4989 = vshll.u32 %v4930, 16
        %v4991 = vrot.slane %v4989, 1
        %v4992 = vsel %vm879, %v4987, %v4991
        %v4994 = vshrl.u32 %v4931, 16
        %v4996 = vshll.u32 %v4931, 16
        %v4998 = vrot.slane %v4996, 1
        %v4999 = vor.u32 %v4994, %v4998
        %v5001 = vshll.u32 %v4932, 16
        %v5003 = vrot.slane %v5001, 1
        %v5004 = vsel %vm879, %v4999, %v5003
        %v5006 = vshrl.u32 %v4933, 16
        %v5008 = vshll.u32 %v4933, 16
        %v5010 = vrot.slane %v5008, 1
        %v5011 = vor.u32 %v5006, %v5010
        %v5013 = vshll.u32 %v4934, 16
        %v5015 = vrot.slane %v5013, 1
        %v5016 = vsel %vm879, %v5011, %v5015
        %v5018 = vshrl.u32 %v4935, 16
        %v5020 = vshll.u32 %v4935, 16
        %v5022 = vrot.slane %v5020, 1
        %v5023 = vor.u32 %v5018, %v5022
        %v5025 = vshll.u32 %v4936, 16
        %v5027 = vrot.slane %v5025, 1
        %v5028 = vsel %vm879, %v5023, %v5027
        %v5030 = vshrl.u32 %v4937, 16
        %v5032 = vshll.u32 %v4937, 16
        %v5034 = vrot.slane %v5032, 1
        %v5035 = vor.u32 %v5030, %v5034
        %v5037 = vshll.u32 %v4938, 16
        %v5039 = vrot.slane %v5037, 1
        %v5040 = vsel %vm879, %v5035, %v5039
        %v5042 = vshrl.u32 %v4939, 16
        %v5044 = vshll.u32 %v4939, 16
        %v5046 = vrot.slane %v5044, 1
        %v5047 = vor.u32 %v5042, %v5046
        %v5049 = vshll.u32 %v4940, 16
        %v5051 = vrot.slane %v5049, 1
        %v5052 = vsel %vm879, %v5047, %v5051
        %v5054 = vshrl.u32 %v4941, 16
        %v5056 = vshll.u32 %v4941, 16
        %v5058 = vrot.slane %v5056, 1
        %v5059 = vor.u32 %v5054, %v5058
        %v5061 = vshll.u32 %v4942, 16
        %v5063 = vrot.slane %v5061, 1
        %v5064 = vsel %vm879, %v5059, %v5063
        %v5066 = vshrl.u32 %v4943, 16
        %v5068 = vshll.u32 %v4943, 16
        %v5070 = vrot.slane %v5068, 1
        %v5071 = vor.u32 %v5066, %v5070
        %v5073 = vshll.u32 %v4944, 16
        %v5075 = vrot.slane %v5073, 1
        %v5076 = vsel %vm879, %v5071, %v5075
        %v5078 = vshrl.u32 %v4945, 16
        %v5080 = vshll.u32 %v4945, 16
        %v5082 = vrot.slane %v5080, 1
        %v5083 = vor.u32 %v5078, %v5082
        %v5085 = vshll.u32 %v4946, 16
        %v5087 = vrot.slane %v5085, 1
        %v5088 = vsel %vm879, %v5083, %v5087
        %v5090 = vshrl.u32 %v4947, 16
        %v5092 = vshll.u32 %v4947, 16
        %v5094 = vrot.slane %v5092, 1
        %v5095 = vor.u32 %v5090, %v5094
        %v5097 = vshll.u32 %v4948, 16
        %v5099 = vrot.slane %v5097, 1
        %v5100 = vsel %vm879, %v5095, %v5099
        %v5102 = vshrl.u32 %v4949, 16
        %v5104 = vshll.u32 %v4949, 16
        %v5106 = vrot.slane %v5104, 1
        %v5107 = vor.u32 %v5102, %v5106
        %v5109 = vshll.u32 %v4950, 16
        %v5111 = vrot.slane %v5109, 1
        %v5112 = vsel %vm879, %v5107, %v5111
        %v5114 = vshrl.u32 %v4951, 16
        %v5116 = vshll.u32 %v4951, 16
        %v5118 = vrot.slane %v5116, 1
        %v5119 = vor.u32 %v5114, %v5118
        %v5121 = vshll.u32 %v4952, 16
        %v5123 = vrot.slane %v5121, 1
        %v5124 = vsel %vm879, %v5119, %v5123
        %v5126 = vshrl.u32 %v4953, 16
        %v5128 = vshll.u32 %v4953, 16
        %v5130 = vrot.slane %v5128, 1
        %v5131 = vor.u32 %v5126, %v5130
        %v5133 = vshll.u32 %v4954, 16
        %v5135 = vrot.slane %v5133, 1
        %v5136 = vsel %vm879, %v5131, %v5135
        %v5138 = vshrl.u32 %v4955, 16
        %v5140 = vshll.u32 %v4955, 16
        %v5142 = vrot.slane %v5140, 1
        %v5143 = vor.u32 %v5138, %v5142
        %v5145 = vshll.u32 %v4956, 16
        %v5147 = vrot.slane %v5145, 1
        %v5148 = vsel %vm879, %v5143, %v5147
        %5165 = vst.msk [vmem:[#allocation3 + $0x20] sm:$0xff] %vm319, %v4968
        %5166 = vst.msk [vmem:[#allocation3 + $0x48] sm:$0xff] %vm319, %v4980
        %5167 = vst.msk [vmem:[#allocation3 + $0x70] sm:$0xff] %vm319, %v4992
        %5168 = vst.msk [vmem:[#allocation3 + $0x98] sm:$0xff] %vm319, %v5004
        %5169 = vst.msk [vmem:[#allocation3 + $0xc0] sm:$0xff] %vm319, %v5016
        %5170 = vst.msk [vmem:[#allocation3 + $0xe8] sm:$0xff] %vm319, %v5028
        %5171 = vst.msk [vmem:[#allocation3 + $0x110] sm:$0xff] %vm319, %v5040
        %5172 = vst.msk [vmem:[#allocation3 + $0x138] sm:$0xff] %vm319, %v5052
        %5173 = vst.msk [vmem:[#allocation3 + $0x160] sm:$0xff] %vm319, %v5064
        %5174 = vst.msk [vmem:[#allocation3 + $0x188] sm:$0xff] %vm319, %v5076
        %5175 = vst.msk [vmem:[#allocation3 + $0x1b0] sm:$0xff] %vm319, %v5088
        %5176 = vst.msk [vmem:[#allocation3 + $0x1d8] sm:$0xff] %vm319, %v5100
        %5177 = vst.msk [vmem:[#allocation3 + $0x200] sm:$0xff] %vm319, %v5112
        %5178 = vst.msk [vmem:[#allocation3 + $0x228] sm:$0xff] %vm319, %v5124
        %5179 = vst.msk [vmem:[#allocation3 + $0x250] sm:$0xff] %vm319, %v5136
        %5180 = vst.msk [vmem:[#allocation3 + $0x278] sm:$0xff] %vm319, %v5148
        %v5181 = vld [vmem:[#allocation3] sm:$0xff]
        %v5182 = vld [vmem:[#allocation3 + $0x8] sm:$0xff]
        %v5183 = vld [vmem:[#allocation3 + $0x10] sm:$0xff]
        %v5184 = vld [vmem:[#allocation3 + $0x18] sm:$0xff]
        %v5185 = vld [vmem:[#allocation3 + $0x20] sm:$0xff]
        %v5186 = vld [vmem:[#allocation3 + $0x28] sm:$0xff]
        %v5187 = vld [vmem:[#allocation3 + $0x30] sm:$0xff]
        %v5188 = vld [vmem:[#allocation3 + $0x38] sm:$0xff]
        %v5189 = vld [vmem:[#allocation3 + $0x40] sm:$0xff]
        %v5190 = vld [vmem:[#allocation3 + $0x48] sm:$0xff]
        %v5191 = vld [vmem:[#allocation3 + $0x50] sm:$0xff]
        %v5192 = vld [vmem:[#allocation3 + $0x58] sm:$0xff]
        %v5193 = vld [vmem:[#allocation3 + $0x60] sm:$0xff]
        %v5194 = vld [vmem:[#allocation3 + $0x68] sm:$0xff]
        %v5195 = vld [vmem:[#allocation3 + $0x70] sm:$0xff]
        %v5196 = vld [vmem:[#allocation3 + $0x78] sm:$0xff]
        %v5197 = vld [vmem:[#allocation3 + $0x80] sm:$0xff]
        %v5198 = vld [vmem:[#allocation3 + $0x88] sm:$0xff]
        %v5199 = vld [vmem:[#allocation3 + $0x90] sm:$0xff]
        %v5200 = vld [vmem:[#allocation3 + $0x98] sm:$0xff]
        %v5201 = vld [vmem:[#allocation3 + $0xa0] sm:$0xff]
        %v5202 = vld [vmem:[#allocation3 + $0xa8] sm:$0xff]
        %v5203 = vld [vmem:[#allocation3 + $0xb0] sm:$0xff]
        %v5204 = vld [vmem:[#allocation3 + $0xb8] sm:$0xff]
        %v5205 = vld [vmem:[#allocation3 + $0xc0] sm:$0xff]
        %v5206 = vld [vmem:[#allocation3 + $0xc8] sm:$0xff]
        %v5207 = vld [vmem:[#allocation3 + $0xd0] sm:$0xff]
        %v5208 = vld [vmem:[#allocation3 + $0xd8] sm:$0xff]
        %v5209 = vld [vmem:[#allocation3 + $0xe0] sm:$0xff]
        %v5210 = vld [vmem:[#allocation3 + $0xe8] sm:$0xff]
        %v5211 = vld [vmem:[#allocation3 + $0xf0] sm:$0xff]
        %v5212 = vld [vmem:[#allocation3 + $0xf8] sm:$0xff]
        %v5213 = vld [vmem:[#allocation3 + $0x100] sm:$0xff]
        %v5214 = vld [vmem:[#allocation3 + $0x108] sm:$0xff]
        %v5215 = vld [vmem:[#allocation3 + $0x110] sm:$0xff]
        %v5216 = vld [vmem:[#allocation3 + $0x118] sm:$0xff]
        %v5217 = vld [vmem:[#allocation3 + $0x120] sm:$0xff]
        %v5218 = vld [vmem:[#allocation3 + $0x128] sm:$0xff]
        %v5219 = vld [vmem:[#allocation3 + $0x130] sm:$0xff]
        %v5220 = vld [vmem:[#allocation3 + $0x138] sm:$0xff]
        %v5221 = vld [vmem:[#allocation3 + $0x140] sm:$0xff]
        %v5222 = vld [vmem:[#allocation3 + $0x148] sm:$0xff]
        %v5223 = vld [vmem:[#allocation3 + $0x150] sm:$0xff]
        %v5224 = vld [vmem:[#allocation3 + $0x158] sm:$0xff]
        %v5225 = vld [vmem:[#allocation3 + $0x160] sm:$0xff]
        %v5226 = vld [vmem:[#allocation3 + $0x168] sm:$0xff]
        %v5227 = vld [vmem:[#allocation3 + $0x170] sm:$0xff]
        %v5228 = vld [vmem:[#allocation3 + $0x178] sm:$0xff]
        %v5229 = vld [vmem:[#allocation3 + $0x180] sm:$0xff]
        %v5230 = vld [vmem:[#allocation3 + $0x188] sm:$0xff]
        %v5231 = vld [vmem:[#allocation3 + $0x190] sm:$0xff]
        %v5232 = vld [vmem:[#allocation3 + $0x198] sm:$0xff]
        %v5233 = vld [vmem:[#allocation3 + $0x1a0] sm:$0xff]
        %v5234 = vld [vmem:[#allocation3 + $0x1a8] sm:$0xff]
        %v5235 = vld [vmem:[#allocation3 + $0x1b0] sm:$0xff]
        %v5236 = vld [vmem:[#allocation3 + $0x1b8] sm:$0xff]
        %v5237 = vld [vmem:[#allocation3 + $0x1c0] sm:$0xff]
        %v5238 = vld [vmem:[#allocation3 + $0x1c8] sm:$0xff]
        %v5239 = vld [vmem:[#allocation3 + $0x1d0] sm:$0xff]
        %v5240 = vld [vmem:[#allocation3 + $0x1d8] sm:$0xff]
        %v5241 = vld [vmem:[#allocation3 + $0x1e0] sm:$0xff]
        %v5242 = vld [vmem:[#allocation3 + $0x1e8] sm:$0xff]
        %v5243 = vld [vmem:[#allocation3 + $0x1f0] sm:$0xff]
        %v5244 = vld [vmem:[#allocation3 + $0x1f8] sm:$0xff]
        %v5245 = vld [vmem:[#allocation3 + $0x200] sm:$0xff]
        %v5246 = vld [vmem:[#allocation3 + $0x208] sm:$0xff]
        %v5247 = vld [vmem:[#allocation3 + $0x210] sm:$0xff]
        %v5248 = vld [vmem:[#allocation3 + $0x218] sm:$0xff]
        %v5249 = vld [vmem:[#allocation3 + $0x220] sm:$0xff]
        %v5250 = vld [vmem:[#allocation3 + $0x228] sm:$0xff]
        %v5251 = vld [vmem:[#allocation3 + $0x230] sm:$0xff]
        %v5252 = vld [vmem:[#allocation3 + $0x238] sm:$0xff]
        %v5253 = vld [vmem:[#allocation3 + $0x240] sm:$0xff]
        %v5254 = vld [vmem:[#allocation3 + $0x248] sm:$0xff]
        %v5255 = vld [vmem:[#allocation3 + $0x250] sm:$0xff]
        %v5256 = vld [vmem:[#allocation3 + $0x258] sm:$0xff]
        %v5257 = vld [vmem:[#allocation3 + $0x260] sm:$0xff]
        %v5258 = vld [vmem:[#allocation3 + $0x268] sm:$0xff]
        %v5259 = vld [vmem:[#allocation3 + $0x270] sm:$0xff]
        %v5260 = vld [vmem:[#allocation3 + $0x278] sm:$0xff]
        %v5261 = vld [vmem:[%s3] sm:$0xf]
        %v5262 = vld [vmem:[%s3 + $0x4] sm:$0xf]
        %v5263 = vld [vmem:[%s3 + $0x8] sm:$0xf]
        %v5264 = vld [vmem:[%s3 + $0xc] sm:$0xf]
        %v5265 = vld [vmem:[%s3 + $0x10] sm:$0xf]
        %v5266 = vld [vmem:[%s3 + $0x14] sm:$0xf]
        %v5267 = vld [vmem:[%s3 + $0x18] sm:$0xf]
        %v5268 = vld [vmem:[%s3 + $0x1c] sm:$0xf]
        %v5269 = vld [vmem:[%s3 + $0x20] sm:$0xf]
        %v5270 = vld [vmem:[%s3 + $0x24] sm:$0xf]
        %v5271 = vld [vmem:[%s3 + $0x28] sm:$0xf]
        %v5272 = vld [vmem:[%s3 + $0x2c] sm:$0xf]
        %v5273 = vld [vmem:[%s3 + $0x30] sm:$0xf]
        %v5274 = vld [vmem:[%s3 + $0x34] sm:$0xf]
        %v5275 = vld [vmem:[%s3 + $0x38] sm:$0xf]
        %v5276 = vld [vmem:[%s3 + $0x3c] sm:$0xf]
        %v5277 = vld [vmem:[%s3 + $0x40] sm:$0xf]
        %v5278 = vld [vmem:[%s3 + $0x44] sm:$0xf]
        %v5279 = vld [vmem:[%s3 + $0x48] sm:$0xf]
        %v5280 = vld [vmem:[%s3 + $0x4c] sm:$0xf]
        %v5281 = vld [vmem:[%s3 + $0x50] sm:$0xf]
        %v5282 = vld [vmem:[%s3 + $0x54] sm:$0xf]
        %v5283 = vld [vmem:[%s3 + $0x58] sm:$0xf]
        %v5284 = vld [vmem:[%s3 + $0x5c] sm:$0xf]
        %v5285 = vld [vmem:[%s3 + $0x60] sm:$0xf]
        %v5286 = vld [vmem:[%s3 + $0x64] sm:$0xf]
        %v5287 = vld [vmem:[%s3 + $0x68] sm:$0xf]
        %v5288 = vld [vmem:[%s3 + $0x6c] sm:$0xf]
        %v5289 = vld [vmem:[%s3 + $0x70] sm:$0xf]
        %v5290 = vld [vmem:[%s3 + $0x74] sm:$0xf]
        %v5291 = vld [vmem:[%s3 + $0x78] sm:$0xf]
        %v5292 = vld [vmem:[%s3 + $0x7c] sm:$0xf]
        %v5293 = vld [vmem:[%s3 + $0x80] sm:$0xf]
        %v5294 = vld [vmem:[%s3 + $0x84] sm:$0xf]
        %v5295 = vld [vmem:[%s3 + $0x88] sm:$0xf]
        %v5296 = vld [vmem:[%s3 + $0x8c] sm:$0xf]
        %v5297 = vld [vmem:[%s3 + $0x90] sm:$0xf]
        %v5298 = vld [vmem:[%s3 + $0x94] sm:$0xf]
        %v5299 = vld [vmem:[%s3 + $0x98] sm:$0xf]
        %v5300 = vld [vmem:[%s3 + $0x9c] sm:$0xf]
        %v5301 = vld [vmem:[%s3 + $0xa0] sm:$0xf]
        %v5302 = vld [vmem:[%s3 + $0xa4] sm:$0xf]
        %v5303 = vld [vmem:[%s3 + $0xa8] sm:$0xf]
        %v5304 = vld [vmem:[%s3 + $0xac] sm:$0xf]
        %v5305 = vld [vmem:[%s3 + $0xb0] sm:$0xf]
        %v5306 = vld [vmem:[%s3 + $0xb4] sm:$0xf]
        %v5307 = vld [vmem:[%s3 + $0xb8] sm:$0xf]
        %v5308 = vld [vmem:[%s3 + $0xbc] sm:$0xf]
        %v5309 = vld [vmem:[%s3 + $0xc0] sm:$0xf]
        %v5310 = vld [vmem:[%s3 + $0xc4] sm:$0xf]
        %v5311 = vld [vmem:[%s3 + $0xc8] sm:$0xf]
        %v5312 = vld [vmem:[%s3 + $0xcc] sm:$0xf]
        %v5313 = vld [vmem:[%s3 + $0xd0] sm:$0xf]
        %v5314 = vld [vmem:[%s3 + $0xd4] sm:$0xf]
        %v5315 = vld [vmem:[%s3 + $0xd8] sm:$0xf]
        %v5316 = vld [vmem:[%s3 + $0xdc] sm:$0xf]
        %v5317 = vld [vmem:[%s3 + $0xe0] sm:$0xf]
        %v5318 = vld [vmem:[%s3 + $0xe4] sm:$0xf]
        %v5319 = vld [vmem:[%s3 + $0xe8] sm:$0xf]
        %v5320 = vld [vmem:[%s3 + $0xec] sm:$0xf]
        %v5321 = vld [vmem:[%s3 + $0xf0] sm:$0xf]
        %v5322 = vld [vmem:[%s3 + $0xf4] sm:$0xf]
        %v5323 = vld [vmem:[%s3 + $0xf8] sm:$0xf]
        %v5324 = vld [vmem:[%s3 + $0xfc] sm:$0xf]
        %v5325 = vld [vmem:[%s3 + $0x100] sm:$0xf]
        %v5326 = vld [vmem:[%s3 + $0x104] sm:$0xf]
        %v5327 = vld [vmem:[%s3 + $0x108] sm:$0xf]
        %v5328 = vld [vmem:[%s3 + $0x10c] sm:$0xf]
        %v5329 = vld [vmem:[%s3 + $0x110] sm:$0xf]
        %v5330 = vld [vmem:[%s3 + $0x114] sm:$0xf]
        %v5331 = vld [vmem:[%s3 + $0x118] sm:$0xf]
        %v5332 = vld [vmem:[%s3 + $0x11c] sm:$0xf]
        %v5333 = vld [vmem:[%s4] sm:$0x1]
        %v5335 = vlaneseq
        %v5336 = vshrl.u32 %v5335, 7
        %v5337 = vsub.s32 0, %v5336
        %v5338 = vrot.slane %v5333, %v5337
        %v5412 = vunpack.c.l.b16 %v5261
        %v5413 = vunpack.c.l.b16 %v5262
        %v5414 = vunpack.c.l.b16 %v5263
        %v5415 = vunpack.c.l.b16 %v5264
        %v5416 = vunpack.c.l.b16 %v5265
        %v5417 = vunpack.c.l.b16 %v5266
        %v5418 = vunpack.c.l.b16 %v5267
        %v5419 = vunpack.c.l.b16 %v5268
        %v5420 = vunpack.c.l.b16 %v5269
        %v5421 = vunpack.c.l.b16 %v5270
        %v5422 = vunpack.c.l.b16 %v5271
        %v5423 = vunpack.c.l.b16 %v5272
        %v5424 = vunpack.c.l.b16 %v5273
        %v5425 = vunpack.c.l.b16 %v5274
        %v5426 = vunpack.c.l.b16 %v5275
        %v5427 = vunpack.c.l.b16 %v5276
        %v5428 = vunpack.c.l.b16 %v5277
        %v5429 = vunpack.c.l.b16 %v5278
        %v5430 = vunpack.c.l.b16 %v5279
        %v5431 = vunpack.c.l.b16 %v5280
        %v5432 = vunpack.c.l.b16 %v5281
        %v5433 = vunpack.c.l.b16 %v5282
        %v5434 = vunpack.c.l.b16 %v5283
        %v5435 = vunpack.c.l.b16 %v5284
        %v5436 = vunpack.c.l.b16 %v5285
        %v5437 = vunpack.c.l.b16 %v5286
        %v5438 = vunpack.c.l.b16 %v5287
        %v5439 = vunpack.c.l.b16 %v5288
        %v5440 = vunpack.c.l.b16 %v5289
        %v5441 = vunpack.c.l.b16 %v5290
        %v5442 = vunpack.c.l.b16 %v5291
        %v5443 = vunpack.c.l.b16 %v5292
        %v5444 = vunpack.c.l.b16 %v5293
        %v5445 = vunpack.c.l.b16 %v5294
        %v5446 = vunpack.c.l.b16 %v5295
        %v5447 = vunpack.c.l.b16 %v5296
        %v5448 = vunpack.c.l.b16 %v5297
        %v5449 = vunpack.c.l.b16 %v5298
        %v5450 = vunpack.c.l.b16 %v5299
        %v5451 = vunpack.c.l.b16 %v5300
        %v5452 = vunpack.c.l.b16 %v5301
        %v5453 = vunpack.c.l.b16 %v5302
        %v5454 = vunpack.c.l.b16 %v5303
        %v5455 = vunpack.c.l.b16 %v5304
        %v5456 = vunpack.c.l.b16 %v5305
        %v5457 = vunpack.c.l.b16 %v5306
        %v5458 = vunpack.c.l.b16 %v5307
        %v5459 = vunpack.c.l.b16 %v5308
        %v5460 = vunpack.c.l.b16 %v5309
        %v5461 = vunpack.c.l.b16 %v5310
        %v5462 = vunpack.c.l.b16 %v5311
        %v5463 = vunpack.c.l.b16 %v5312
        %v5464 = vunpack.c.l.b16 %v5313
        %v5465 = vunpack.c.l.b16 %v5314
        %v5466 = vunpack.c.l.b16 %v5315
        %v5467 = vunpack.c.l.b16 %v5316
        %v5468 = vunpack.c.l.b16 %v5317
        %v5469 = vunpack.c.l.b16 %v5318
        %v5470 = vunpack.c.l.b16 %v5319
        %v5471 = vunpack.c.l.b16 %v5320
        %v5472 = vunpack.c.l.b16 %v5321
        %v5473 = vunpack.c.l.b16 %v5322
        %v5474 = vunpack.c.l.b16 %v5323
        %v5475 = vunpack.c.l.b16 %v5324
        %v5476 = vunpack.c.l.b16 %v5325
        %v5477 = vunpack.c.l.b16 %v5326
        %v5478 = vunpack.c.l.b16 %v5327
        %v5479 = vunpack.c.l.b16 %v5328
        %v5480 = vunpack.c.l.b16 %v5329
        %v5481 = vunpack.c.l.b16 %v5330
        %v5482 = vunpack.c.l.b16 %v5331
        %v5483 = vunpack.c.l.b16 %v5332
        %v5484 = vpack.c.b16 %v5413, %v5412
        %v5485 = vpack.c.b16 %v5415, %v5414
        %v5486 = vpack.c.b16 %v5417, %v5416
        %v5487 = vpack.c.b16 %v5419, %v5418
        %v5488 = vpack.c.b16 %v5421, %v5420
        %v5489 = vpack.c.b16 %v5423, %v5422
        %v5490 = vpack.c.b16 %v5425, %v5424
        %v5491 = vpack.c.b16 %v5427, %v5426
        %v5492 = vpack.c.b16 %v5429, %v5428
        %v5493 = vpack.c.b16 %v5431, %v5430
        %v5494 = vpack.c.b16 %v5433, %v5432
        %v5495 = vpack.c.b16 %v5435, %v5434
        %v5496 = vpack.c.b16 %v5437, %v5436
        %v5497 = vpack.c.b16 %v5439, %v5438
        %v5498 = vpack.c.b16 %v5441, %v5440
        %v5499 = vpack.c.b16 %v5443, %v5442
        %v5500 = vpack.c.b16 %v5445, %v5444
        %v5501 = vpack.c.b16 %v5447, %v5446
        %v5502 = vpack.c.b16 %v5449, %v5448
        %v5503 = vpack.c.b16 %v5451, %v5450
        %v5504 = vpack.c.b16 %v5453, %v5452
        %v5505 = vpack.c.b16 %v5455, %v5454
        %v5506 = vpack.c.b16 %v5457, %v5456
        %v5507 = vpack.c.b16 %v5459, %v5458
        %v5508 = vpack.c.b16 %v5461, %v5460
        %v5509 = vpack.c.b16 %v5463, %v5462
        %v5510 = vpack.c.b16 %v5465, %v5464
        %v5511 = vpack.c.b16 %v5467, %v5466
        %v5512 = vpack.c.b16 %v5469, %v5468
        %v5513 = vpack.c.b16 %v5471, %v5470
        %v5514 = vpack.c.b16 %v5473, %v5472
        %v5515 = vpack.c.b16 %v5475, %v5474
        %v5516 = vpack.c.b16 %v5477, %v5476
        %v5517 = vpack.c.b16 %v5479, %v5478
        %v5518 = vpack.c.b16 %v5481, %v5480
        %v5519 = vpack.c.b16 %v5483, %v5482
        %v5557 = vsel %vm319, %v5185, 0
        %v5560 = vsel %vm319, %v5190, 0
        %v5563 = vsel %vm319, %v5195, 0
        %v5566 = vsel %vm319, %v5200, 0
        %v5569 = vsel %vm319, %v5205, 0
        %v5572 = vsel %vm319, %v5210, 0
        %v5575 = vsel %vm319, %v5215, 0
        %v5578 = vsel %vm319, %v5220, 0
        %v5581 = vsel %vm319, %v5225, 0
        %v5584 = vsel %vm319, %v5230, 0
        %v5587 = vsel %vm319, %v5235, 0
        %v5590 = vsel %vm319, %v5240, 0
        %v5593 = vsel %vm319, %v5245, 0
        %v5596 = vsel %vm319, %v5250, 0
        %v5599 = vsel %vm319, %v5255, 0
        %v5602 = vsel %vm319, %v5260, 0
        %5604 = vmatprep.subr.bf16.mxu0 0
        %5605 = vmatpush1.bf16.msra.mxu0 %v5484
        %5606 = vmatprep.subr.bf16.mxu0 0
        %5607 = vmatpush1.bf16.msra.mxu0 %v5485
        %5608 = vmatprep.subr.bf16.mxu0 0
        %5609 = vmatpush1.bf16.msra.mxu0 %v5486
        %5610 = vmatprep.subr.bf16.mxu0 0
        %5611 = vmatpush1.bf16.msra.mxu0 %v5487
        %5612 = vmatprep.subr.bf16.mxu0 0
        %5613 = vmatpush1.bf16.msra.mxu0 %v5488
        %5614 = vmatprep.subr.bf16.mxu0 0
        %5615 = vmatpush1.bf16.msra.mxu0 %v5489
        %5616 = vmatprep.subr.bf16.mxu0 0
        %5617 = vmatpush1.bf16.msra.mxu0 %v5490
        %5618 = vmatprep.subr.bf16.mxu0 0
        %5619 = vmatpush1.bf16.msra.mxu0 %v5491
        %5620 = vmatprep.subr.bf16.mxu0 0
        %5621 = vmatpush1.bf16.msra.mxu0 %v5492
        %5622 = vmatprep.subr.bf16.mxu0 0
        %5623 = vmatpush1.bf16.msra.mxu0 %v5493
        %5624 = vmatprep.subr.bf16.mxu0 0
        %5625 = vmatpush1.bf16.msra.mxu0 %v5494
        %5626 = vmatprep.subr.bf16.mxu0 0
        %5627 = vmatpush1.bf16.msra.mxu0 %v5495
        %5628 = vmatprep.subr.bf16.mxu0 0
        %5629 = vmatpush1.bf16.msra.mxu0 %v5496
        %5630 = vmatprep.subr.bf16.mxu0 0
        %5631 = vmatpush1.bf16.msra.mxu0 %v5497
        %5632 = vmatprep.subr.bf16.mxu0 0
        %5633 = vmatpush1.bf16.msra.mxu0 %v5498
        %5634 = vmatprep.subr.bf16.mxu0 0
        %5635 = vmatpush1.bf16.msra.mxu0 %v5499
        %5636 = vmatprep.mubr.bf16.mxu0 %v5182
        %5637 = vmatmul.mubr.bf16.gmra.mrb[0].mxu0 %v5181
        %v5638 = vpop.f32.mrb[0].mxu0
        %v5639 = vadd.f32 %v5338, %v5638
        %v5640 = vpop.f32.mrb[0].mxu0
        %v5641 = vpop.f32.mrb[0].mxu0
        %v5642 = vadd.f32 %v5338, %v5641
        %v5643 = vpop.f32.mrb[0].mxu0
        %5644 = vmatprep.mubr.bf16.mxu0 %v5187
        %5645 = vmatmul.mubr.bf16.gmra.mrb[0].mxu0 %v5186
        %v5646 = vpop.f32.mrb[0].mxu0
        %v5647 = vadd.f32 %v5338, %v5646
        %v5648 = vpop.f32.mrb[0].mxu0
        %v5649 = vpop.f32.mrb[0].mxu0
        %v5650 = vadd.f32 %v5338, %v5649
        %v5651 = vpop.f32.mrb[0].mxu0
        %5652 = vmatprep.mubr.bf16.mxu0 %v5192
        %5653 = vmatmul.mubr.bf16.gmra.mrb[0].mxu0 %v5191
        %v5654 = vpop.f32.mrb[0].mxu0
        %v5655 = vadd.f32 %v5338, %v5654
        %v5656 = vpop.f32.mrb[0].mxu0
        %v5657 = vpop.f32.mrb[0].mxu0
        %v5658 = vadd.f32 %v5338, %v5657
        %v5659 = vpop.f32.mrb[0].mxu0
        %5660 = vmatprep.mubr.bf16.mxu0 %v5197
        %5661 = vmatmul.mubr.bf16.gmra.mrb[0].mxu0 %v5196
        %v5662 = vpop.f32.mrb[0].mxu0
        %v5663 = vadd.f32 %v5338, %v5662
        %v5664 = vpop.f32.mrb[0].mxu0
        %v5665 = vpop.f32.mrb[0].mxu0
        %v5666 = vadd.f32 %v5338, %v5665
        %v5667 = vpop.f32.mrb[0].mxu0
        %5668 = vmatprep.mubr.bf16.mxu0 %v5202
        %5669 = vmatmul.mubr.bf16.gmra.mrb[0].mxu0 %v5201
        %v5670 = vpop.f32.mrb[0].mxu0
        %v5671 = vadd.f32 %v5338, %v5670
        %v5672 = vpop.f32.mrb[0].mxu0
        %v5673 = vpop.f32.mrb[0].mxu0
        %v5674 = vadd.f32 %v5338, %v5673
        %v5675 = vpop.f32.mrb[0].mxu0
        %5676 = vmatprep.mubr.bf16.mxu0 %v5207
        %5677 = vmatmul.mubr.bf16.gmra.mrb[0].mxu0 %v5206
        %v5678 = vpop.f32.mrb[0].mxu0
        %v5679 = vadd.f32 %v5338, %v5678
        %v5680 = vpop.f32.mrb[0].mxu0
        %v5681 = vpop.f32.mrb[0].mxu0
        %v5682 = vadd.f32 %v5338, %v5681
        %v5683 = vpop.f32.mrb[0].mxu0
        %5684 = vmatprep.mubr.bf16.mxu0 %v5212
        %5685 = vmatmul.mubr.bf16.gmra.mrb[0].mxu0 %v5211
        %v5686 = vpop.f32.mrb[0].mxu0
        %v5687 = vadd.f32 %v5338, %v5686
        %v5688 = vpop.f32.mrb[0].mxu0
        %v5689 = vpop.f32.mrb[0].mxu0
        %v5690 = vadd.f32 %v5338, %v5689
        %v5691 = vpop.f32.mrb[0].mxu0
        %5692 = vmatprep.mubr.bf16.mxu0 %v5217
        %5693 = vmatmul.mubr.bf16.gmra.mrb[0].mxu0 %v5216
        %v5694 = vpop.f32.mrb[0].mxu0
        %v5695 = vadd.f32 %v5338, %v5694
        %v5696 = vpop.f32.mrb[0].mxu0
        %v5697 = vpop.f32.mrb[0].mxu0
        %v5698 = vadd.f32 %v5338, %v5697
        %v5699 = vpop.f32.mrb[0].mxu0
        %5700 = vmatprep.mubr.bf16.mxu0 %v5222
        %5701 = vmatmul.mubr.bf16.gmra.mrb[0].mxu0 %v5221
        %v5702 = vpop.f32.mrb[0].mxu0
        %v5703 = vadd.f32 %v5338, %v5702
        %v5704 = vpop.f32.mrb[0].mxu0
        %v5705 = vpop.f32.mrb[0].mxu0
        %v5706 = vadd.f32 %v5338, %v5705
        %v5707 = vpop.f32.mrb[0].mxu0
        %5708 = vmatprep.mubr.bf16.mxu0 %v5227
        %5709 = vmatmul.mubr.bf16.gmra.mrb[0].mxu0 %v5226
        %v5710 = vpop.f32.mrb[0].mxu0
        %v5711 = vadd.f32 %v5338, %v5710
        %v5712 = vpop.f32.mrb[0].mxu0
        %v5713 = vpop.f32.mrb[0].mxu0
        %v5714 = vadd.f32 %v5338, %v5713
        %v5715 = vpop.f32.mrb[0].mxu0
        %5716 = vmatprep.mubr.bf16.mxu0 %v5232
        %5717 = vmatmul.mubr.bf16.gmra.mrb[0].mxu0 %v5231
        %v5718 = vpop.f32.mrb[0].mxu0
        %v5719 = vadd.f32 %v5338, %v5718
        %v5720 = vpop.f32.mrb[0].mxu0
        %v5721 = vpop.f32.mrb[0].mxu0
        %v5722 = vadd.f32 %v5338, %v5721
        %v5723 = vpop.f32.mrb[0].mxu0
        %5724 = vmatprep.mubr.bf16.mxu0 %v5237
        %5725 = vmatmul.mubr.bf16.gmra.mrb[0].mxu0 %v5236
        %v5726 = vpop.f32.mrb[0].mxu0
        %v5727 = vadd.f32 %v5338, %v5726
        %v5728 = vpop.f32.mrb[0].mxu0
        %v5729 = vpop.f32.mrb[0].mxu0
        %v5730 = vadd.f32 %v5338, %v5729
        %v5731 = vpop.f32.mrb[0].mxu0
        %5732 = vmatprep.mubr.bf16.mxu0 %v5242
        %5733 = vmatmul.mubr.bf16.gmra.mrb[0].mxu0 %v5241
        %v5734 = vpop.f32.mrb[0].mxu0
        %v5735 = vadd.f32 %v5338, %v5734
        %v5736 = vpop.f32.mrb[0].mxu0
        %v5737 = vpop.f32.mrb[0].mxu0
        %v5738 = vadd.f32 %v5338, %v5737
        %v5739 = vpop.f32.mrb[0].mxu0
        %5740 = vmatprep.mubr.bf16.mxu0 %v5247
        %5741 = vmatmul.mubr.bf16.gmra.mrb[0].mxu0 %v5246
        %v5742 = vpop.f32.mrb[0].mxu0
        %v5743 = vadd.f32 %v5338, %v5742
        %v5744 = vpop.f32.mrb[0].mxu0
        %v5745 = vpop.f32.mrb[0].mxu0
        %v5746 = vadd.f32 %v5338, %v5745
        %v5747 = vpop.f32.mrb[0].mxu0
        %5748 = vmatprep.mubr.bf16.mxu0 %v5252
        %5749 = vmatmul.mubr.bf16.gmra.mrb[0].mxu0 %v5251
        %v5750 = vpop.f32.mrb[0].mxu0
        %v5751 = vadd.f32 %v5338, %v5750
        %v5752 = vpop.f32.mrb[0].mxu0
        %v5753 = vpop.f32.mrb[0].mxu0
        %v5754 = vadd.f32 %v5338, %v5753
        %v5755 = vpop.f32.mrb[0].mxu0
        %5756 = vmatprep.mubr.bf16.mxu0 %v5257
        %5757 = vmatmul.mubr.bf16.gmra.mrb[0].mxu0 %v5256
        %v5758 = vpop.f32.mrb[0].mxu0
        %v5759 = vadd.f32 %v5338, %v5758
        %v5760 = vpop.f32.mrb[0].mxu0
        %v5761 = vpop.f32.mrb[0].mxu0
        %v5762 = vadd.f32 %v5338, %v5761
        %v5763 = vpop.f32.mrb[0].mxu0
        %5764 = vdwg.mxu0
        %5765 = vmatprep.subr.bf16.mxu0 0
        %5766 = vmatpush1.bf16.msra.mxu0 %v5500
        %5767 = vmatprep.subr.bf16.mxu0 0
        %5768 = vmatpush1.bf16.msra.mxu0 %v5501
        %5769 = vmatprep.subr.bf16.mxu0 0
        %5770 = vmatpush1.bf16.msra.mxu0 %v5502
        %5771 = vmatprep.subr.bf16.mxu0 0
        %5772 = vmatpush1.bf16.msra.mxu0 %v5503
        %5773 = vmatprep.subr.bf16.mxu0 0
        %5774 = vmatpush1.bf16.msra.mxu0 %v5504
        %5775 = vmatprep.subr.bf16.mxu0 0
        %5776 = vmatpush1.bf16.msra.mxu0 %v5505
        %5777 = vmatprep.subr.bf16.mxu0 0
        %5778 = vmatpush1.bf16.msra.mxu0 %v5506
        %5779 = vmatprep.subr.bf16.mxu0 0
        %5780 = vmatpush1.bf16.msra.mxu0 %v5507
        %5781 = vmatprep.subr.bf16.mxu0 0
        %5782 = vmatpush1.bf16.msra.mxu0 %v5508
        %5783 = vmatprep.subr.bf16.mxu0 0
        %5784 = vmatpush1.bf16.msra.mxu0 %v5509
        %5785 = vmatprep.subr.bf16.mxu0 0
        %5786 = vmatpush1.bf16.msra.mxu0 %v5510
        %5787 = vmatprep.subr.bf16.mxu0 0
        %5788 = vmatpush1.bf16.msra.mxu0 %v5511
        %5789 = vmatprep.subr.bf16.mxu0 0
        %5790 = vmatpush1.bf16.msra.mxu0 %v5512
        %5791 = vmatprep.subr.bf16.mxu0 0
        %5792 = vmatpush1.bf16.msra.mxu0 %v5513
        %5793 = vmatprep.subr.bf16.mxu0 0
        %5794 = vmatpush1.bf16.msra.mxu0 %v5514
        %5795 = vmatprep.subr.bf16.mxu0 0
        %5796 = vmatpush1.bf16.msra.mxu0 %v5515
        %5797 = vmatprep.mubr.bf16.mxu0 %v5184
        %5798 = vmatmul.mubr.bf16.gmra.mrb[0].mxu0 %v5183
        %v5799 = vpop.f32.mrb[0].mxu0
        %v5800 = vadd.f32 %v5639, %v5799
        %v5801 = vpop.f32.mrb[0].mxu0
        %v5802 = vpop.f32.mrb[0].mxu0
        %v5803 = vadd.f32 %v5642, %v5802
        %v5804 = vpop.f32.mrb[0].mxu0
        %5805 = vmatprep.mubr.bf16.mxu0 %v5189
        %5806 = vmatmul.mubr.bf16.gmra.mrb[0].mxu0 %v5188
        %v5807 = vpop.f32.mrb[0].mxu0
        %v5808 = vadd.f32 %v5647, %v5807
        %v5809 = vpop.f32.mrb[0].mxu0
        %v5810 = vpop.f32.mrb[0].mxu0
        %v5811 = vadd.f32 %v5650, %v5810
        %v5812 = vpop.f32.mrb[0].mxu0
        %5813 = vmatprep.mubr.bf16.mxu0 %v5194
        %5814 = vmatmul.mubr.bf16.gmra.mrb[0].mxu0 %v5193
        %v5815 = vpop.f32.mrb[0].mxu0
        %v5816 = vadd.f32 %v5655, %v5815
        %v5817 = vpop.f32.mrb[0].mxu0
        %v5818 = vpop.f32.mrb[0].mxu0
        %v5819 = vadd.f32 %v5658, %v5818
        %v5820 = vpop.f32.mrb[0].mxu0
        %5821 = vmatprep.mubr.bf16.mxu0 %v5199
        %5822 = vmatmul.mubr.bf16.gmra.mrb[0].mxu0 %v5198
        %v5823 = vpop.f32.mrb[0].mxu0
        %v5824 = vadd.f32 %v5663, %v5823
        %v5825 = vpop.f32.mrb[0].mxu0
        %v5826 = vpop.f32.mrb[0].mxu0
        %v5827 = vadd.f32 %v5666, %v5826
        %v5828 = vpop.f32.mrb[0].mxu0
        %5829 = vmatprep.mubr.bf16.mxu0 %v5204
        %5830 = vmatmul.mubr.bf16.gmra.mrb[0].mxu0 %v5203
        %v5831 = vpop.f32.mrb[0].mxu0
        %v5832 = vadd.f32 %v5671, %v5831
        %v5833 = vpop.f32.mrb[0].mxu0
        %v5834 = vpop.f32.mrb[0].mxu0
        %v5835 = vadd.f32 %v5674, %v5834
        %v5836 = vpop.f32.mrb[0].mxu0
        %5837 = vmatprep.mubr.bf16.mxu0 %v5209
        %5838 = vmatmul.mubr.bf16.gmra.mrb[0].mxu0 %v5208
        %v5839 = vpop.f32.mrb[0].mxu0
        %v5840 = vadd.f32 %v5679, %v5839
        %v5841 = vpop.f32.mrb[0].mxu0
        %v5842 = vpop.f32.mrb[0].mxu0
        %v5843 = vadd.f32 %v5682, %v5842
        %v5844 = vpop.f32.mrb[0].mxu0
        %5845 = vmatprep.mubr.bf16.mxu0 %v5214
        %5846 = vmatmul.mubr.bf16.gmra.mrb[0].mxu0 %v5213
        %v5847 = vpop.f32.mrb[0].mxu0
        %v5848 = vadd.f32 %v5687, %v5847
        %v5849 = vpop.f32.mrb[0].mxu0
        %v5850 = vpop.f32.mrb[0].mxu0
        %v5851 = vadd.f32 %v5690, %v5850
        %v5852 = vpop.f32.mrb[0].mxu0
        %5853 = vmatprep.mubr.bf16.mxu0 %v5219
        %5854 = vmatmul.mubr.bf16.gmra.mrb[0].mxu0 %v5218
        %v5855 = vpop.f32.mrb[0].mxu0
        %v5856 = vadd.f32 %v5695, %v5855
        %v5857 = vpop.f32.mrb[0].mxu0
        %v5858 = vpop.f32.mrb[0].mxu0
        %v5859 = vadd.f32 %v5698, %v5858
        %v5860 = vpop.f32.mrb[0].mxu0
        %5861 = vmatprep.mubr.bf16.mxu0 %v5224
        %5862 = vmatmul.mubr.bf16.gmra.mrb[0].mxu0 %v5223
        %v5863 = vpop.f32.mrb[0].mxu0
        %v5864 = vadd.f32 %v5703, %v5863
        %v5865 = vpop.f32.mrb[0].mxu0
        %v5866 = vpop.f32.mrb[0].mxu0
        %v5867 = vadd.f32 %v5706, %v5866
        %v5868 = vpop.f32.mrb[0].mxu0
        %5869 = vmatprep.mubr.bf16.mxu0 %v5229
        %5870 = vmatmul.mubr.bf16.gmra.mrb[0].mxu0 %v5228
        %v5871 = vpop.f32.mrb[0].mxu0
        %v5872 = vadd.f32 %v5711, %v5871
        %v5873 = vpop.f32.mrb[0].mxu0
        %v5874 = vpop.f32.mrb[0].mxu0
        %v5875 = vadd.f32 %v5714, %v5874
        %v5876 = vpop.f32.mrb[0].mxu0
        %5877 = vmatprep.mubr.bf16.mxu0 %v5234
        %5878 = vmatmul.mubr.bf16.gmra.mrb[0].mxu0 %v5233
        %v5879 = vpop.f32.mrb[0].mxu0
        %v5880 = vadd.f32 %v5719, %v5879
        %v5881 = vpop.f32.mrb[0].mxu0
        %v5882 = vpop.f32.mrb[0].mxu0
        %v5883 = vadd.f32 %v5722, %v5882
        %v5884 = vpop.f32.mrb[0].mxu0
        %5885 = vmatprep.mubr.bf16.mxu0 %v5239
        %5886 = vmatmul.mubr.bf16.gmra.mrb[0].mxu0 %v5238
        %v5887 = vpop.f32.mrb[0].mxu0
        %v5888 = vadd.f32 %v5727, %v5887
        %v5889 = vpop.f32.mrb[0].mxu0
        %v5890 = vpop.f32.mrb[0].mxu0
        %v5891 = vadd.f32 %v5730, %v5890
        %v5892 = vpop.f32.mrb[0].mxu0
        %5893 = vmatprep.mubr.bf16.mxu0 %v5244
        %5894 = vmatmul.mubr.bf16.gmra.mrb[0].mxu0 %v5243
        %v5895 = vpop.f32.mrb[0].mxu0
        %v5896 = vadd.f32 %v5735, %v5895
        %v5897 = vpop.f32.mrb[0].mxu0
        %v5898 = vpop.f32.mrb[0].mxu0
        %v5899 = vadd.f32 %v5738, %v5898
        %v5900 = vpop.f32.mrb[0].mxu0
        %5901 = vmatprep.mubr.bf16.mxu0 %v5249
        %5902 = vmatmul.mubr.bf16.gmra.mrb[0].mxu0 %v5248
        %v5903 = vpop.f32.mrb[0].mxu0
        %v5904 = vadd.f32 %v5743, %v5903
        %v5905 = vpop.f32.mrb[0].mxu0
        %v5906 = vpop.f32.mrb[0].mxu0
        %v5907 = vadd.f32 %v5746, %v5906
        %v5908 = vpop.f32.mrb[0].mxu0
        %5909 = vmatprep.mubr.bf16.mxu0 %v5254
        %5910 = vmatmul.mubr.bf16.gmra.mrb[0].mxu0 %v5253
        %v5911 = vpop.f32.mrb[0].mxu0
        %v5912 = vadd.f32 %v5751, %v5911
        %v5913 = vpop.f32.mrb[0].mxu0
        %v5914 = vpop.f32.mrb[0].mxu0
        %v5915 = vadd.f32 %v5754, %v5914
        %v5916 = vpop.f32.mrb[0].mxu0
        %5917 = vmatprep.mubr.bf16.mxu0 %v5259
        %5918 = vmatmul.mubr.bf16.gmra.mrb[0].mxu0 %v5258
        %v5919 = vpop.f32.mrb[0].mxu0
        %v5920 = vadd.f32 %v5759, %v5919
        %v5921 = vpop.f32.mrb[0].mxu0
        %v5922 = vpop.f32.mrb[0].mxu0
        %v5923 = vadd.f32 %v5762, %v5922
        %v5924 = vpop.f32.mrb[0].mxu0
        %5925 = vdwg.mxu0
        %5926 = vmatprep.subr.bf16.mxu0 0
        %5927 = vmatpush1.bf16.msra.mxu0 %v5516
        %5928 = vmatprep.subr.bf16.mxu0 0
        %5929 = vmatpush1.bf16.msra.mxu0 %v5517
        %5930 = vmatprep.subr.bf16.mxu0 0
        %5931 = vmatpush1.bf16.msra.mxu0 %v5518
        %5932 = vmatprep.subr.bf16.mxu0 0
        %5933 = vmatpush1.bf16.msra.mxu0 %v5519
        %5934 = vmatprep.subr.bf16.mxu0 0
        %5935 = vmatpush1.bf16.msra.mxu0 0
        %5936 = vmatprep.subr.bf16.mxu0 0
        %5937 = vmatpush1.bf16.msra.mxu0 0
        %5938 = vmatprep.subr.bf16.mxu0 0
        %5939 = vmatpush1.bf16.msra.mxu0 0
        %5940 = vmatprep.subr.bf16.mxu0 0
        %5941 = vmatpush1.bf16.msra.mxu0 0
        %5942 = vmatprep.subr.bf16.mxu0 0
        %5943 = vmatpush1.bf16.msra.mxu0 0
        %5944 = vmatprep.subr.bf16.mxu0 0
        %5945 = vmatpush1.bf16.msra.mxu0 0
        %5946 = vmatprep.subr.bf16.mxu0 0
        %5947 = vmatpush1.bf16.msra.mxu0 0
        %5948 = vmatprep.subr.bf16.mxu0 0
        %5949 = vmatpush1.bf16.msra.mxu0 0
        %5950 = vmatprep.subr.bf16.mxu0 0
        %5951 = vmatpush1.bf16.msra.mxu0 0
        %5952 = vmatprep.subr.bf16.mxu0 0
        %5953 = vmatpush1.bf16.msra.mxu0 0
        %5954 = vmatprep.subr.bf16.mxu0 0
        %5955 = vmatpush1.bf16.msra.mxu0 0
        %5956 = vmatprep.subr.bf16.mxu0 0
        %5957 = vmatpush1.bf16.msra.mxu0 0
        %5958 = vmatprep.mubr.bf16.mxu0 0
        %5959 = vmatmul.mubr.bf16.gmra.mrb[0].mxu0 %v5557
        %v5960 = vpop.f32.mrb[0].mxu0
        %v5961 = vadd.f32 %v5800, %v5960
        %v5962 = vpop.f32.mrb[0].mxu0
        %v5963 = vpop.f32.mrb[0].mxu0
        %v5964 = vadd.f32 %v5803, %v5963
        %v5965 = vpop.f32.mrb[0].mxu0
        %5966 = vmatprep.mubr.bf16.mxu0 0
        %5967 = vmatmul.mubr.bf16.gmra.mrb[0].mxu0 %v5560
        %v5968 = vpop.f32.mrb[0].mxu0
        %v5969 = vadd.f32 %v5808, %v5968
        %v5970 = vpop.f32.mrb[0].mxu0
        %v5971 = vpop.f32.mrb[0].mxu0
        %v5972 = vadd.f32 %v5811, %v5971
        %v5973 = vpop.f32.mrb[0].mxu0
        %5974 = vmatprep.mubr.bf16.mxu0 0
        %5975 = vmatmul.mubr.bf16.gmra.mrb[0].mxu0 %v5563
        %v5976 = vpop.f32.mrb[0].mxu0
        %v5977 = vadd.f32 %v5816, %v5976
        %v5978 = vpop.f32.mrb[0].mxu0
        %v5979 = vpop.f32.mrb[0].mxu0
        %v5980 = vadd.f32 %v5819, %v5979
        %v5981 = vpop.f32.mrb[0].mxu0
        %5982 = vmatprep.mubr.bf16.mxu0 0
        %5983 = vmatmul.mubr.bf16.gmra.mrb[0].mxu0 %v5566
        %v5984 = vpop.f32.mrb[0].mxu0
        %v5985 = vadd.f32 %v5824, %v5984
        %v5986 = vpop.f32.mrb[0].mxu0
        %v5987 = vpop.f32.mrb[0].mxu0
        %v5988 = vadd.f32 %v5827, %v5987
        %v5989 = vpop.f32.mrb[0].mxu0
        %5990 = vmatprep.mubr.bf16.mxu0 0
        %5991 = vmatmul.mubr.bf16.gmra.mrb[0].mxu0 %v5569
        %v5992 = vpop.f32.mrb[0].mxu0
        %v5993 = vadd.f32 %v5832, %v5992
        %v5994 = vpop.f32.mrb[0].mxu0
        %v5995 = vpop.f32.mrb[0].mxu0
        %v5996 = vadd.f32 %v5835, %v5995
        %v5997 = vpop.f32.mrb[0].mxu0
        %5998 = vmatprep.mubr.bf16.mxu0 0
        %5999 = vmatmul.mubr.bf16.gmra.mrb[0].mxu0 %v5572
        %v6000 = vpop.f32.mrb[0].mxu0
        %v6001 = vadd.f32 %v5840, %v6000
        %v6002 = vpop.f32.mrb[0].mxu0
        %v6003 = vpop.f32.mrb[0].mxu0
        %v6004 = vadd.f32 %v5843, %v6003
        %v6005 = vpop.f32.mrb[0].mxu0
        %6006 = vmatprep.mubr.bf16.mxu0 0
        %6007 = vmatmul.mubr.bf16.gmra.mrb[0].mxu0 %v5575
        %v6008 = vpop.f32.mrb[0].mxu0
        %v6009 = vadd.f32 %v5848, %v6008
        %v6010 = vpop.f32.mrb[0].mxu0
        %v6011 = vpop.f32.mrb[0].mxu0
        %v6012 = vadd.f32 %v5851, %v6011
        %v6013 = vpop.f32.mrb[0].mxu0
        %6014 = vmatprep.mubr.bf16.mxu0 0
        %6015 = vmatmul.mubr.bf16.gmra.mrb[0].mxu0 %v5578
        %v6016 = vpop.f32.mrb[0].mxu0
        %v6017 = vadd.f32 %v5856, %v6016
        %v6018 = vpop.f32.mrb[0].mxu0
        %v6019 = vpop.f32.mrb[0].mxu0
        %v6020 = vadd.f32 %v5859, %v6019
        %v6021 = vpop.f32.mrb[0].mxu0
        %6022 = vmatprep.mubr.bf16.mxu0 0
        %6023 = vmatmul.mubr.bf16.gmra.mrb[0].mxu0 %v5581
        %v6024 = vpop.f32.mrb[0].mxu0
        %v6025 = vadd.f32 %v5864, %v6024
        %v6026 = vpop.f32.mrb[0].mxu0
        %v6027 = vpop.f32.mrb[0].mxu0
        %v6028 = vadd.f32 %v5867, %v6027
        %v6029 = vpop.f32.mrb[0].mxu0
        %6030 = vmatprep.mubr.bf16.mxu0 0
        %6031 = vmatmul.mubr.bf16.gmra.mrb[0].mxu0 %v5584
        %v6032 = vpop.f32.mrb[0].mxu0
        %v6033 = vadd.f32 %v5872, %v6032
        %v6034 = vpop.f32.mrb[0].mxu0
        %v6035 = vpop.f32.mrb[0].mxu0
        %v6036 = vadd.f32 %v5875, %v6035
        %v6037 = vpop.f32.mrb[0].mxu0
        %6038 = vmatprep.mubr.bf16.mxu0 0
        %6039 = vmatmul.mubr.bf16.gmra.mrb[0].mxu0 %v5587
        %v6040 = vpop.f32.mrb[0].mxu0
        %v6041 = vadd.f32 %v5880, %v6040
        %v6042 = vpop.f32.mrb[0].mxu0
        %v6043 = vpop.f32.mrb[0].mxu0
        %v6044 = vadd.f32 %v5883, %v6043
        %v6045 = vpop.f32.mrb[0].mxu0
        %6046 = vmatprep.mubr.bf16.mxu0 0
        %6047 = vmatmul.mubr.bf16.gmra.mrb[0].mxu0 %v5590
        %v6048 = vpop.f32.mrb[0].mxu0
        %v6049 = vadd.f32 %v5888, %v6048
        %v6050 = vpop.f32.mrb[0].mxu0
        %v6051 = vpop.f32.mrb[0].mxu0
        %v6052 = vadd.f32 %v5891, %v6051
        %v6053 = vpop.f32.mrb[0].mxu0
        %6054 = vmatprep.mubr.bf16.mxu0 0
        %6055 = vmatmul.mubr.bf16.gmra.mrb[0].mxu0 %v5593
        %v6056 = vpop.f32.mrb[0].mxu0
        %v6057 = vadd.f32 %v5896, %v6056
        %v6058 = vpop.f32.mrb[0].mxu0
        %v6059 = vpop.f32.mrb[0].mxu0
        %v6060 = vadd.f32 %v5899, %v6059
        %v6061 = vpop.f32.mrb[0].mxu0
        %6062 = vmatprep.mubr.bf16.mxu0 0
        %6063 = vmatmul.mubr.bf16.gmra.mrb[0].mxu0 %v5596
        %v6064 = vpop.f32.mrb[0].mxu0
        %v6065 = vadd.f32 %v5904, %v6064
        %v6066 = vpop.f32.mrb[0].mxu0
        %v6067 = vpop.f32.mrb[0].mxu0
        %v6068 = vadd.f32 %v5907, %v6067
        %v6069 = vpop.f32.mrb[0].mxu0
        %6070 = vmatprep.mubr.bf16.mxu0 0
        %6071 = vmatmul.mubr.bf16.gmra.mrb[0].mxu0 %v5599
        %v6072 = vpop.f32.mrb[0].mxu0
        %v6073 = vadd.f32 %v5912, %v6072
        %v6074 = vpop.f32.mrb[0].mxu0
        %v6075 = vpop.f32.mrb[0].mxu0
        %v6076 = vadd.f32 %v5915, %v6075
        %v6077 = vpop.f32.mrb[0].mxu0
        %6078 = vmatprep.mubr.bf16.mxu0 0
        %6079 = vmatmul.mubr.bf16.gmra.mrb[0].mxu0 %v5602
        %v6080 = vpop.f32.mrb[0].mxu0
        %v6081 = vadd.f32 %v5920, %v6080
        %v6082 = vpop.f32.mrb[0].mxu0
        %v6083 = vpop.f32.mrb[0].mxu0
        %v6084 = vadd.f32 %v5923, %v6083
        %v6085 = vpop.f32.mrb[0].mxu0
        %6086 = vdwg.mxu0
        %v6087 = vpack.c.bf16 %v5964, %v5961
        %v6088 = vpack.c.bf16 %v5972, %v5969
        %v6089 = vpack.c.bf16 %v5980, %v5977
        %v6090 = vpack.c.bf16 %v5988, %v5985
        %v6091 = vpack.c.bf16 %v5996, %v5993
        %v6092 = vpack.c.bf16 %v6004, %v6001
        %v6093 = vpack.c.bf16 %v6012, %v6009
        %v6094 = vpack.c.bf16 %v6020, %v6017
        %v6095 = vpack.c.bf16 %v6028, %v6025
        %v6096 = vpack.c.bf16 %v6036, %v6033
        %v6097 = vpack.c.bf16 %v6044, %v6041
        %v6098 = vpack.c.bf16 %v6052, %v6049
        %v6099 = vpack.c.bf16 %v6060, %v6057
        %v6100 = vpack.c.bf16 %v6068, %v6065
        %v6101 = vpack.c.bf16 %v6076, %v6073
        %v6102 = vpack.c.bf16 %v6084, %v6081
        %v6103 = vld [vmem:[%s5] sm:$0xf]
        %v6104 = vld [vmem:[%s5 + $0x4] sm:$0xf]
        %v6105 = vld [vmem:[%s5 + $0x8] sm:$0xf]
        %v6106 = vld [vmem:[%s5 + $0xc] sm:$0xf]
        %v6107 = vld [vmem:[%s5 + $0x10] sm:$0xf]
        %v6108 = vld [vmem:[%s5 + $0x14] sm:$0xf]
        %v6109 = vld [vmem:[%s5 + $0x18] sm:$0xf]
        %v6110 = vld [vmem:[%s5 + $0x1c] sm:$0xf]
        %v6111 = vld [vmem:[%s6] sm:$0x1]
        %v6113 = vlaneseq
        %v6114 = vshrl.u32 %v6113, 7
        %v6115 = vsub.s32 0, %v6114
        %v6116 = vrot.slane %v6111, %v6115
        %v6126 = vunpack.c.l.b16 %v6103
        %v6127 = vunpack.c.l.b16 %v6104
        %v6128 = vunpack.c.l.b16 %v6105
        %v6129 = vunpack.c.l.b16 %v6106
        %v6130 = vunpack.c.l.b16 %v6107
        %v6131 = vunpack.c.l.b16 %v6108
        %v6132 = vunpack.c.l.b16 %v6109
        %v6133 = vunpack.c.l.b16 %v6110
        %v6134 = vpack.c.b16 %v6127, %v6126
        %v6135 = vpack.c.b16 %v6129, %v6128
        %v6136 = vpack.c.b16 %v6131, %v6130
        %v6137 = vpack.c.b16 %v6133, %v6132
        %v6143 = vsel %vm319, %v6087, 0
        %v6146 = vsel %vm319, %v6088, 0
        %v6149 = vsel %vm319, %v6089, 0
        %v6152 = vsel %vm319, %v6090, 0
        %v6155 = vsel %vm319, %v6091, 0
        %v6158 = vsel %vm319, %v6092, 0
        %v6161 = vsel %vm319, %v6093, 0
        %v6164 = vsel %vm319, %v6094, 0
        %v6167 = vsel %vm319, %v6095, 0
        %v6170 = vsel %vm319, %v6096, 0
        %v6173 = vsel %vm319, %v6097, 0
        %v6176 = vsel %vm319, %v6098, 0
        %v6179 = vsel %vm319, %v6099, 0
        %v6182 = vsel %vm319, %v6100, 0
        %v6185 = vsel %vm319, %v6101, 0
        %v6188 = vsel %vm319, %v6102, 0
        %6190 = vmatprep.subr.bf16.mxu0 0
        %6191 = vmatpush1.bf16.msra.mxu0 %v6134
        %6192 = vmatprep.subr.bf16.mxu0 0
        %6193 = vmatpush1.bf16.msra.mxu0 %v6135
        %6194 = vmatprep.subr.bf16.mxu0 0
        %6195 = vmatpush1.bf16.msra.mxu0 %v6136
        %6196 = vmatprep.subr.bf16.mxu0 0
        %6197 = vmatpush1.bf16.msra.mxu0 %v6137
        %6198 = vmatprep.subr.bf16.mxu0 0
        %6199 = vmatpush1.bf16.msra.mxu0 0
        %6200 = vmatprep.subr.bf16.mxu0 0
        %6201 = vmatpush1.bf16.msra.mxu0 0
        %6202 = vmatprep.subr.bf16.mxu0 0
        %6203 = vmatpush1.bf16.msra.mxu0 0
        %6204 = vmatprep.subr.bf16.mxu0 0
        %6205 = vmatpush1.bf16.msra.mxu0 0
        %6206 = vmatprep.subr.bf16.mxu0 0
        %6207 = vmatpush1.bf16.msra.mxu0 0
        %6208 = vmatprep.subr.bf16.mxu0 0
        %6209 = vmatpush1.bf16.msra.mxu0 0
        %6210 = vmatprep.subr.bf16.mxu0 0
        %6211 = vmatpush1.bf16.msra.mxu0 0
        %6212 = vmatprep.subr.bf16.mxu0 0
        %6213 = vmatpush1.bf16.msra.mxu0 0
        %6214 = vmatprep.subr.bf16.mxu0 0
        %6215 = vmatpush1.bf16.msra.mxu0 0
        %6216 = vmatprep.subr.bf16.mxu0 0
        %6217 = vmatpush1.bf16.msra.mxu0 0
        %6218 = vmatprep.subr.bf16.mxu0 0
        %6219 = vmatpush1.bf16.msra.mxu0 0
        %6220 = vmatprep.subr.bf16.mxu0 0
        %6221 = vmatpush1.bf16.msra.mxu0 0
        %6222 = vmatprep.mubr.bf16.mxu0 0
        %6223 = vmatmul.mubr.bf16.gmra.mrb[0].mxu0 %v6143
        %v6224 = vpop.f32.mrb[0].mxu0
        %v6225 = vadd.f32 %v6116, %v6224
        %v6226 = vpop.f32.mrb[0].mxu0
        %v6227 = vpop.f32.mrb[0].mxu0
        %v6228 = vadd.f32 %v6116, %v6227
        %v6229 = vpop.f32.mrb[0].mxu0
        %6230 = vmatprep.mubr.bf16.mxu0 0
        %6231 = vmatmul.mubr.bf16.gmra.mrb[0].mxu0 %v6146
        %v6232 = vpop.f32.mrb[0].mxu0
        %v6233 = vadd.f32 %v6116, %v6232
        %v6234 = vpop.f32.mrb[0].mxu0
        %v6235 = vpop.f32.mrb[0].mxu0
        %v6236 = vadd.f32 %v6116, %v6235
        %v6237 = vpop.f32.mrb[0].mxu0
        %6238 = vmatprep.mubr.bf16.mxu0 0
        %6239 = vmatmul.mubr.bf16.gmra.mrb[0].mxu0 %v6149
        %v6240 = vpop.f32.mrb[0].mxu0
        %v6241 = vadd.f32 %v6116, %v6240
        %v6242 = vpop.f32.mrb[0].mxu0
        %v6243 = vpop.f32.mrb[0].mxu0
        %v6244 = vadd.f32 %v6116, %v6243
        %v6245 = vpop.f32.mrb[0].mxu0
        %6246 = vmatprep.mubr.bf16.mxu0 0
        %6247 = vmatmul.mubr.bf16.gmra.mrb[0].mxu0 %v6152
        %v6248 = vpop.f32.mrb[0].mxu0
        %v6249 = vadd.f32 %v6116, %v6248
        %v6250 = vpop.f32.mrb[0].mxu0
        %v6251 = vpop.f32.mrb[0].mxu0
        %v6252 = vadd.f32 %v6116, %v6251
        %v6253 = vpop.f32.mrb[0].mxu0
        %6254 = vmatprep.mubr.bf16.mxu0 0
        %6255 = vmatmul.mubr.bf16.gmra.mrb[0].mxu0 %v6155
        %v6256 = vpop.f32.mrb[0].mxu0
        %v6257 = vadd.f32 %v6116, %v6256
        %v6258 = vpop.f32.mrb[0].mxu0
        %v6259 = vpop.f32.mrb[0].mxu0
        %v6260 = vadd.f32 %v6116, %v6259
        %v6261 = vpop.f32.mrb[0].mxu0
        %6262 = vmatprep.mubr.bf16.mxu0 0
        %6263 = vmatmul.mubr.bf16.gmra.mrb[0].mxu0 %v6158
        %v6264 = vpop.f32.mrb[0].mxu0
        %v6265 = vadd.f32 %v6116, %v6264
        %v6266 = vpop.f32.mrb[0].mxu0
        %v6267 = vpop.f32.mrb[0].mxu0
        %v6268 = vadd.f32 %v6116, %v6267
        %v6269 = vpop.f32.mrb[0].mxu0
        %6270 = vmatprep.mubr.bf16.mxu0 0
        %6271 = vmatmul.mubr.bf16.gmra.mrb[0].mxu0 %v6161
        %v6272 = vpop.f32.mrb[0].mxu0
        %v6273 = vadd.f32 %v6116, %v6272
        %v6274 = vpop.f32.mrb[0].mxu0
        %v6275 = vpop.f32.mrb[0].mxu0
        %v6276 = vadd.f32 %v6116, %v6275
        %v6277 = vpop.f32.mrb[0].mxu0
        %6278 = vmatprep.mubr.bf16.mxu0 0
        %6279 = vmatmul.mubr.bf16.gmra.mrb[0].mxu0 %v6164
        %v6280 = vpop.f32.mrb[0].mxu0
        %v6281 = vadd.f32 %v6116, %v6280
        %v6282 = vpop.f32.mrb[0].mxu0
        %v6283 = vpop.f32.mrb[0].mxu0
        %v6284 = vadd.f32 %v6116, %v6283
        %v6285 = vpop.f32.mrb[0].mxu0
        %6286 = vmatprep.mubr.bf16.mxu0 0
        %6287 = vmatmul.mubr.bf16.gmra.mrb[0].mxu0 %v6167
        %v6288 = vpop.f32.mrb[0].mxu0
        %v6289 = vadd.f32 %v6116, %v6288
        %v6290 = vpop.f32.mrb[0].mxu0
        %v6291 = vpop.f32.mrb[0].mxu0
        %v6292 = vadd.f32 %v6116, %v6291
        %v6293 = vpop.f32.mrb[0].mxu0
        %6294 = vmatprep.mubr.bf16.mxu0 0
        %6295 = vmatmul.mubr.bf16.gmra.mrb[0].mxu0 %v6170
        %v6296 = vpop.f32.mrb[0].mxu0
        %v6297 = vadd.f32 %v6116, %v6296
        %v6298 = vpop.f32.mrb[0].mxu0
        %v6299 = vpop.f32.mrb[0].mxu0
        %v6300 = vadd.f32 %v6116, %v6299
        %v6301 = vpop.f32.mrb[0].mxu0
        %6302 = vmatprep.mubr.bf16.mxu0 0
        %6303 = vmatmul.mubr.bf16.gmra.mrb[0].mxu0 %v6173
        %v6304 = vpop.f32.mrb[0].mxu0
        %v6305 = vadd.f32 %v6116, %v6304
        %v6306 = vpop.f32.mrb[0].mxu0
        %v6307 = vpop.f32.mrb[0].mxu0
        %v6308 = vadd.f32 %v6116, %v6307
        %v6309 = vpop.f32.mrb[0].mxu0
        %6310 = vmatprep.mubr.bf16.mxu0 0
        %6311 = vmatmul.mubr.bf16.gmra.mrb[0].mxu0 %v6176
        %v6312 = vpop.f32.mrb[0].mxu0
        %v6313 = vadd.f32 %v6116, %v6312
        %v6314 = vpop.f32.mrb[0].mxu0
        %v6315 = vpop.f32.mrb[0].mxu0
        %v6316 = vadd.f32 %v6116, %v6315
        %v6317 = vpop.f32.mrb[0].mxu0
        %6318 = vmatprep.mubr.bf16.mxu0 0
        %6319 = vmatmul.mubr.bf16.gmra.mrb[0].mxu0 %v6179
        %v6320 = vpop.f32.mrb[0].mxu0
        %v6321 = vadd.f32 %v6116, %v6320
        %v6322 = vpop.f32.mrb[0].mxu0
        %v6323 = vpop.f32.mrb[0].mxu0
        %v6324 = vadd.f32 %v6116, %v6323
        %v6325 = vpop.f32.mrb[0].mxu0
        %6326 = vmatprep.mubr.bf16.mxu0 0
        %6327 = vmatmul.mubr.bf16.gmra.mrb[0].mxu0 %v6182
        %v6328 = vpop.f32.mrb[0].mxu0
        %v6329 = vadd.f32 %v6116, %v6328
        %v6330 = vpop.f32.mrb[0].mxu0
        %v6331 = vpop.f32.mrb[0].mxu0
        %v6332 = vadd.f32 %v6116, %v6331
        %v6333 = vpop.f32.mrb[0].mxu0
        %6334 = vmatprep.mubr.bf16.mxu0 0
        %6335 = vmatmul.mubr.bf16.gmra.mrb[0].mxu0 %v6185
        %v6336 = vpop.f32.mrb[0].mxu0
        %v6337 = vadd.f32 %v6116, %v6336
        %v6338 = vpop.f32.mrb[0].mxu0
        %v6339 = vpop.f32.mrb[0].mxu0
        %v6340 = vadd.f32 %v6116, %v6339
        %v6341 = vpop.f32.mrb[0].mxu0
        %6342 = vmatprep.mubr.bf16.mxu0 0
        %6343 = vmatmul.mubr.bf16.gmra.mrb[0].mxu0 %v6188
        %v6344 = vpop.f32.mrb[0].mxu0
        %v6345 = vadd.f32 %v6116, %v6344
        %v6346 = vpop.f32.mrb[0].mxu0
        %v6347 = vpop.f32.mrb[0].mxu0
        %v6348 = vadd.f32 %v6116, %v6347
        %v6349 = vpop.f32.mrb[0].mxu0
        %6350 = vdwg.mxu0
        %s6351 = sld [smem:[#allocation4 + $0x1]]
        %vm6352 = vcmp.ge.f32.partialorder %v6225, 0.0
        %vm6353 = vcmp.ge.f32.partialorder %v6228, 0.0
        %vm6354 = vcmp.ge.f32.partialorder %v6233, 0.0
        %vm6355 = vcmp.ge.f32.partialorder %v6236, 0.0
        %vm6356 = vcmp.ge.f32.partialorder %v6241, 0.0
        %vm6357 = vcmp.ge.f32.partialorder %v6244, 0.0
        %vm6358 = vcmp.ge.f32.partialorder %v6249, 0.0
        %vm6359 = vcmp.ge.f32.partialorder %v6252, 0.0
        %vm6360 = vcmp.ge.f32.partialorder %v6257, 0.0
        %vm6361 = vcmp.ge.f32.partialorder %v6260, 0.0
        %vm6362 = vcmp.ge.f32.partialorder %v6265, 0.0
        %vm6363 = vcmp.ge.f32.partialorder %v6268, 0.0
        %vm6364 = vcmp.ge.f32.partialorder %v6273, 0.0
        %vm6365 = vcmp.ge.f32.partialorder %v6276, 0.0
        %vm6366 = vcmp.ge.f32.partialorder %v6281, 0.0
        %vm6367 = vcmp.ge.f32.partialorder %v6284, 0.0
        %vm6368 = vcmp.ge.f32.partialorder %v6289, 0.0
        %vm6369 = vcmp.ge.f32.partialorder %v6292, 0.0
        %vm6370 = vcmp.ge.f32.partialorder %v6297, 0.0
        %vm6371 = vcmp.ge.f32.partialorder %v6300, 0.0
        %vm6372 = vcmp.ge.f32.partialorder %v6305, 0.0
        %vm6373 = vcmp.ge.f32.partialorder %v6308, 0.0
        %vm6374 = vcmp.ge.f32.partialorder %v6313, 0.0
        %vm6375 = vcmp.ge.f32.partialorder %v6316, 0.0
        %vm6376 = vcmp.ge.f32.partialorder %v6321, 0.0
        %vm6377 = vcmp.ge.f32.partialorder %v6324, 0.0
        %vm6378 = vcmp.ge.f32.partialorder %v6329, 0.0
        %vm6379 = vcmp.ge.f32.partialorder %v6332, 0.0
        %vm6380 = vcmp.ge.f32.partialorder %v6337, 0.0
        %vm6381 = vcmp.ge.f32.partialorder %v6340, 0.0
        %vm6382 = vcmp.ge.f32.partialorder %v6345, 0.0
        %vm6383 = vcmp.ge.f32.partialorder %v6348, 0.0
        %v6384 = vstv %s6351
        %v6385 = vmul.f32 %v6384, %v6225
        %v6386 = vmul.f32 %v6384, %v6228
        %v6387 = vmul.f32 %v6384, %v6233
        %v6388 = vmul.f32 %v6384, %v6236
        %v6389 = vmul.f32 %v6384, %v6241
        %v6390 = vmul.f32 %v6384, %v6244
        %v6391 = vmul.f32 %v6384, %v6249
        %v6392 = vmul.f32 %v6384, %v6252
        %v6393 = vmul.f32 %v6384, %v6257
        %v6394 = vmul.f32 %v6384, %v6260
        %v6395 = vmul.f32 %v6384, %v6265
        %v6396 = vmul.f32 %v6384, %v6268
        %v6397 = vmul.f32 %v6384, %v6273
        %v6398 = vmul.f32 %v6384, %v6276
        %v6399 = vmul.f32 %v6384, %v6281
        %v6400 = vmul.f32 %v6384, %v6284
        %v6401 = vmul.f32 %v6384, %v6289
        %v6402 = vmul.f32 %v6384, %v6292
        %v6403 = vmul.f32 %v6384, %v6297
        %v6404 = vmul.f32 %v6384, %v6300
        %v6405 = vmul.f32 %v6384, %v6305
        %v6406 = vmul.f32 %v6384, %v6308
        %v6407 = vmul.f32 %v6384, %v6313
        %v6408 = vmul.f32 %v6384, %v6316
        %v6409 = vmul.f32 %v6384, %v6321
        %v6410 = vmul.f32 %v6384, %v6324
        %v6411 = vmul.f32 %v6384, %v6329
        %v6412 = vmul.f32 %v6384, %v6332
        %v6413 = vmul.f32 %v6384, %v6337
        %v6414 = vmul.f32 %v6384, %v6340
        %v6415 = vmul.f32 %v6384, %v6345
        %v6416 = vmul.f32 %v6384, %v6348
        %v6417 = vsel %vm6352, %v6225, %v6385
        %v6418 = vsel %vm6353, %v6228, %v6386
        %v6419 = vsel %vm6354, %v6233, %v6387
        %v6420 = vsel %vm6355, %v6236, %v6388
        %v6421 = vsel %vm6356, %v6241, %v6389
        %v6422 = vsel %vm6357, %v6244, %v6390
        %v6423 = vsel %vm6358, %v6249, %v6391
        %v6424 = vsel %vm6359, %v6252, %v6392
        %v6425 = vsel %vm6360, %v6257, %v6393
        %v6426 = vsel %vm6361, %v6260, %v6394
        %v6427 = vsel %vm6362, %v6265, %v6395
        %v6428 = vsel %vm6363, %v6268, %v6396
        %v6429 = vsel %vm6364, %v6273, %v6397
        %v6430 = vsel %vm6365, %v6276, %v6398
        %v6431 = vsel %vm6366, %v6281, %v6399
        %v6432 = vsel %vm6367, %v6284, %v6400
        %v6433 = vsel %vm6368, %v6289, %v6401
        %v6434 = vsel %vm6369, %v6292, %v6402
        %v6435 = vsel %vm6370, %v6297, %v6403
        %v6436 = vsel %vm6371, %v6300, %v6404
        %v6437 = vsel %vm6372, %v6305, %v6405
        %v6438 = vsel %vm6373, %v6308, %v6406
        %v6439 = vsel %vm6374, %v6313, %v6407
        %v6440 = vsel %vm6375, %v6316, %v6408
        %v6441 = vsel %vm6376, %v6321, %v6409
        %v6442 = vsel %vm6377, %v6324, %v6410
        %v6443 = vsel %vm6378, %v6329, %v6411
        %v6444 = vsel %vm6379, %v6332, %v6412
        %v6445 = vsel %vm6380, %v6337, %v6413
        %v6446 = vsel %vm6381, %v6340, %v6414
        %v6447 = vsel %vm6382, %v6345, %v6415
        %v6448 = vsel %vm6383, %v6348, %v6416
        %v6449 = vld [vmem:[%s317] sm:$0xff]
        %v6450 = vld [vmem:[%s317 + $0x8] sm:$0xff]
        %v6451 = vld [vmem:[%s317 + $0x10] sm:$0xff]
        %v6452 = vld [vmem:[%s317 + $0x18] sm:$0xff]
        %v6453 = vld [vmem:[%s317 + $0x20] sm:$0xff]
        %v6454 = vld [vmem:[%s317 + $0x28] sm:$0xff]
        %v6455 = vld [vmem:[%s317 + $0x30] sm:$0xff]
        %v6456 = vld [vmem:[%s317 + $0x38] sm:$0xff]
        %v6457 = vld [vmem:[%s317 + $0x40] sm:$0xff]
        %v6458 = vld [vmem:[%s317 + $0x48] sm:$0xff]
        %v6459 = vld [vmem:[%s317 + $0x50] sm:$0xff]
        %v6460 = vld [vmem:[%s317 + $0x58] sm:$0xff]
        %v6461 = vld [vmem:[%s317 + $0x60] sm:$0xff]
        %v6462 = vld [vmem:[%s317 + $0x68] sm:$0xff]
        %v6463 = vld [vmem:[%s317 + $0x70] sm:$0xff]
        %v6464 = vld [vmem:[%s317 + $0x78] sm:$0xff]
        %v6465 = vld [vmem:[%s317 + $0x80] sm:$0xff]
        %v6466 = vld [vmem:[%s317 + $0x88] sm:$0xff]
        %v6467 = vld [vmem:[%s317 + $0x90] sm:$0xff]
        %v6468 = vld [vmem:[%s317 + $0x98] sm:$0xff]
        %v6469 = vld [vmem:[%s317 + $0xa0] sm:$0xff]
        %v6470 = vld [vmem:[%s317 + $0xa8] sm:$0xff]
        %v6471 = vld [vmem:[%s317 + $0xb0] sm:$0xff]
        %v6472 = vld [vmem:[%s317 + $0xb8] sm:$0xff]
        %v6473 = vld [vmem:[%s317 + $0xc0] sm:$0xff]
        %v6474 = vld [vmem:[%s317 + $0xc8] sm:$0xff]
        %v6475 = vld [vmem:[%s317 + $0xd0] sm:$0xff]
        %v6476 = vld [vmem:[%s317 + $0xd8] sm:$0xff]
        %v6477 = vld [vmem:[%s317 + $0xe0] sm:$0xff]
        %v6478 = vld [vmem:[%s317 + $0xe8] sm:$0xff]
        %v6479 = vld [vmem:[%s317 + $0xf0] sm:$0xff]
        %v6480 = vld [vmem:[%s317 + $0xf8] sm:$0xff]
        %v6481 = vadd.f32 %v6417, %v6449
        %v6482 = vadd.f32 %v6418, %v6450
        %v6483 = vadd.f32 %v6419, %v6451
        %v6484 = vadd.f32 %v6420, %v6452
        %v6485 = vadd.f32 %v6421, %v6453
        %v6486 = vadd.f32 %v6422, %v6454
        %v6487 = vadd.f32 %v6423, %v6455
        %v6488 = vadd.f32 %v6424, %v6456
        %v6489 = vadd.f32 %v6425, %v6457
        %v6490 = vadd.f32 %v6426, %v6458
        %v6491 = vadd.f32 %v6427, %v6459
        %v6492 = vadd.f32 %v6428, %v6460
        %v6493 = vadd.f32 %v6429, %v6461
        %v6494 = vadd.f32 %v6430, %v6462
        %v6495 = vadd.f32 %v6431, %v6463
        %v6496 = vadd.f32 %v6432, %v6464
        %v6497 = vadd.f32 %v6433, %v6465
        %v6498 = vadd.f32 %v6434, %v6466
        %v6499 = vadd.f32 %v6435, %v6467
        %v6500 = vadd.f32 %v6436, %v6468
        %v6501 = vadd.f32 %v6437, %v6469
        %v6502 = vadd.f32 %v6438, %v6470
        %v6503 = vadd.f32 %v6439, %v6471
        %v6504 = vadd.f32 %v6440, %v6472
        %v6505 = vadd.f32 %v6441, %v6473
        %v6506 = vadd.f32 %v6442, %v6474
        %v6507 = vadd.f32 %v6443, %v6475
        %v6508 = vadd.f32 %v6444, %v6476
        %v6509 = vadd.f32 %v6445, %v6477
        %v6510 = vadd.f32 %v6446, %v6478
        %v6511 = vadd.f32 %v6447, %v6479
        %v6512 = vadd.f32 %v6448, %v6480
        %6513 = vst.msk [vmem:[%s312] sm:$0xff] %vm319, %v6481
        %6514 = vst.msk [vmem:[%s312 + $0x8] sm:$0xff] %vm319, %v6482
        %6515 = vst.msk [vmem:[%s312 + $0x10] sm:$0xff] %vm319, %v6483
        %6516 = vst.msk [vmem:[%s312 + $0x18] sm:$0xff] %vm319, %v6484
        %6517 = vst.msk [vmem:[%s312 + $0x20] sm:$0xff] %vm319, %v6485
        %6518 = vst.msk [vmem:[%s312 + $0x28] sm:$0xff] %vm319, %v6486
        %6519 = vst.msk [vmem:[%s312 + $0x30] sm:$0xff] %vm319, %v6487
        %6520 = vst.msk [vmem:[%s312 + $0x38] sm:$0xff] %vm319, %v6488
        %6521 = vst.msk [vmem:[%s312 + $0x40] sm:$0xff] %vm319, %v6489
        %6522 = vst.msk [vmem:[%s312 + $0x48] sm:$0xff] %vm319, %v6490
        %6523 = vst.msk [vmem:[%s312 + $0x50] sm:$0xff] %vm319, %v6491
        %6524 = vst.msk [vmem:[%s312 + $0x58] sm:$0xff] %vm319, %v6492
        %6525 = vst.msk [vmem:[%s312 + $0x60] sm:$0xff] %vm319, %v6493
        %6526 = vst.msk [vmem:[%s312 + $0x68] sm:$0xff] %vm319, %v6494
        %6527 = vst.msk [vmem:[%s312 + $0x70] sm:$0xff] %vm319, %v6495
        %6528 = vst.msk [vmem:[%s312 + $0x78] sm:$0xff] %vm319, %v6496
        %6529 = vst.msk [vmem:[%s312 + $0x80] sm:$0xff] %vm319, %v6497
        %6530 = vst.msk [vmem:[%s312 + $0x88] sm:$0xff] %vm319, %v6498
        %6531 = vst.msk [vmem:[%s312 + $0x90] sm:$0xff] %vm319, %v6499
        %6532 = vst.msk [vmem:[%s312 + $0x98] sm:$0xff] %vm319, %v6500
        %6533 = vst.msk [vmem:[%s312 + $0xa0] sm:$0xff] %vm319, %v6501
        %6534 = vst.msk [vmem:[%s312 + $0xa8] sm:$0xff] %vm319, %v6502
        %6535 = vst.msk [vmem:[%s312 + $0xb0] sm:$0xff] %vm319, %v6503
        %6536 = vst.msk [vmem:[%s312 + $0xb8] sm:$0xff] %vm319, %v6504
        %6537 = vst.msk [vmem:[%s312 + $0xc0] sm:$0xff] %vm319, %v6505
        %6538 = vst.msk [vmem:[%s312 + $0xc8] sm:$0xff] %vm319, %v6506
        %6539 = vst.msk [vmem:[%s312 + $0xd0] sm:$0xff] %vm319, %v6507
        %6540 = vst.msk [vmem:[%s312 + $0xd8] sm:$0xff] %vm319, %v6508
        %6541 = vst.msk [vmem:[%s312 + $0xe0] sm:$0xff] %vm319, %v6509
        %6542 = vst.msk [vmem:[%s312 + $0xe8] sm:$0xff] %vm319, %v6510
        %6543 = vst.msk [vmem:[%s312 + $0xf0] sm:$0xff] %vm319, %v6511
        %6544 = vst.msk [vmem:[%s312 + $0xf8] sm:$0xff] %vm319, %v6512
        %s6545 = sand.u32 %s204, 1
        %s6546 = scalar_lea.sflag [#allocation5], %s6545
        %s6547 = sand.u32 %s204, 1
        %s6548 = smul.addr %s6547, 256
        %s6549 = scalar_lea.vmem [#allocation7], %s6548
        // Predicated region
        $region57: #{ex_sr_residual_block_forward.1} parent=51 // pred_check
          %p6550 = pneg %p214
        $region58: #{ex_sr_residual_block_forward.1} parent=51 // pred_check_branch
          %6552 = sbr.rel (%p6550) target = $region60
        $region59: #{ex_sr_residual_block_forward.1} parent=51 // pred_region
          %s6554 = ssub.s32 4096, 4096
          %6555 = vsyncadd %s6546, %s6554
          %s6556 = smul.addr %s23, 32
          %s6557 = smul.addr %s6556, 128
          %s6558 = scalar_lea.hbm %s8, %s6557
          %s6559 = sshll.u32 %s6549, 4
          %s6560 = int_to_ptr.vmem [resolvable:$true] %s6559
          %6565 = dma.vmem_to_hbm [thread:$0]  %s6560, 4096, %s6558, %s6546, 128, 128, 8
        $region60: #{ex_sr_residual_block_forward.1} parent=51 // pred_fallthru
          _
      $region52: #{ex_sr_residual_block_forward.1} parent=5 // pred_fallthru
        _
      %p6566 = scmp.le.s32.totalorder 2, %s18
      // Predicated region
      $region61: #{ex_sr_residual_block_forward.1} parent=5 // pred_check
        %p6567 = pneg %p6566
      $region62: #{ex_sr_residual_block_forward.1} parent=5 // pred_check_branch
        %6569 = sbr.rel (%p6567) target = $region64
      $region63: #{ex_sr_residual_block_forward.1} parent=5 // pred_region
        %s6570 = ssub.s32 %s18, 2
        // Predicated region
        $region65: #{ex_sr_residual_block_forward.1} parent=63 // pred_check
          %p6571 = pneg %p220
        $region66: #{ex_sr_residual_block_forward.1} parent=63 // pred_check_branch
          %6573 = sbr.rel (%p6571) target = $region68
        $region67: #{ex_sr_residual_block_forward.1} parent=63 // pred_region
          %s6574 = sand.u32 %s205, 1
          %s6575 = scalar_lea.sflag [#allocation5], %s6574
          %s6576 = sand.u32 %s205, 1
          %s6577 = smul.addr %s6576, 256
          %s6578 = scalar_lea.vmem [#allocation7], %s6577
          %6579 = dma.done %s6575, 4096
        $region68: #{ex_sr_residual_block_forward.1} parent=63 // pred_fallthru
          _
      $region64: #{ex_sr_residual_block_forward.1} parent=5 // pred_fallthru
        _
    $region6: #{ex_sr_residual_block_forward.1} parent=1 // loop_footer
      %s22 = sadd.s32 1, %s18
    $region7: #{ex_sr_residual_block_forward.1} parent=1 // loop_footer_branch
      %17 = sbr.rel target = $region3
    $region8: #{ex_sr_residual_block_forward.1} parent=1 // loop_exit
      _
    %6580 = vsyncpa [#allocation5], 1
    %s6581 = scalar_lea.sflag [#allocation5], 1
    %6582 = vsyncpa %s6581, 1
    %6583 = vsyncpa [#allocation6], 1
    %s6584 = scalar_lea.sflag [#allocation6], 1
    %6585 = vsyncpa %s6584, 1

</llo_original>
